<compile_context>
chip_gen: v7x
topology: tpu7x:2x2x1
jax: 0.10.0
libtpu: 0.0.40
codegen_flags: <defaults>
</compile_context>

<pallas_src>
import jax
import jax.numpy as jnp
from jax import lax
from jax.experimental import pallas as pl
from jax.experimental.pallas import tpu as pltpu

# ------------------------------ config ------------------------------------
FEATURE_DIM = 8       # config_encoder.feature_dim
HIDDEN_DIM = 32       # config_encoder.hidden_dim
M_DIM = 16            # config_encoder.hidden_egnn_dim (m_dim of EGNN)
HIDDEN_EDGE_DIM = 16  # config_encoder.hidden_edge_dim
N_LAYERS = 2          # config_encoder.n_layers
EMBEDDING_SIZE = 32   # config_encoder.embedding_size
EPS = 1e-8            # config_encoder.eps
NORMALIZE = True      # config_encoder.normalize
REDUCE = "mean"       # config_encoder.reduce

LANES = 128           # weight-slab lane width (128-multiple, per review)
DATA_ROWS = 24        # featsT (8 rows) | coords+mask (8 rows) | mask selector (8 rows)


# --------------------------- weight-slab layout -----------------------------
def _build_layout():
    """Row offsets (8-aligned) of every weight block inside the packed slab."""
    D, He = HIDDEN_DIM, HIDDEN_EDGE_DIM
    pos = {}
    r = 0

    def blk(name, nrows):
        nonlocal r
        pos[name] = r
        r = ((r + nrows + 7) // 8) * 8

    blk("encT", D)                       # wencT [D,F]   | bencT col F
    for l in range(N_LAYERS):
        blk(f"w1abT{l}", 2 * He)         # w1abT [2He,D] | w1cT col D | b1T col D+1
        blk(f"w2T{l}", M_DIM)            # w2T  [Md,He]  | b2T col He
        blk(f"w3aT{l}", 2 * D)           # w3aT [2D,D]   | b3T col D
        blk(f"w3bT{l}", 2 * D)           # w3bT [2D,Md]
        blk(f"w4T{l}", D)                # w4T  [D,2D]   | b4T col 2D
    for name in ("w5", "w6", "w7", "w8"):
        blk(name, D + 1)                 # natural W [D,D/E] rows 0:D, bias row D
    return pos, r


WPOS, WSLAB_ROWS = _build_layout()


def pack_weights(params):
    """Pack all weights/biases into one [WSLAB_ROWS, 128] f32 slab (done once)."""
    D, F, He = HIDDEN_DIM, FEATURE_DIM, HIDDEN_EDGE_DIM
    slab = jnp.zeros((WSLAB_ROWS, LANES), jnp.float32)

    def put(s, r, c, a):
        a = jnp.asarray(a, jnp.float32)
        return s.at[r:r + a.shape[0], c:c + a.shape[1]].set(a)

    wenc, benc = params["node_enc"]
    r = WPOS["encT"]
    slab = put(slab, r, 0, wenc.T)                         # [D, F]
    slab = put(slab, r, F, benc.T)                         # [D, 1]

    for l, p in enumerate(params["egnn"]):
        w1, b1 = p["w1"], p["b1"]                          # [2D+1, He], [1, He]
        w1abT = jnp.concatenate([w1[:D], w1[D:2 * D]], axis=1).T   # [2He, D]
        r = WPOS[f"w1abT{l}"]
        slab = put(slab, r, 0, w1abT)
        slab = put(slab, r, D, w1[2 * D:2 * D + 1].T)      # w1cT [He, 1]
        slab = put(slab, r, D + 1, b1.T)                   # b1T  [He, 1]
        r = WPOS[f"w2T{l}"]
        slab = put(slab, r, 0, p["w2"].T)                  # [Md, He]
        slab = put(slab, r, He, p["b2"].T)                 # [Md, 1]
        r = WPOS[f"w3aT{l}"]
        slab = put(slab, r, 0, p["w3"][:D].T)              # [2D, D]
        slab = put(slab, r, D, p["b3"].T)                  # [2D, 1]
        r = WPOS[f"w3bT{l}"]
        slab = put(slab, r, 0, p["w3"][D:].T)              # [2D, Md]
        r = WPOS[f"w4T{l}"]
        slab = put(slab, r, 0, p["w4"].T)                  # [D, 2D]
        slab = put(slab, r, 2 * D, p["b4"].T)              # [D, 1]

    (w5, b5), (w6, b6) = params["node_dec"]
    (w7, b7), (w8, b8) = params["graph_dec"]
    for name, (w, b) in (("w5", (w5, b5)), ("w6", (w6, b6)),
                         ("w7", (w7, b7)), ("w8", (w8, b8))):
        r = WPOS[name]
        slab = put(slab, r, 0, w)                          # natural orientation
        slab = put(slab, r + D, 0, b)                      # bias row
    return slab


# --------------------------- fused Pallas kernel ----------------------------
def _make_kernel(B, N):
    F, D = FEATURE_DIM, HIDDEN_DIM
    He, Md = HIDDEN_EDGE_DIM, M_DIM
    E, L = EMBEDDING_SIZE, N_LAYERS
    BN, BNN = B * N, B * N * N
    f32 = jnp.float32
    pos = WPOS

    def kernel(data_ref, base_ref, rj_ref, w_ref, o_ref):
        featsT = data_ref[0:F, :]                  # [F, BN]  node features (transposed)
        cm = data_ref[8:16, :]                     # [8, BN]  rows 0-2: xyz, row 3: mask
        msel = data_ref[16:24, :]                  # [8, BN]  block-diag residue mask (rows >= B are 0)
        base = base_ref[...]                       # [1, BNN] self | adjacent indicator
        Rj = rj_ref[...]                           # [BN, BNN] picks node (b, j) per edge

        # Flat edge axis: column c = b*N*N + i*N + j.  Selectors that need only
        # c // N are built in-kernel with division-free integer arithmetic.
        col = lax.broadcasted_iota(jnp.int32, (BN, BNN), 1)
        row = lax.broadcasted_iota(jnp.int32, (BN, BNN), 0)
        t = col - row * N
        Ri = jnp.where((t >= 0) & (t < N), 1.0, 0.0).astype(f32)     # picks node (b, i)
        ec = lax.broadcasted_iota(jnp.int32, (BNN, BN), 0)
        nc = lax.broadcasted_iota(jnp.int32, (BNN, BN), 1)
        t2 = ec - nc * N
        Si = jnp.where((t2 >= 0) & (t2 < N), 1.0, 0.0).astype(f32)   # [BNN, BN] neighbour-sum selector

        # Pairwise squared distances + edge mask, flat on the lane axis.
        ci = jnp.dot(cm, Ri, preferred_element_type=f32)             # [8, BNN]
        cj = jnp.dot(cm, Rj, preferred_element_type=f32)
        dd = ci[0:3, :] - cj[0:3, :]
        rd = jnp.sum(dd * dd, axis=0, keepdims=True)                 # [1, BNN]
        em = (ci[3:4, :] * cj[3:4, :]                                # valid-pair mask
              * jnp.maximum(base, jnp.where(rd <= 0.0, 1.0, 0.0)))   # self|adj|zero-dist

        # ---- node encoder (features stay transposed: [D, BN]) ----
        r = pos["encT"]
        hT = (jnp.dot(w_ref[r:r + D, 0:F], featsT, preferred_element_type=f32)
              + w_ref[r:r + D, F:F + 1])

        # ---- EGNN layers (unrolled; node features resident in vregs/VMEM) ----
        for l in range(L):
            r = pos[f"w1abT{l}"]
            hij = jnp.dot(w_ref[r:r + 2 * He, 0:D], hT,
                          preferred_element_type=f32)                # [2He, BN]: hiT | hjT
            eT = (jnp.dot(hij[0:He, :], Ri, preferred_element_type=f32)
                  + jnp.dot(hij[He:2 * He, :], Rj, preferred_element_type=f32)
                  + w_ref[r:r + He, D:D + 1] * rd
                  + w_ref[r:r + He, D + 1:D + 2])                    # [He, BNN]
            eT = jax.nn.silu(eT)

            r = pos[f"w2T{l}"]
            mT = jax.nn.silu(
                jnp.dot(w_ref[r:r + Md, 0:He], eT, preferred_element_type=f32)
                + w_ref[r:r + Md, He:He + 1])                        # [Md, BNN]
            mT = mT * em                                             # mask unselected edges
            miT = jnp.dot(mT, Si, preferred_element_type=f32)        # [Md, BN] (K = BNN)

            ra, rb = pos[f"w3aT{l}"], pos[f"w3bT{l}"]
            gT = (jnp.dot(w_ref[ra:ra + 2 * D, 0:D], hT, preferred_element_type=f32)
                  + jnp.dot(w_ref[rb:rb + 2 * D, 0:Md], miT, preferred_element_type=f32)
                  + w_ref[ra:ra + 2 * D, D:D + 1])                   # [2D, BN]
            gT = jax.nn.silu(gT)
            r = pos[f"w4T{l}"]
            hT = (jnp.dot(w_ref[r:r + D, 0:2 * D], gT, preferred_element_type=f32)
                  + w_ref[r:r + D, 2 * D:2 * D + 1] + hT)            # residual

        # ---- decoder tail in row orientation ----
        h = jnp.transpose(hT)                                        # [BN, D]
        r = pos["w5"]
        hd = jax.nn.silu(jnp.dot(h, w_ref[r:r + D, 0:D], preferred_element_type=f32)
                         + w_ref[r + D:r + D + 1, 0:D])
        r = pos["w6"]
        hd = (jnp.dot(hd, w_ref[r:r + D, 0:D], preferred_element_type=f32)
              + w_ref[r + D:r + D + 1, 0:D])                         # [BN, D]

        # ---- masked reduce over residues (per structure) ----
        graph = jnp.dot(msel, hd, preferred_element_type=f32)        # [8, D] (rows >= B are 0)
        if REDUCE == "mean":
            cnt = jnp.sum(msel, axis=1, keepdims=True)               # [8, 1]
            # TODO(synk): torch yields NaN for an all-masked structure; we clamp to >=1.
            graph = graph / jnp.maximum(cnt, 1.0)

        # ---- graph decoder ----
        r = pos["w7"]
        gg = jax.nn.silu(jnp.dot(graph, w_ref[r:r + D, 0:D], preferred_element_type=f32)
                         + w_ref[r + D:r + D + 1, 0:D])
        r = pos["w8"]
        out = (jnp.dot(gg, w_ref[r:r + D, 0:E], preferred_element_type=f32)
               + w_ref[r + D:r + D + 1, 0:E])                        # [8, E]
        if NORMALIZE:  # F.normalize(out, dim=1, eps=eps)
            nrm = jnp.sqrt(jnp.sum(out * out, axis=1, keepdims=True))
            out = out / jnp.maximum(nrm, EPS)

        o_ref[...] = out[0:B, :].astype(o_ref.dtype)

    return kernel


def _cost(B, N):
    D, F, He, Md, E, L = (HIDDEN_DIM, FEATURE_DIM, HIDDEN_EDGE_DIM, M_DIM,
                          EMBEDDING_SIZE, N_LAYERS)
    BN, BNN = B * N, B * N * N
    mm = lambda m, k, n: 2 * m * k * n
    flops = (2 * mm(8, BN, BNN)                       # coord/mask replication
             + mm(D, F, BN)                           # node encoder
             + L * (mm(2 * He, D, BN) + 2 * mm(He, BN, BNN) + mm(Md, He, BNN)
                    + mm(Md, BNN, BN) + mm(2 * D, D, BN) + mm(2 * D, Md, BN)
                    + mm(D, 2 * D, BN))
             + 2 * mm(BN, D, D)                       # node_dec
             + mm(8, BN, D) + 2 * mm(8, D, D))        # reduce + graph_dec
    transc = L * (He + Md) * BNN + L * 2 * D * BN + D * BN + 8 * D
    bytes_acc = 4 * (DATA_ROWS * BN + BNN + BN * BNN + WSLAB_ROWS * LANES + B * E)
    return int(flops), int(transc), int(bytes_acc)


def fused_encoder_call(data_slab, base_flat, rj, wslab, B):
    BN = data_slab.shape[1]
    BNN = base_flat.shape[1]
    N = BN // B
    E = EMBEDDING_SIZE
    flops, transc, bytes_acc = _cost(B, N)

    return pl.pallas_call(
        _make_kernel(B, N),
        out_shape=jax.ShapeDtypeStruct((B, E), jnp.float32),
        grid=(1,),
        in_specs=[
            pl.BlockSpec((DATA_ROWS, BN), lambda i: (0, 0)),
            pl.BlockSpec((1, BNN), lambda i: (0, 0)),
            pl.BlockSpec((BN, BNN), lambda i: (0, 0)),
            pl.BlockSpec((WSLAB_ROWS, LANES), lambda i: (0, 0)),
        ],
        out_specs=pl.BlockSpec((B, E), lambda i: (0, 0)),
        compiler_params=pltpu.CompilerParams(
            dimension_semantics=("arbitrary",)),
        cost_estimate=pl.CostEstimate(flops=flops, transcendentals=transc,
                                      bytes_accessed=bytes_acc),
    )(data_slab, base_flat, rj, wslab)


# --------------------------- parameters -------------------------------------
def init_params(key):
    ks = iter(jax.random.split(key, 64))

    def lin(din, dout, std=0.02):
        w = jax.random.normal(next(ks), (din, dout), jnp.float32) * std
        b = jax.random.normal(next(ks), (1, dout), jnp.float32) * 0.01
        return w, b

    params = {}
    params["node_enc"] = lin(FEATURE_DIM, HIDDEN_DIM)

    layers = []
    D = HIDDEN_DIM
    for _ in range(N_LAYERS):
        # EGNN.init_ sets Linear weights to normal(std=1e-3)
        w1, b1 = lin(2 * D + 1, HIDDEN_EDGE_DIM, std=1e-3)
        w2, b2 = lin(HIDDEN_EDGE_DIM, M_DIM, std=1e-3)
        w3, b3 = lin(D + M_DIM, 2 * D, std=1e-3)
        w4, b4 = lin(2 * D, D, std=1e-3)
        layers.append(dict(w1=w1, b1=b1, w2=w2, b2=b2, w3=w3, b3=b3, w4=w4, b4=b4))
    params["egnn"] = layers

    params["node_dec"] = (lin(HIDDEN_DIM, HIDDEN_DIM), lin(HIDDEN_DIM, HIDDEN_DIM))

    w7, b7 = lin(HIDDEN_DIM, HIDDEN_DIM)
    # final_init=True: last graph_dec layer weight=0.001, bias=0
    w8 = jnp.full((HIDDEN_DIM, EMBEDDING_SIZE), 0.001, jnp.float32)
    b8 = jnp.zeros((1, EMBEDDING_SIZE), jnp.float32)
    params["graph_dec"] = ((w7, b7), (w8, b8))
    return params


# --------------------------- model forward ----------------------------------
def model0_forward(wslab, data):
    feats = data["encoder_feats"].astype(jnp.float32)
    coors = data["encoder_coords"].astype(jnp.float32)
    adj_mat = data["encoder_adj_mat"].astype(bool)
    mask = data["encoder_mask"].astype(jnp.float32)
    B, N, F = feats.shape
    assert F <= 8 and B <= 8
    BN, BNN = B * N, B * N * N

    # ---- per-structure data slab [24, B*N] (no trailing size-1 lane dims) ----
    featsT = feats.reshape(BN, F).swapaxes(0, 1)
    if F < 8:
        featsT = jnp.pad(featsT, ((0, 8 - F), (0, 0)))
    coorsT = coors.reshape(BN, 3).swapaxes(0, 1)
    cm = jnp.concatenate([coorsT, mask.reshape(1, BN),
                          jnp.zeros((4, BN), jnp.float32)], axis=0)
    msel = (jnp.eye(B, dtype=jnp.float32)[:, :, None]
            * mask[None, :, :]).reshape(B, BN)            # block-diagonal residue mask
    msel = jnp.pad(msel, ((0, 8 - B), (0, 0)))
    data_slab = jnp.concatenate([featsT, cm, msel], axis=0)

    # ---- neighbour-selection glue with STATIC K = N (no topk, no host sync) --
    # torch keeps the k = max(adj degree) smallest "ranking" entries and then
    # only those with ranking <= 0; with K = N the kept set is identical
    # (self + adjacent + zero-distance valid pairs), realized as an edge mask.
    # TODO(synk): if adj_mat had no self-loops, torch's topk could truncate one
    # tied edge on the max-degree row; we keep all ranking<=0 edges instead.
    base_flat = jnp.logical_or(adj_mat, jnp.eye(N, dtype=bool)[None]) \
        .astype(jnp.float32).reshape(1, BNN)

    # Constant selector picking node (b, j) for edge column c = b*N*N + i*N + j
    # (needs integer // and %, so it is built here and constant-folded by XLA).
    c = jnp.arange(BNN)
    rj_idx = (c // (N * N)) * N + (c % N)
    rj = (jnp.arange(BN)[:, None] == rj_idx[None, :]).astype(jnp.float32)

    return fused_encoder_call(data_slab, base_flat, rj, wslab, B)


# ------------------------------- main ---------------------------------------
if __name__ == "__main__":
    key = jax.random.PRNGKey(0)
    kf, kc, ka, kp = jax.random.split(key, 4)
    B, N = 2, 16

    feats = jax.random.normal(kf, (B, N, FEATURE_DIM), jnp.float32)
    coors = jax.random.normal(kc, (B, N, 3), jnp.float32)
    mask = jnp.ones((B, N), bool).at[1, 12:].set(False)
    adj = jax.random.bernoulli(ka, 0.3, (B, N, N))
    adj = adj | adj.transpose(0, 2, 1) | jnp.eye(N, dtype=bool)[None]

    params = init_params(kp)
    wslab = pack_weights(params)          # packed once, outside the jitted forward
    data = {"encoder_feats": feats, "encoder_coords": coors,
            "encoder_adj_mat": adj, "encoder_mask": mask}

    fwd = jax.jit(model0_forward)
    out = jax.block_until_ready(fwd(wslab, data))
    assert out.shape == (B, EMBEDDING_SIZE), out.shape
    assert bool(jnp.all(jnp.isfinite(out)))
    print("KERNEL_OK")
</pallas_src>

<mosaic_0001>
module attributes {stable_mosaic.version = 11 : i64} {
  func.func @kernel(%arg0: i32, %arg1: memref<24x32xf32, #tpu.memory_space<vmem>>, %arg2: memref<1x512xf32, #tpu.memory_space<vmem>>, %arg3: memref<32x512xf32, #tpu.memory_space<vmem>>, %arg4: memref<608x128xf32, #tpu.memory_space<vmem>>, %arg5: memref<2x32xf32, #tpu.memory_space<vmem>>) attributes {dimension_semantics = [#tpu.dimension_semantics<arbitrary>], iteration_bounds = array<i64: 1>, scalar_prefetch = 0 : i64, scratch_operands = 0 : i64, tpu.core_type = #tpu.core_type<tc>, window_params = [{pipeline_mode = #tpu.pipeline_mode<synchronous>, transform_indices = @transform_0, window_bounds = array<i64: 24, 32>}, {pipeline_mode = #tpu.pipeline_mode<synchronous>, transform_indices = @transform_1, window_bounds = array<i64: 1, 512>}, {pipeline_mode = #tpu.pipeline_mode<synchronous>, transform_indices = @transform_2, window_bounds = array<i64: 32, 512>}, {pipeline_mode = #tpu.pipeline_mode<synchronous>, transform_indices = @transform_3, window_bounds = array<i64: 608, 128>}, {pipeline_mode = #tpu.pipeline_mode<synchronous>, transform_indices = @transform_4, window_bounds = array<i64: 2, 32>}]} {
    %c0 = arith.constant 0 : index
    %c0_0 = arith.constant 0 : index
    %0 = vector.load %arg1[%c0, %c0_0] : memref<24x32xf32, #tpu.memory_space<vmem>>, vector<8x32xf32>
    %c8 = arith.constant 8 : index
    %c0_1 = arith.constant 0 : index
    %1 = vector.load %arg1[%c8, %c0_1] : memref<24x32xf32, #tpu.memory_space<vmem>>, vector<8x32xf32>
    %c16 = arith.constant 16 : index
    %c0_2 = arith.constant 0 : index
    %2 = vector.load %arg1[%c16, %c0_2] : memref<24x32xf32, #tpu.memory_space<vmem>>, vector<8x32xf32>
    %c0_3 = arith.constant 0 : index
    %c0_4 = arith.constant 0 : index
    %3 = vector.load %arg2[%c0_3, %c0_4] : memref<1x512xf32, #tpu.memory_space<vmem>>, vector<1x512xf32>
    %c0_5 = arith.constant 0 : index
    %c0_6 = arith.constant 0 : index
    %4 = vector.load %arg3[%c0_5, %c0_6] : memref<32x512xf32, #tpu.memory_space<vmem>>, vector<32x512xf32>
    %5 = tpu.iota {dimensions = array<i32: 1>} : vector<32x512xi32>
    %6 = tpu.iota {dimensions = array<i32: 0>} : vector<32x512xi32>
    %c16_i32 = arith.constant 16 : i32
    %7 = vector.broadcast %c16_i32 : i32 to vector<32x512xi32>
    %8 = arith.muli %6, %7 : vector<32x512xi32>
    %9 = arith.subi %5, %8 : vector<32x512xi32>
    %c0_i32 = arith.constant 0 : i32
    %10 = vector.broadcast %c0_i32 : i32 to vector<32x512xi32>
    %11 = arith.cmpi sge, %9, %10 : vector<32x512xi32>
    %c16_i32_7 = arith.constant 16 : i32
    %12 = vector.broadcast %c16_i32_7 : i32 to vector<32x512xi32>
    %13 = arith.cmpi slt, %9, %12 : vector<32x512xi32>
    %14 = arith.andi %11, %13 : vector<32x512xi1>
    %cst = arith.constant 1.000000e+00 : f32
    %cst_8 = arith.constant 0.000000e+00 : f32
    %15 = vector.broadcast %cst : f32 to vector<32x512xf32>
    %16 = vector.broadcast %cst_8 : f32 to vector<32x512xf32>
    %17 = arith.select %14, %15, %16 : vector<32x512xi1>, vector<32x512xf32>
    %18 = tpu.iota {dimensions = array<i32: 0>} : vector<512x32xi32>
    %19 = tpu.iota {dimensions = array<i32: 1>} : vector<512x32xi32>
    %c16_i32_9 = arith.constant 16 : i32
    %20 = vector.broadcast %c16_i32_9 : i32 to vector<512x32xi32>
    %21 = arith.muli %19, %20 : vector<512x32xi32>
    %22 = arith.subi %18, %21 : vector<512x32xi32>
    %c0_i32_10 = arith.constant 0 : i32
    %23 = vector.broadcast %c0_i32_10 : i32 to vector<512x32xi32>
    %24 = arith.cmpi sge, %22, %23 : vector<512x32xi32>
    %c16_i32_11 = arith.constant 16 : i32
    %25 = vector.broadcast %c16_i32_11 : i32 to vector<512x32xi32>
    %26 = arith.cmpi slt, %22, %25 : vector<512x32xi32>
    %27 = arith.andi %24, %26 : vector<512x32xi1>
    %cst_12 = arith.constant 1.000000e+00 : f32
    %cst_13 = arith.constant 0.000000e+00 : f32
    %28 = vector.broadcast %cst_12 : f32 to vector<512x32xf32>
    %29 = vector.broadcast %cst_13 : f32 to vector<512x32xf32>
    %30 = arith.select %27, %28, %29 : vector<512x32xi1>, vector<512x32xf32>
    %cst_14 = arith.constant dense<0.000000e+00> : vector<8x512xf32>
    %31 = tpu.matmul %1, %17, %cst_14 {dimension_numbers = #tpu.dot_dimension_numbers<[1], [0], [0], [1], [0, 0, 1, 1], [], []>} : vector<8x32xf32>, vector<32x512xf32>, vector<8x512xf32> -> vector<8x512xf32>
    %cst_15 = arith.constant dense<0.000000e+00> : vector<8x512xf32>
    %32 = tpu.matmul %1, %4, %cst_15 {dimension_numbers = #tpu.dot_dimension_numbers<[1], [0], [0], [1], [0, 0, 1, 1], [], []>} : vector<8x32xf32>, vector<32x512xf32>, vector<8x512xf32> -> vector<8x512xf32>
    %33 = vector.extract_strided_slice %31 {offsets = [0, 0], sizes = [3, 512], strides = [1, 1]} : vector<8x512xf32> to vector<3x512xf32>
    %34 = vector.extract_strided_slice %32 {offsets = [0, 0], sizes = [3, 512], strides = [1, 1]} : vector<8x512xf32> to vector<3x512xf32>
    %35 = arith.subf %33, %34 : vector<3x512xf32>
    %36 = arith.mulf %35, %35 : vector<3x512xf32>
    %cst_16 = arith.constant dense<0.000000e+00> : vector<512xf32>
    %37 = vector.multi_reduction <add>, %36, %cst_16 [0] : vector<3x512xf32> to vector<512xf32>
    %38 = vector.shape_cast %37 : vector<512xf32> to vector<1x512xf32>
    %39 = vector.extract_strided_slice %31 {offsets = [3, 0], sizes = [1, 512], strides = [1, 1]} : vector<8x512xf32> to vector<1x512xf32>
    %40 = vector.extract_strided_slice %32 {offsets = [3, 0], sizes = [1, 512], strides = [1, 1]} : vector<8x512xf32> to vector<1x512xf32>
    %41 = arith.mulf %39, %40 : vector<1x512xf32>
    %cst_17 = arith.constant 0.000000e+00 : f32
    %42 = vector.broadcast %cst_17 : f32 to vector<1x512xf32>
    %43 = arith.cmpf ole, %38, %42 : vector<1x512xf32>
    %cst_18 = arith.constant 1.000000e+00 : f32
    %cst_19 = arith.constant 0.000000e+00 : f32
    %44 = vector.broadcast %cst_18 : f32 to vector<1x512xf32>
    %45 = vector.broadcast %cst_19 : f32 to vector<1x512xf32>
    %46 = arith.select %43, %44, %45 : vector<1x512xi1>, vector<1x512xf32>
    %47 = arith.maximumf %3, %46 : vector<1x512xf32>
    %48 = arith.mulf %41, %47 : vector<1x512xf32>
    %c0_20 = arith.constant 0 : index
    %c0_21 = arith.constant 0 : index
    %49 = vector.load %arg4[%c0_20, %c0_21] : memref<608x128xf32, #tpu.memory_space<vmem>>, vector<32x8xf32>
    %cst_22 = arith.constant dense<0.000000e+00> : vector<32x32xf32>
    %50 = tpu.matmul %49, %0, %cst_22 {dimension_numbers = #tpu.dot_dimension_numbers<[1], [0], [0], [1], [0, 0, 1, 1], [], []>} : vector<32x8xf32>, vector<8x32xf32>, vector<32x32xf32> -> vector<32x32xf32>
    %c0_23 = arith.constant 0 : index
    %c8_24 = arith.constant 8 : index
    %51 = vector.load %arg4[%c0_23, %c8_24] : memref<608x128xf32, #tpu.memory_space<vmem>>, vector<32x1xf32>
    %52 = vector.broadcast %51 : vector<32x1xf32> to vector<32x32xf32>
    %53 = arith.addf %50, %52 : vector<32x32xf32>
    %c32 = arith.constant 32 : index
    %c0_25 = arith.constant 0 : index
    %54 = vector.load %arg4[%c32, %c0_25] : memref<608x128xf32, #tpu.memory_space<vmem>>, vector<32x32xf32>
    %cst_26 = arith.constant dense<0.000000e+00> : vector<32x32xf32>
    %55 = tpu.matmul %54, %53, %cst_26 {dimension_numbers = #tpu.dot_dimension_numbers<[1], [0], [0], [1], [0, 0, 1, 1], [], []>} : vector<32x32xf32>, vector<32x32xf32>, vector<32x32xf32> -> vector<32x32xf32>
    %56 = vector.extract_strided_slice %55 {offsets = [0, 0], sizes = [16, 32], strides = [1, 1]} : vector<32x32xf32> to vector<16x32xf32>
    %cst_27 = arith.constant dense<0.000000e+00> : vector<16x512xf32>
    %57 = tpu.matmul %56, %17, %cst_27 {dimension_numbers = #tpu.dot_dimension_numbers<[1], [0], [0], [1], [0, 0, 1, 1], [], []>} : vector<16x32xf32>, vector<32x512xf32>, vector<16x512xf32> -> vector<16x512xf32>
    %58 = vector.extract_strided_slice %55 {offsets = [16, 0], sizes = [16, 32], strides = [1, 1]} : vector<32x32xf32> to vector<16x32xf32>
    %cst_28 = arith.constant dense<0.000000e+00> : vector<16x512xf32>
    %59 = tpu.matmul %58, %4, %cst_28 {dimension_numbers = #tpu.dot_dimension_numbers<[1], [0], [0], [1], [0, 0, 1, 1], [], []>} : vector<16x32xf32>, vector<32x512xf32>, vector<16x512xf32> -> vector<16x512xf32>
    %60 = arith.addf %57, %59 : vector<16x512xf32>
    %c32_29 = arith.constant 32 : index
    %c32_30 = arith.constant 32 : index
    %61 = vector.load %arg4[%c32_29, %c32_30] : memref<608x128xf32, #tpu.memory_space<vmem>>, vector<16x1xf32>
    %62 = vector.broadcast %61 : vector<16x1xf32> to vector<16x512xf32>
    %63 = vector.broadcast %38 : vector<1x512xf32> to vector<16x512xf32>
    %64 = arith.mulf %62, %63 : vector<16x512xf32>
    %65 = arith.addf %60, %64 : vector<16x512xf32>
    %c32_31 = arith.constant 32 : index
    %c33 = arith.constant 33 : index
    %66 = vector.load %arg4[%c32_31, %c33] : memref<608x128xf32, #tpu.memory_space<vmem>>, vector<16x1xf32>
    %67 = vector.broadcast %66 : vector<16x1xf32> to vector<16x512xf32>
    %68 = arith.addf %65, %67 : vector<16x512xf32>
    %69 = arith.negf %68 : vector<16x512xf32>
    %70 = math.exp %69 : vector<16x512xf32>
    %cst_32 = arith.constant 1.000000e+00 : f32
    %71 = vector.broadcast %cst_32 : f32 to vector<16x512xf32>
    %72 = arith.addf %71, %70 : vector<16x512xf32>
    %73 = arith.divf %71, %72 : vector<16x512xf32>
    %74 = arith.mulf %68, %73 : vector<16x512xf32>
    %c64 = arith.constant 64 : index
    %c0_33 = arith.constant 0 : index
    %75 = vector.load %arg4[%c64, %c0_33] : memref<608x128xf32, #tpu.memory_space<vmem>>, vector<16x16xf32>
    %cst_34 = arith.constant dense<0.000000e+00> : vector<16x512xf32>
    %76 = tpu.matmul %75, %74, %cst_34 {dimension_numbers = #tpu.dot_dimension_numbers<[1], [0], [0], [1], [0, 0, 1, 1], [], []>} : vector<16x16xf32>, vector<16x512xf32>, vector<16x512xf32> -> vector<16x512xf32>
    %c64_35 = arith.constant 64 : index
    %c16_36 = arith.constant 16 : index
    %77 = vector.load %arg4[%c64_35, %c16_36] : memref<608x128xf32, #tpu.memory_space<vmem>>, vector<16x1xf32>
    %78 = vector.broadcast %77 : vector<16x1xf32> to vector<16x512xf32>
    %79 = arith.addf %76, %78 : vector<16x512xf32>
    %80 = arith.negf %79 : vector<16x512xf32>
    %81 = math.exp %80 : vector<16x512xf32>
    %cst_37 = arith.constant 1.000000e+00 : f32
    %82 = vector.broadcast %cst_37 : f32 to vector<16x512xf32>
    %83 = arith.addf %82, %81 : vector<16x512xf32>
    %84 = arith.divf %82, %83 : vector<16x512xf32>
    %85 = arith.mulf %79, %84 : vector<16x512xf32>
    %86 = vector.broadcast %48 : vector<1x512xf32> to vector<16x512xf32>
    %87 = arith.mulf %85, %86 : vector<16x512xf32>
    %cst_38 = arith.constant dense<0.000000e+00> : vector<16x32xf32>
    %88 = tpu.matmul %87, %30, %cst_38 {dimension_numbers = #tpu.dot_dimension_numbers<[1], [0], [0], [1], [0, 0, 1, 1], [], []>} : vector<16x512xf32>, vector<512x32xf32>, vector<16x32xf32> -> vector<16x32xf32>
    %c80 = arith.constant 80 : index
    %c0_39 = arith.constant 0 : index
    %89 = vector.load %arg4[%c80, %c0_39] : memref<608x128xf32, #tpu.memory_space<vmem>>, vector<64x32xf32>
    %cst_40 = arith.constant dense<0.000000e+00> : vector<64x32xf32>
    %90 = tpu.matmul %89, %53, %cst_40 {dimension_numbers = #tpu.dot_dimension_numbers<[1], [0], [0], [1], [0, 0, 1, 1], [], []>} : vector<64x32xf32>, vector<32x32xf32>, vector<64x32xf32> -> vector<64x32xf32>
    %c144 = arith.constant 144 : index
    %c0_41 = arith.constant 0 : index
    %91 = vector.load %arg4[%c144, %c0_41] : memref<608x128xf32, #tpu.memory_space<vmem>>, vector<64x16xf32>
    %cst_42 = arith.constant dense<0.000000e+00> : vector<64x32xf32>
    %92 = tpu.matmul %91, %88, %cst_42 {dimension_numbers = #tpu.dot_dimension_numbers<[1], [0], [0], [1], [0, 0, 1, 1], [], []>} : vector<64x16xf32>, vector<16x32xf32>, vector<64x32xf32> -> vector<64x32xf32>
    %93 = arith.addf %90, %92 : vector<64x32xf32>
    %c80_43 = arith.constant 80 : index
    %c32_44 = arith.constant 32 : index
    %94 = vector.load %arg4[%c80_43, %c32_44] : memref<608x128xf32, #tpu.memory_space<vmem>>, vector<64x1xf32>
    %95 = vector.broadcast %94 : vector<64x1xf32> to vector<64x32xf32>
    %96 = arith.addf %93, %95 : vector<64x32xf32>
    %97 = arith.negf %96 : vector<64x32xf32>
    %98 = math.exp %97 : vector<64x32xf32>
    %cst_45 = arith.constant 1.000000e+00 : f32
    %99 = vector.broadcast %cst_45 : f32 to vector<64x32xf32>
    %100 = arith.addf %99, %98 : vector<64x32xf32>
    %101 = arith.divf %99, %100 : vector<64x32xf32>
    %102 = arith.mulf %96, %101 : vector<64x32xf32>
    %c208 = arith.constant 208 : index
    %c0_46 = arith.constant 0 : index
    %103 = vector.load %arg4[%c208, %c0_46] : memref<608x128xf32, #tpu.memory_space<vmem>>, vector<32x64xf32>
    %cst_47 = arith.constant dense<0.000000e+00> : vector<32x32xf32>
    %104 = tpu.matmul %103, %102, %cst_47 {dimension_numbers = #tpu.dot_dimension_numbers<[1], [0], [0], [1], [0, 0, 1, 1], [], []>} : vector<32x64xf32>, vector<64x32xf32>, vector<32x32xf32> -> vector<32x32xf32>
    %c208_48 = arith.constant 208 : index
    %c64_49 = arith.constant 64 : index
    %105 = vector.load %arg4[%c208_48, %c64_49] : memref<608x128xf32, #tpu.memory_space<vmem>>, vector<32x1xf32>
    %106 = vector.broadcast %105 : vector<32x1xf32> to vector<32x32xf32>
    %107 = arith.addf %104, %106 : vector<32x32xf32>
    %108 = arith.addf %107, %53 : vector<32x32xf32>
    %c240 = arith.constant 240 : index
    %c0_50 = arith.constant 0 : index
    %109 = vector.load %arg4[%c240, %c0_50] : memref<608x128xf32, #tpu.memory_space<vmem>>, vector<32x32xf32>
    %cst_51 = arith.constant dense<0.000000e+00> : vector<32x32xf32>
    %110 = tpu.matmul %109, %108, %cst_51 {dimension_numbers = #tpu.dot_dimension_numbers<[1], [0], [0], [1], [0, 0, 1, 1], [], []>} : vector<32x32xf32>, vector<32x32xf32>, vector<32x32xf32> -> vector<32x32xf32>
    %111 = vector.extract_strided_slice %110 {offsets = [0, 0], sizes = [16, 32], strides = [1, 1]} : vector<32x32xf32> to vector<16x32xf32>
    %cst_52 = arith.constant dense<0.000000e+00> : vector<16x512xf32>
    %112 = tpu.matmul %111, %17, %cst_52 {dimension_numbers = #tpu.dot_dimension_numbers<[1], [0], [0], [1], [0, 0, 1, 1], [], []>} : vector<16x32xf32>, vector<32x512xf32>, vector<16x512xf32> -> vector<16x512xf32>
    %113 = vector.extract_strided_slice %110 {offsets = [16, 0], sizes = [16, 32], strides = [1, 1]} : vector<32x32xf32> to vector<16x32xf32>
    %cst_53 = arith.constant dense<0.000000e+00> : vector<16x512xf32>
    %114 = tpu.matmul %113, %4, %cst_53 {dimension_numbers = #tpu.dot_dimension_numbers<[1], [0], [0], [1], [0, 0, 1, 1], [], []>} : vector<16x32xf32>, vector<32x512xf32>, vector<16x512xf32> -> vector<16x512xf32>
    %115 = arith.addf %112, %114 : vector<16x512xf32>
    %c240_54 = arith.constant 240 : index
    %c32_55 = arith.constant 32 : index
    %116 = vector.load %arg4[%c240_54, %c32_55] : memref<608x128xf32, #tpu.memory_space<vmem>>, vector<16x1xf32>
    %117 = vector.broadcast %116 : vector<16x1xf32> to vector<16x512xf32>
    %118 = vector.broadcast %38 : vector<1x512xf32> to vector<16x512xf32>
    %119 = arith.mulf %117, %118 : vector<16x512xf32>
    %120 = arith.addf %115, %119 : vector<16x512xf32>
    %c240_56 = arith.constant 240 : index
    %c33_57 = arith.constant 33 : index
    %121 = vector.load %arg4[%c240_56, %c33_57] : memref<608x128xf32, #tpu.memory_space<vmem>>, vector<16x1xf32>
    %122 = vector.broadcast %121 : vector<16x1xf32> to vector<16x512xf32>
    %123 = arith.addf %120, %122 : vector<16x512xf32>
    %124 = arith.negf %123 : vector<16x512xf32>
    %125 = math.exp %124 : vector<16x512xf32>
    %cst_58 = arith.constant 1.000000e+00 : f32
    %126 = vector.broadcast %cst_58 : f32 to vector<16x512xf32>
    %127 = arith.addf %126, %125 : vector<16x512xf32>
    %128 = arith.divf %126, %127 : vector<16x512xf32>
    %129 = arith.mulf %123, %128 : vector<16x512xf32>
    %c272 = arith.constant 272 : index
    %c0_59 = arith.constant 0 : index
    %130 = vector.load %arg4[%c272, %c0_59] : memref<608x128xf32, #tpu.memory_space<vmem>>, vector<16x16xf32>
    %cst_60 = arith.constant dense<0.000000e+00> : vector<16x512xf32>
    %131 = tpu.matmul %130, %129, %cst_60 {dimension_numbers = #tpu.dot_dimension_numbers<[1], [0], [0], [1], [0, 0, 1, 1], [], []>} : vector<16x16xf32>, vector<16x512xf32>, vector<16x512xf32> -> vector<16x512xf32>
    %c272_61 = arith.constant 272 : index
    %c16_62 = arith.constant 16 : index
    %132 = vector.load %arg4[%c272_61, %c16_62] : memref<608x128xf32, #tpu.memory_space<vmem>>, vector<16x1xf32>
    %133 = vector.broadcast %132 : vector<16x1xf32> to vector<16x512xf32>
    %134 = arith.addf %131, %133 : vector<16x512xf32>
    %135 = arith.negf %134 : vector<16x512xf32>
    %136 = math.exp %135 : vector<16x512xf32>
    %cst_63 = arith.constant 1.000000e+00 : f32
    %137 = vector.broadcast %cst_63 : f32 to vector<16x512xf32>
    %138 = arith.addf %137, %136 : vector<16x512xf32>
    %139 = arith.divf %137, %138 : vector<16x512xf32>
    %140 = arith.mulf %134, %139 : vector<16x512xf32>
    %141 = vector.broadcast %48 : vector<1x512xf32> to vector<16x512xf32>
    %142 = arith.mulf %140, %141 : vector<16x512xf32>
    %cst_64 = arith.constant dense<0.000000e+00> : vector<16x32xf32>
    %143 = tpu.matmul %142, %30, %cst_64 {dimension_numbers = #tpu.dot_dimension_numbers<[1], [0], [0], [1], [0, 0, 1, 1], [], []>} : vector<16x512xf32>, vector<512x32xf32>, vector<16x32xf32> -> vector<16x32xf32>
    %c288 = arith.constant 288 : index
    %c0_65 = arith.constant 0 : index
    %144 = vector.load %arg4[%c288, %c0_65] : memref<608x128xf32, #tpu.memory_space<vmem>>, vector<64x32xf32>
    %cst_66 = arith.constant dense<0.000000e+00> : vector<64x32xf32>
    %145 = tpu.matmul %144, %108, %cst_66 {dimension_numbers = #tpu.dot_dimension_numbers<[1], [0], [0], [1], [0, 0, 1, 1], [], []>} : vector<64x32xf32>, vector<32x32xf32>, vector<64x32xf32> -> vector<64x32xf32>
    %c352 = arith.constant 352 : index
    %c0_67 = arith.constant 0 : index
    %146 = vector.load %arg4[%c352, %c0_67] : memref<608x128xf32, #tpu.memory_space<vmem>>, vector<64x16xf32>
    %cst_68 = arith.constant dense<0.000000e+00> : vector<64x32xf32>
    %147 = tpu.matmul %146, %143, %cst_68 {dimension_numbers = #tpu.dot_dimension_numbers<[1], [0], [0], [1], [0, 0, 1, 1], [], []>} : vector<64x16xf32>, vector<16x32xf32>, vector<64x32xf32> -> vector<64x32xf32>
    %148 = arith.addf %145, %147 : vector<64x32xf32>
    %c288_69 = arith.constant 288 : index
    %c32_70 = arith.constant 32 : index
    %149 = vector.load %arg4[%c288_69, %c32_70] : memref<608x128xf32, #tpu.memory_space<vmem>>, vector<64x1xf32>
    %150 = vector.broadcast %149 : vector<64x1xf32> to vector<64x32xf32>
    %151 = arith.addf %148, %150 : vector<64x32xf32>
    %152 = arith.negf %151 : vector<64x32xf32>
    %153 = math.exp %152 : vector<64x32xf32>
    %cst_71 = arith.constant 1.000000e+00 : f32
    %154 = vector.broadcast %cst_71 : f32 to vector<64x32xf32>
    %155 = arith.addf %154, %153 : vector<64x32xf32>
    %156 = arith.divf %154, %155 : vector<64x32xf32>
    %157 = arith.mulf %151, %156 : vector<64x32xf32>
    %c416 = arith.constant 416 : index
    %c0_72 = arith.constant 0 : index
    %158 = vector.load %arg4[%c416, %c0_72] : memref<608x128xf32, #tpu.memory_space<vmem>>, vector<32x64xf32>
    %cst_73 = arith.constant dense<0.000000e+00> : vector<32x32xf32>
    %159 = tpu.matmul %158, %157, %cst_73 {dimension_numbers = #tpu.dot_dimension_numbers<[1], [0], [0], [1], [0, 0, 1, 1], [], []>} : vector<32x64xf32>, vector<64x32xf32>, vector<32x32xf32> -> vector<32x32xf32>
    %c416_74 = arith.constant 416 : index
    %c64_75 = arith.constant 64 : index
    %160 = vector.load %arg4[%c416_74, %c64_75] : memref<608x128xf32, #tpu.memory_space<vmem>>, vector<32x1xf32>
    %161 = vector.broadcast %160 : vector<32x1xf32> to vector<32x32xf32>
    %162 = arith.addf %159, %161 : vector<32x32xf32>
    %163 = arith.addf %162, %108 : vector<32x32xf32>
    %164 = tpu.transpose %163, [1, 0] : vector<32x32xf32> -> vector<32x32xf32>
    %c448 = arith.constant 448 : index
    %c0_76 = arith.constant 0 : index
    %165 = vector.load %arg4[%c448, %c0_76] : memref<608x128xf32, #tpu.memory_space<vmem>>, vector<32x32xf32>
    %cst_77 = arith.constant dense<0.000000e+00> : vector<32x32xf32>
    %166 = tpu.matmul %164, %165, %cst_77 {dimension_numbers = #tpu.dot_dimension_numbers<[1], [0], [0], [1], [0, 0, 1, 1], [], []>} : vector<32x32xf32>, vector<32x32xf32>, vector<32x32xf32> -> vector<32x32xf32>
    %c480 = arith.constant 480 : index
    %c0_78 = arith.constant 0 : index
    %167 = vector.load %arg4[%c480, %c0_78] : memref<608x128xf32, #tpu.memory_space<vmem>>, vector<1x32xf32>
    %168 = vector.broadcast %167 : vector<1x32xf32> to vector<32x32xf32>
    %169 = arith.addf %166, %168 : vector<32x32xf32>
    %170 = arith.negf %169 : vector<32x32xf32>
    %171 = math.exp %170 : vector<32x32xf32>
    %cst_79 = arith.constant 1.000000e+00 : f32
    %172 = vector.broadcast %cst_79 : f32 to vector<32x32xf32>
    %173 = arith.addf %172, %171 : vector<32x32xf32>
    %174 = arith.divf %172, %173 : vector<32x32xf32>
    %175 = arith.mulf %169, %174 : vector<32x32xf32>
    %c488 = arith.constant 488 : index
    %c0_80 = arith.constant 0 : index
    %176 = vector.load %arg4[%c488, %c0_80] : memref<608x128xf32, #tpu.memory_space<vmem>>, vector<32x32xf32>
    %cst_81 = arith.constant dense<0.000000e+00> : vector<32x32xf32>
    %177 = tpu.matmul %175, %176, %cst_81 {dimension_numbers = #tpu.dot_dimension_numbers<[1], [0], [0], [1], [0, 0, 1, 1], [], []>} : vector<32x32xf32>, vector<32x32xf32>, vector<32x32xf32> -> vector<32x32xf32>
    %c520 = arith.constant 520 : index
    %c0_82 = arith.constant 0 : index
    %178 = vector.load %arg4[%c520, %c0_82] : memref<608x128xf32, #tpu.memory_space<vmem>>, vector<1x32xf32>
    %179 = vector.broadcast %178 : vector<1x32xf32> to vector<32x32xf32>
    %180 = arith.addf %177, %179 : vector<32x32xf32>
    %cst_83 = arith.constant dense<0.000000e+00> : vector<8x32xf32>
    %181 = tpu.matmul %2, %180, %cst_83 {dimension_numbers = #tpu.dot_dimension_numbers<[1], [0], [0], [1], [0, 0, 1, 1], [], []>} : vector<8x32xf32>, vector<32x32xf32>, vector<8x32xf32> -> vector<8x32xf32>
    %cst_84 = arith.constant dense<0.000000e+00> : vector<8xf32>
    %182 = vector.multi_reduction <add>, %2, %cst_84 [1] : vector<8x32xf32> to vector<8xf32>
    %183 = vector.shape_cast %182 : vector<8xf32> to vector<8x1xf32>
    %cst_85 = arith.constant 1.000000e+00 : f32
    %184 = vector.broadcast %cst_85 : f32 to vector<8x1xf32>
    %185 = arith.maximumf %183, %184 : vector<8x1xf32>
    %186 = vector.broadcast %185 : vector<8x1xf32> to vector<8x32xf32>
    %187 = arith.divf %181, %186 : vector<8x32xf32>
    %c528 = arith.constant 528 : index
    %c0_86 = arith.constant 0 : index
    %188 = vector.load %arg4[%c528, %c0_86] : memref<608x128xf32, #tpu.memory_space<vmem>>, vector<32x32xf32>
    %cst_87 = arith.constant dense<0.000000e+00> : vector<8x32xf32>
    %189 = tpu.matmul %187, %188, %cst_87 {dimension_numbers = #tpu.dot_dimension_numbers<[1], [0], [0], [1], [0, 0, 1, 1], [], []>} : vector<8x32xf32>, vector<32x32xf32>, vector<8x32xf32> -> vector<8x32xf32>
    %c560 = arith.constant 560 : index
    %c0_88 = arith.constant 0 : index
    %190 = vector.load %arg4[%c560, %c0_88] : memref<608x128xf32, #tpu.memory_space<vmem>>, vector<1x32xf32>
    %191 = vector.broadcast %190 : vector<1x32xf32> to vector<8x32xf32>
    %192 = arith.addf %189, %191 : vector<8x32xf32>
    %193 = arith.negf %192 : vector<8x32xf32>
    %194 = math.exp %193 : vector<8x32xf32>
    %cst_89 = arith.constant 1.000000e+00 : f32
    %195 = vector.broadcast %cst_89 : f32 to vector<8x32xf32>
    %196 = arith.addf %195, %194 : vector<8x32xf32>
    %197 = arith.divf %195, %196 : vector<8x32xf32>
    %198 = arith.mulf %192, %197 : vector<8x32xf32>
    %c568 = arith.constant 568 : index
    %c0_90 = arith.constant 0 : index
    %199 = vector.load %arg4[%c568, %c0_90] : memref<608x128xf32, #tpu.memory_space<vmem>>, vector<32x32xf32>
    %cst_91 = arith.constant dense<0.000000e+00> : vector<8x32xf32>
    %200 = tpu.matmul %198, %199, %cst_91 {dimension_numbers = #tpu.dot_dimension_numbers<[1], [0], [0], [1], [0, 0, 1, 1], [], []>} : vector<8x32xf32>, vector<32x32xf32>, vector<8x32xf32> -> vector<8x32xf32>
    %c600 = arith.constant 600 : index
    %c0_92 = arith.constant 0 : index
    %201 = vector.load %arg4[%c600, %c0_92] : memref<608x128xf32, #tpu.memory_space<vmem>>, vector<1x32xf32>
    %202 = vector.broadcast %201 : vector<1x32xf32> to vector<8x32xf32>
    %203 = arith.addf %200, %202 : vector<8x32xf32>
    %204 = arith.mulf %203, %203 : vector<8x32xf32>
    %cst_93 = arith.constant dense<0.000000e+00> : vector<8xf32>
    %205 = vector.multi_reduction <add>, %204, %cst_93 [1] : vector<8x32xf32> to vector<8xf32>
    %206 = vector.shape_cast %205 : vector<8xf32> to vector<8x1xf32>
    %207 = math.sqrt %206 : vector<8x1xf32>
    %cst_94 = arith.constant 9.99999993E-9 : f32
    %208 = vector.broadcast %cst_94 : f32 to vector<8x1xf32>
    %209 = arith.maximumf %207, %208 : vector<8x1xf32>
    %210 = vector.broadcast %209 : vector<8x1xf32> to vector<8x32xf32>
    %211 = arith.divf %203, %210 : vector<8x32xf32>
    %212 = vector.extract_strided_slice %211 {offsets = [0, 0], sizes = [2, 32], strides = [1, 1]} : vector<8x32xf32> to vector<2x32xf32>
    %c0_95 = arith.constant 0 : index
    %c0_96 = arith.constant 0 : index
    %213 = vector.load %arg5[%c0_95, %c0_96] : memref<2x32xf32, #tpu.memory_space<vmem>>, vector<2x32xf32>
    tpu.vector_store %arg5[%c0_95, %c0_96], %212 {strides = array<i32>} : memref<2x32xf32, #tpu.memory_space<vmem>>, vector<2x32xf32>,
    return
  }
  func.func @transform_0(%arg0: i32) -> (i32, i32) {
    %c0_i32 = arith.constant 0 : i32
    %c0_i32_0 = arith.constant 0 : i32
    %c0_i32_1 = arith.constant 0 : i32
    return %c0_i32, %c0_i32_0 : i32, i32
  }
  func.func @transform_1(%arg0: i32) -> (i32, i32) {
    %c0_i32 = arith.constant 0 : i32
    %c0_i32_0 = arith.constant 0 : i32
    %c0_i32_1 = arith.constant 0 : i32
    return %c0_i32, %c0_i32_0 : i32, i32
  }
  func.func @transform_2(%arg0: i32) -> (i32, i32) {
    %c0_i32 = arith.constant 0 : i32
    %c0_i32_0 = arith.constant 0 : i32
    %c0_i32_1 = arith.constant 0 : i32
    return %c0_i32, %c0_i32_0 : i32, i32
  }
  func.func @transform_3(%arg0: i32) -> (i32, i32) {
    %c0_i32 = arith.constant 0 : i32
    %c0_i32_0 = arith.constant 0 : i32
    %c0_i32_1 = arith.constant 0 : i32
    return %c0_i32, %c0_i32_0 : i32, i32
  }
  func.func @transform_4(%arg0: i32) -> (i32, i32) {
    %c0_i32 = arith.constant 0 : i32
    %c0_i32_0 = arith.constant 0 : i32
    %c0_i32_1 = arith.constant 0 : i32
    return %c0_i32, %c0_i32_0 : i32, i32
  }
}

</mosaic_0001>

<llo_original>
// kernel: model0_forward.1
$region0: #{model0_forward.1}
  #allocation0 [shape = 'u32[]', space=smem, size = 0x4, offset = 0x4, fixed_abs, tag = 'smem constant byte address 0x4 - core index']
  #allocation1 [shape = 'u32[144,128]{1,0:T(1,128)}', space=vmem, size = 0x12000, scoped, tag = 'internal scratch']
  %s0 = inlined_call_operand.vmem [shape: f32[24,32], index: 0, kind: input, shape index: {}]
  %s1 = inlined_call_operand.vmem [shape: f32[1,512], index: 1, kind: input, shape index: {}]
  %s2 = inlined_call_operand.vmem [shape: f32[32,512], index: 2, kind: input, shape index: {}]
  %s3 = inlined_call_operand.hbm [shape: f32[608,128], index: 3, kind: input, shape index: {}]
  %s4 = inlined_call_operand.hbm [shape: f32[2,32], index: 4, kind: output, shape index: {}]
  %s5 = sld [smem:[#allocation0]]
  $region30: #{model0_forward.1} parent=0
    _
  %s7 = ssub.s32 1, %s5
  %s8 = scalar_select 0, %s7, %s5
  $region1: #{model0_forward.1} parent=0
    #allocation2 [shape = 'u8[311296]{0}', space=vmem, size = 0x4c000, scoped, tag = 'input window, operand 3, single buffered']
    #allocation3 [shape = 's32[1]{0}', space=sflag, size = 0x4, scoped, tag = 'scoped memory for model0_forward.1']
    #allocation4 [shape = 's32[1]{0}', space=sflag, size = 0x4, scoped, tag = 'scoped memory for model0_forward.1']
    #allocation5 [shape = 'u8[1024]{0}', space=vmem, size = 0x400, scoped, tag = 'output window, operand 0, single buffered']
    %9 = vsyncpa [#allocation3], 0
    %10 = vsyncpa [#allocation4], 0
    // Predicated region
    $region2: #{model0_forward.1} parent=1 // pred_check
      _
    $region3: #{model0_forward.1} parent=1 // pred_check_branch
      %12 = sbr.rel (0) target = $region5
    $region4: #{model0_forward.1} parent=1 // pred_region
      _
    $region5: #{model0_forward.1} parent=1 // pred_fallthru
      _
    // Predicated region
    $region6: #{model0_forward.1} parent=1 // pred_check
      _
    $region7: #{model0_forward.1} parent=1 // pred_check_branch
      %14 = sbr.rel (0) target = $region9
    $region8: #{model0_forward.1} parent=1 // pred_region
      _
    $region9: #{model0_forward.1} parent=1 // pred_fallthru
      _
    // Predicated region
    $region10: #{model0_forward.1} parent=1 // pred_check
      _
    $region11: #{model0_forward.1} parent=1 // pred_check_branch
      %16 = sbr.rel (0) target = $region13
    $region12: #{model0_forward.1} parent=1 // pred_region
      _
    $region13: #{model0_forward.1} parent=1 // pred_fallthru
      _
    // Predicated region
    $region14: #{model0_forward.1} parent=1 // pred_check
      _
    $region15: #{model0_forward.1} parent=1 // pred_check_branch
      %18 = sbr.rel (0) target = $region17
    $region16: #{model0_forward.1} parent=1 // pred_region
      %s20 = ssub.s32 9728, 9728
      %21 = vsyncadd [#allocation3], %s20
      %s22 = sshll.u32 [#allocation2], 4
      %s23 = int_to_ptr.vmem [resolvable:$true] %s22
      %28 = dma.hbm_to_vmem [thread:$0]  %s3, 9728, %s23, [#allocation3], 128, 128, 8
    $region17: #{model0_forward.1} parent=1 // pred_fallthru
      _
    // Predicated region
    $region18: #{model0_forward.1} parent=1 // pred_check
      _
    $region19: #{model0_forward.1} parent=1 // pred_check_branch
      %30 = sbr.rel (0) target = $region21
    $region20: #{model0_forward.1} parent=1 // pred_region
      %31 = dma.done [#allocation3], 9728
    $region21: #{model0_forward.1} parent=1 // pred_fallthru
      _
    %v32 = vld [vmem:[%s0] sm:$0xff]
    %v33 = vld [vmem:[%s0 + $0x8] sm:$0xff]
    %v34 = vld [vmem:[%s0 + $0x10] sm:$0xff]
    %v35 = vld [vmem:[%s1] sm:$0xf]
    %v36 = vld [vmem:[%s2] sm:$0xff]
    %v37 = vld [vmem:[%s2 + $0x8] sm:$0xff]
    %v38 = vld [vmem:[%s2 + $0x10] sm:$0xff]
    %v39 = vld [vmem:[%s2 + $0x18] sm:$0xff]
    %v40 = vld [vmem:[%s2 + $0x20] sm:$0xff]
    %v41 = vld [vmem:[%s2 + $0x28] sm:$0xff]
    %v42 = vld [vmem:[%s2 + $0x30] sm:$0xff]
    %v43 = vld [vmem:[%s2 + $0x38] sm:$0xff]
    %v44 = vld [vmem:[%s2 + $0x40] sm:$0xff]
    %v45 = vld [vmem:[%s2 + $0x48] sm:$0xff]
    %v46 = vld [vmem:[%s2 + $0x50] sm:$0xff]
    %v47 = vld [vmem:[%s2 + $0x58] sm:$0xff]
    %v48 = vld [vmem:[%s2 + $0x60] sm:$0xff]
    %v49 = vld [vmem:[%s2 + $0x68] sm:$0xff]
    %v50 = vld [vmem:[%s2 + $0x70] sm:$0xff]
    %v51 = vld [vmem:[%s2 + $0x78] sm:$0xff]
    %v52 = vlaneseq
    %v53 = vand.u32 %v52, 127
    %v54 = vadd.s32 %v53, 128
    %v55 = vadd.s32 %v53, 256
    %v56 = vadd.s32 %v53, 384
    %v57 = vlaneseq
    %v58 = vshrl.u32 %v57, 7
    %v59 = vadd.s32 %v58, 8
    %v60 = vadd.s32 %v58, 16
    %v61 = vadd.s32 %v58, 24
    %v62 = vmul.u32 %v58, 16
    %v63 = vmul.u32 %v59, 16
    %v64 = vmul.u32 %v60, 16
    %v65 = vmul.u32 %v61, 16
    %v66 = vsub.s32 %v53, %v62
    %v67 = vsub.s32 %v54, %v62
    %v68 = vsub.s32 %v55, %v62
    %v69 = vsub.s32 %v56, %v62
    %v70 = vsub.s32 %v53, %v63
    %v71 = vsub.s32 %v54, %v63
    %v72 = vsub.s32 %v55, %v63
    %v73 = vsub.s32 %v56, %v63
    %v74 = vsub.s32 %v53, %v64
    %v75 = vsub.s32 %v54, %v64
    %v76 = vsub.s32 %v55, %v64
    %v77 = vsub.s32 %v56, %v64
    %v78 = vsub.s32 %v53, %v65
    %v79 = vsub.s32 %v54, %v65
    %v80 = vsub.s32 %v55, %v65
    %v81 = vsub.s32 %v56, %v65
    %vm82 = vcmp.ge.s32.totalorder %v66, 0
    %vm83 = vcmp.ge.s32.totalorder %v67, 0
    %vm84 = vcmp.ge.s32.totalorder %v68, 0
    %vm85 = vcmp.ge.s32.totalorder %v69, 0
    %vm86 = vcmp.ge.s32.totalorder %v70, 0
    %vm87 = vcmp.ge.s32.totalorder %v71, 0
    %vm88 = vcmp.ge.s32.totalorder %v72, 0
    %vm89 = vcmp.ge.s32.totalorder %v73, 0
    %vm90 = vcmp.ge.s32.totalorder %v74, 0
    %vm91 = vcmp.ge.s32.totalorder %v75, 0
    %vm92 = vcmp.ge.s32.totalorder %v76, 0
    %vm93 = vcmp.ge.s32.totalorder %v77, 0
    %vm94 = vcmp.ge.s32.totalorder %v78, 0
    %vm95 = vcmp.ge.s32.totalorder %v79, 0
    %vm96 = vcmp.ge.s32.totalorder %v80, 0
    %vm97 = vcmp.ge.s32.totalorder %v81, 0
    %vm98 = vcmp.lt.s32.totalorder %v66, 16
    %vm99 = vcmp.lt.s32.totalorder %v67, 16
    %vm100 = vcmp.lt.s32.totalorder %v68, 16
    %vm101 = vcmp.lt.s32.totalorder %v69, 16
    %vm102 = vcmp.lt.s32.totalorder %v70, 16
    %vm103 = vcmp.lt.s32.totalorder %v71, 16
    %vm104 = vcmp.lt.s32.totalorder %v72, 16
    %vm105 = vcmp.lt.s32.totalorder %v73, 16
    %vm106 = vcmp.lt.s32.totalorder %v74, 16
    %vm107 = vcmp.lt.s32.totalorder %v75, 16
    %vm108 = vcmp.lt.s32.totalorder %v76, 16
    %vm109 = vcmp.lt.s32.totalorder %v77, 16
    %vm110 = vcmp.lt.s32.totalorder %v78, 16
    %vm111 = vcmp.lt.s32.totalorder %v79, 16
    %vm112 = vcmp.lt.s32.totalorder %v80, 16
    %vm113 = vcmp.lt.s32.totalorder %v81, 16
    %vm114 = vmand %vm82, %vm98
    %vm115 = vmand %vm83, %vm99
    %vm116 = vmand %vm84, %vm100
    %vm117 = vmand %vm85, %vm101
    %vm118 = vmand %vm86, %vm102
    %vm119 = vmand %vm87, %vm103
    %vm120 = vmand %vm88, %vm104
    %vm121 = vmand %vm89, %vm105
    %vm122 = vmand %vm90, %vm106
    %vm123 = vmand %vm91, %vm107
    %vm124 = vmand %vm92, %vm108
    %vm125 = vmand %vm93, %vm109
    %vm126 = vmand %vm94, %vm110
    %vm127 = vmand %vm95, %vm111
    %vm128 = vmand %vm96, %vm112
    %vm129 = vmand %vm97, %vm113
    %v130 = vsel %vm114, 1.0, 0.0
    %v131 = vsel %vm115, 1.0, 0.0
    %v132 = vsel %vm116, 1.0, 0.0
    %v133 = vsel %vm117, 1.0, 0.0
    %v134 = vsel %vm118, 1.0, 0.0
    %v135 = vsel %vm119, 1.0, 0.0
    %v136 = vsel %vm120, 1.0, 0.0
    %v137 = vsel %vm121, 1.0, 0.0
    %v138 = vsel %vm122, 1.0, 0.0
    %v139 = vsel %vm123, 1.0, 0.0
    %v140 = vsel %vm124, 1.0, 0.0
    %v141 = vsel %vm125, 1.0, 0.0
    %v142 = vsel %vm126, 1.0, 0.0
    %v143 = vsel %vm127, 1.0, 0.0
    %v144 = vsel %vm128, 1.0, 0.0
    %v145 = vsel %vm129, 1.0, 0.0
    %v146 = vadd.s32 %v58, 32
    %v147 = vadd.s32 %v58, 40
    %v148 = vadd.s32 %v58, 48
    %v149 = vadd.s32 %v58, 56
    %v150 = vadd.s32 %v58, 64
    %v151 = vadd.s32 %v58, 72
    %v152 = vadd.s32 %v58, 80
    %v153 = vadd.s32 %v58, 88
    %v154 = vadd.s32 %v58, 96
    %v155 = vadd.s32 %v58, 104
    %v156 = vadd.s32 %v58, 112
    %v157 = vadd.s32 %v58, 120
    %v158 = vadd.s32 %v58, 128
    %v159 = vadd.s32 %v58, 136
    %v160 = vadd.s32 %v58, 144
    %v161 = vadd.s32 %v58, 152
    %v162 = vadd.s32 %v58, 160
    %v163 = vadd.s32 %v58, 168
    %v164 = vadd.s32 %v58, 176
    %v165 = vadd.s32 %v58, 184
    %v166 = vadd.s32 %v58, 192
    %v167 = vadd.s32 %v58, 200
    %v168 = vadd.s32 %v58, 208
    %v169 = vadd.s32 %v58, 216
    %v170 = vadd.s32 %v58, 224
    %v171 = vadd.s32 %v58, 232
    %v172 = vadd.s32 %v58, 240
    %v173 = vadd.s32 %v58, 248
    %v174 = vadd.s32 %v58, 256
    %v175 = vadd.s32 %v58, 264
    %v176 = vadd.s32 %v58, 272
    %v177 = vadd.s32 %v58, 280
    %v178 = vadd.s32 %v58, 288
    %v179 = vadd.s32 %v58, 296
    %v180 = vadd.s32 %v58, 304
    %v181 = vadd.s32 %v58, 312
    %v182 = vadd.s32 %v58, 320
    %v183 = vadd.s32 %v58, 328
    %v184 = vadd.s32 %v58, 336
    %v185 = vadd.s32 %v58, 344
    %v186 = vadd.s32 %v58, 352
    %v187 = vadd.s32 %v58, 360
    %v188 = vadd.s32 %v58, 368
    %v189 = vadd.s32 %v58, 376
    %v190 = vadd.s32 %v58, 384
    %v191 = vadd.s32 %v58, 392
    %v192 = vadd.s32 %v58, 400
    %v193 = vadd.s32 %v58, 408
    %v194 = vadd.s32 %v58, 416
    %v195 = vadd.s32 %v58, 424
    %v196 = vadd.s32 %v58, 432
    %v197 = vadd.s32 %v58, 440
    %v198 = vadd.s32 %v58, 448
    %v199 = vadd.s32 %v58, 456
    %v200 = vadd.s32 %v58, 464
    %v201 = vadd.s32 %v58, 472
    %v202 = vadd.s32 %v58, 480
    %v203 = vadd.s32 %v58, 488
    %v204 = vadd.s32 %v58, 496
    %v205 = vadd.s32 %v58, 504
    %v206 = vmul.u32 %v53, 16
    %v207 = vsub.s32 %v58, %v206
    %v208 = vsub.s32 %v59, %v206
    %v209 = vsub.s32 %v60, %v206
    %v210 = vsub.s32 %v61, %v206
    %v211 = vsub.s32 %v146, %v206
    %v212 = vsub.s32 %v147, %v206
    %v213 = vsub.s32 %v148, %v206
    %v214 = vsub.s32 %v149, %v206
    %v215 = vsub.s32 %v150, %v206
    %v216 = vsub.s32 %v151, %v206
    %v217 = vsub.s32 %v152, %v206
    %v218 = vsub.s32 %v153, %v206
    %v219 = vsub.s32 %v154, %v206
    %v220 = vsub.s32 %v155, %v206
    %v221 = vsub.s32 %v156, %v206
    %v222 = vsub.s32 %v157, %v206
    %v223 = vsub.s32 %v158, %v206
    %v224 = vsub.s32 %v159, %v206
    %v225 = vsub.s32 %v160, %v206
    %v226 = vsub.s32 %v161, %v206
    %v227 = vsub.s32 %v162, %v206
    %v228 = vsub.s32 %v163, %v206
    %v229 = vsub.s32 %v164, %v206
    %v230 = vsub.s32 %v165, %v206
    %v231 = vsub.s32 %v166, %v206
    %v232 = vsub.s32 %v167, %v206
    %v233 = vsub.s32 %v168, %v206
    %v234 = vsub.s32 %v169, %v206
    %v235 = vsub.s32 %v170, %v206
    %v236 = vsub.s32 %v171, %v206
    %v237 = vsub.s32 %v172, %v206
    %v238 = vsub.s32 %v173, %v206
    %v239 = vsub.s32 %v174, %v206
    %v240 = vsub.s32 %v175, %v206
    %v241 = vsub.s32 %v176, %v206
    %v242 = vsub.s32 %v177, %v206
    %v243 = vsub.s32 %v178, %v206
    %v244 = vsub.s32 %v179, %v206
    %v245 = vsub.s32 %v180, %v206
    %v246 = vsub.s32 %v181, %v206
    %v247 = vsub.s32 %v182, %v206
    %v248 = vsub.s32 %v183, %v206
    %v249 = vsub.s32 %v184, %v206
    %v250 = vsub.s32 %v185, %v206
    %v251 = vsub.s32 %v186, %v206
    %v252 = vsub.s32 %v187, %v206
    %v253 = vsub.s32 %v188, %v206
    %v254 = vsub.s32 %v189, %v206
    %v255 = vsub.s32 %v190, %v206
    %v256 = vsub.s32 %v191, %v206
    %v257 = vsub.s32 %v192, %v206
    %v258 = vsub.s32 %v193, %v206
    %v259 = vsub.s32 %v194, %v206
    %v260 = vsub.s32 %v195, %v206
    %v261 = vsub.s32 %v196, %v206
    %v262 = vsub.s32 %v197, %v206
    %v263 = vsub.s32 %v198, %v206
    %v264 = vsub.s32 %v199, %v206
    %v265 = vsub.s32 %v200, %v206
    %v266 = vsub.s32 %v201, %v206
    %v267 = vsub.s32 %v202, %v206
    %v268 = vsub.s32 %v203, %v206
    %v269 = vsub.s32 %v204, %v206
    %v270 = vsub.s32 %v205, %v206
    %vm271 = vcmp.ge.s32.totalorder %v207, 0
    %vm272 = vcmp.ge.s32.totalorder %v208, 0
    %vm273 = vcmp.ge.s32.totalorder %v209, 0
    %vm274 = vcmp.ge.s32.totalorder %v210, 0
    %vm275 = vcmp.ge.s32.totalorder %v211, 0
    %vm276 = vcmp.ge.s32.totalorder %v212, 0
    %vm277 = vcmp.ge.s32.totalorder %v213, 0
    %vm278 = vcmp.ge.s32.totalorder %v214, 0
    %vm279 = vcmp.ge.s32.totalorder %v215, 0
    %vm280 = vcmp.ge.s32.totalorder %v216, 0
    %vm281 = vcmp.ge.s32.totalorder %v217, 0
    %vm282 = vcmp.ge.s32.totalorder %v218, 0
    %vm283 = vcmp.ge.s32.totalorder %v219, 0
    %vm284 = vcmp.ge.s32.totalorder %v220, 0
    %vm285 = vcmp.ge.s32.totalorder %v221, 0
    %vm286 = vcmp.ge.s32.totalorder %v222, 0
    %vm287 = vcmp.ge.s32.totalorder %v223, 0
    %vm288 = vcmp.ge.s32.totalorder %v224, 0
    %vm289 = vcmp.ge.s32.totalorder %v225, 0
    %vm290 = vcmp.ge.s32.totalorder %v226, 0
    %vm291 = vcmp.ge.s32.totalorder %v227, 0
    %vm292 = vcmp.ge.s32.totalorder %v228, 0
    %vm293 = vcmp.ge.s32.totalorder %v229, 0
    %vm294 = vcmp.ge.s32.totalorder %v230, 0
    %vm295 = vcmp.ge.s32.totalorder %v231, 0
    %vm296 = vcmp.ge.s32.totalorder %v232, 0
    %vm297 = vcmp.ge.s32.totalorder %v233, 0
    %vm298 = vcmp.ge.s32.totalorder %v234, 0
    %vm299 = vcmp.ge.s32.totalorder %v235, 0
    %vm300 = vcmp.ge.s32.totalorder %v236, 0
    %vm301 = vcmp.ge.s32.totalorder %v237, 0
    %vm302 = vcmp.ge.s32.totalorder %v238, 0
    %vm303 = vcmp.ge.s32.totalorder %v239, 0
    %vm304 = vcmp.ge.s32.totalorder %v240, 0
    %vm305 = vcmp.ge.s32.totalorder %v241, 0
    %vm306 = vcmp.ge.s32.totalorder %v242, 0
    %vm307 = vcmp.ge.s32.totalorder %v243, 0
    %vm308 = vcmp.ge.s32.totalorder %v244, 0
    %vm309 = vcmp.ge.s32.totalorder %v245, 0
    %vm310 = vcmp.ge.s32.totalorder %v246, 0
    %vm311 = vcmp.ge.s32.totalorder %v247, 0
    %vm312 = vcmp.ge.s32.totalorder %v248, 0
    %vm313 = vcmp.ge.s32.totalorder %v249, 0
    %vm314 = vcmp.ge.s32.totalorder %v250, 0
    %vm315 = vcmp.ge.s32.totalorder %v251, 0
    %vm316 = vcmp.ge.s32.totalorder %v252, 0
    %vm317 = vcmp.ge.s32.totalorder %v253, 0
    %vm318 = vcmp.ge.s32.totalorder %v254, 0
    %vm319 = vcmp.ge.s32.totalorder %v255, 0
    %vm320 = vcmp.ge.s32.totalorder %v256, 0
    %vm321 = vcmp.ge.s32.totalorder %v257, 0
    %vm322 = vcmp.ge.s32.totalorder %v258, 0
    %vm323 = vcmp.ge.s32.totalorder %v259, 0
    %vm324 = vcmp.ge.s32.totalorder %v260, 0
    %vm325 = vcmp.ge.s32.totalorder %v261, 0
    %vm326 = vcmp.ge.s32.totalorder %v262, 0
    %vm327 = vcmp.ge.s32.totalorder %v263, 0
    %vm328 = vcmp.ge.s32.totalorder %v264, 0
    %vm329 = vcmp.ge.s32.totalorder %v265, 0
    %vm330 = vcmp.ge.s32.totalorder %v266, 0
    %vm331 = vcmp.ge.s32.totalorder %v267, 0
    %vm332 = vcmp.ge.s32.totalorder %v268, 0
    %vm333 = vcmp.ge.s32.totalorder %v269, 0
    %vm334 = vcmp.ge.s32.totalorder %v270, 0
    %vm335 = vcmp.lt.s32.totalorder %v207, 16
    %vm336 = vcmp.lt.s32.totalorder %v208, 16
    %vm337 = vcmp.lt.s32.totalorder %v209, 16
    %vm338 = vcmp.lt.s32.totalorder %v210, 16
    %vm339 = vcmp.lt.s32.totalorder %v211, 16
    %vm340 = vcmp.lt.s32.totalorder %v212, 16
    %vm341 = vcmp.lt.s32.totalorder %v213, 16
    %vm342 = vcmp.lt.s32.totalorder %v214, 16
    %vm343 = vcmp.lt.s32.totalorder %v215, 16
    %vm344 = vcmp.lt.s32.totalorder %v216, 16
    %vm345 = vcmp.lt.s32.totalorder %v217, 16
    %vm346 = vcmp.lt.s32.totalorder %v218, 16
    %vm347 = vcmp.lt.s32.totalorder %v219, 16
    %vm348 = vcmp.lt.s32.totalorder %v220, 16
    %vm349 = vcmp.lt.s32.totalorder %v221, 16
    %vm350 = vcmp.lt.s32.totalorder %v222, 16
    %vm351 = vcmp.lt.s32.totalorder %v223, 16
    %vm352 = vcmp.lt.s32.totalorder %v224, 16
    %vm353 = vcmp.lt.s32.totalorder %v225, 16
    %vm354 = vcmp.lt.s32.totalorder %v226, 16
    %vm355 = vcmp.lt.s32.totalorder %v227, 16
    %vm356 = vcmp.lt.s32.totalorder %v228, 16
    %vm357 = vcmp.lt.s32.totalorder %v229, 16
    %vm358 = vcmp.lt.s32.totalorder %v230, 16
    %vm359 = vcmp.lt.s32.totalorder %v231, 16
    %vm360 = vcmp.lt.s32.totalorder %v232, 16
    %vm361 = vcmp.lt.s32.totalorder %v233, 16
    %vm362 = vcmp.lt.s32.totalorder %v234, 16
    %vm363 = vcmp.lt.s32.totalorder %v235, 16
    %vm364 = vcmp.lt.s32.totalorder %v236, 16
    %vm365 = vcmp.lt.s32.totalorder %v237, 16
    %vm366 = vcmp.lt.s32.totalorder %v238, 16
    %vm367 = vcmp.lt.s32.totalorder %v239, 16
    %vm368 = vcmp.lt.s32.totalorder %v240, 16
    %vm369 = vcmp.lt.s32.totalorder %v241, 16
    %vm370 = vcmp.lt.s32.totalorder %v242, 16
    %vm371 = vcmp.lt.s32.totalorder %v243, 16
    %vm372 = vcmp.lt.s32.totalorder %v244, 16
    %vm373 = vcmp.lt.s32.totalorder %v245, 16
    %vm374 = vcmp.lt.s32.totalorder %v246, 16
    %vm375 = vcmp.lt.s32.totalorder %v247, 16
    %vm376 = vcmp.lt.s32.totalorder %v248, 16
    %vm377 = vcmp.lt.s32.totalorder %v249, 16
    %vm378 = vcmp.lt.s32.totalorder %v250, 16
    %vm379 = vcmp.lt.s32.totalorder %v251, 16
    %vm380 = vcmp.lt.s32.totalorder %v252, 16
    %vm381 = vcmp.lt.s32.totalorder %v253, 16
    %vm382 = vcmp.lt.s32.totalorder %v254, 16
    %vm383 = vcmp.lt.s32.totalorder %v255, 16
    %vm384 = vcmp.lt.s32.totalorder %v256, 16
    %vm385 = vcmp.lt.s32.totalorder %v257, 16
    %vm386 = vcmp.lt.s32.totalorder %v258, 16
    %vm387 = vcmp.lt.s32.totalorder %v259, 16
    %vm388 = vcmp.lt.s32.totalorder %v260, 16
    %vm389 = vcmp.lt.s32.totalorder %v261, 16
    %vm390 = vcmp.lt.s32.totalorder %v262, 16
    %vm391 = vcmp.lt.s32.totalorder %v263, 16
    %vm392 = vcmp.lt.s32.totalorder %v264, 16
    %vm393 = vcmp.lt.s32.totalorder %v265, 16
    %vm394 = vcmp.lt.s32.totalorder %v266, 16
    %vm395 = vcmp.lt.s32.totalorder %v267, 16
    %vm396 = vcmp.lt.s32.totalorder %v268, 16
    %vm397 = vcmp.lt.s32.totalorder %v269, 16
    %vm398 = vcmp.lt.s32.totalorder %v270, 16
    %vm399 = vmand %vm271, %vm335
    %vm400 = vmand %vm272, %vm336
    %vm401 = vmand %vm273, %vm337
    %vm402 = vmand %vm274, %vm338
    %vm403 = vmand %vm275, %vm339
    %vm404 = vmand %vm276, %vm340
    %vm405 = vmand %vm277, %vm341
    %vm406 = vmand %vm278, %vm342
    %vm407 = vmand %vm279, %vm343
    %vm408 = vmand %vm280, %vm344
    %vm409 = vmand %vm281, %vm345
    %vm410 = vmand %vm282, %vm346
    %vm411 = vmand %vm283, %vm347
    %vm412 = vmand %vm284, %vm348
    %vm413 = vmand %vm285, %vm349
    %vm414 = vmand %vm286, %vm350
    %vm415 = vmand %vm287, %vm351
    %vm416 = vmand %vm288, %vm352
    %vm417 = vmand %vm289, %vm353
    %vm418 = vmand %vm290, %vm354
    %vm419 = vmand %vm291, %vm355
    %vm420 = vmand %vm292, %vm356
    %vm421 = vmand %vm293, %vm357
    %vm422 = vmand %vm294, %vm358
    %vm423 = vmand %vm295, %vm359
    %vm424 = vmand %vm296, %vm360
    %vm425 = vmand %vm297, %vm361
    %vm426 = vmand %vm298, %vm362
    %vm427 = vmand %vm299, %vm363
    %vm428 = vmand %vm300, %vm364
    %vm429 = vmand %vm301, %vm365
    %vm430 = vmand %vm302, %vm366
    %vm431 = vmand %vm303, %vm367
    %vm432 = vmand %vm304, %vm368
    %vm433 = vmand %vm305, %vm369
    %vm434 = vmand %vm306, %vm370
    %vm435 = vmand %vm307, %vm371
    %vm436 = vmand %vm308, %vm372
    %vm437 = vmand %vm309, %vm373
    %vm438 = vmand %vm310, %vm374
    %vm439 = vmand %vm311, %vm375
    %vm440 = vmand %vm312, %vm376
    %vm441 = vmand %vm313, %vm377
    %vm442 = vmand %vm314, %vm378
    %vm443 = vmand %vm315, %vm379
    %vm444 = vmand %vm316, %vm380
    %vm445 = vmand %vm317, %vm381
    %vm446 = vmand %vm318, %vm382
    %vm447 = vmand %vm319, %vm383
    %vm448 = vmand %vm320, %vm384
    %vm449 = vmand %vm321, %vm385
    %vm450 = vmand %vm322, %vm386
    %vm451 = vmand %vm323, %vm387
    %vm452 = vmand %vm324, %vm388
    %vm453 = vmand %vm325, %vm389
    %vm454 = vmand %vm326, %vm390
    %vm455 = vmand %vm327, %vm391
    %vm456 = vmand %vm328, %vm392
    %vm457 = vmand %vm329, %vm393
    %vm458 = vmand %vm330, %vm394
    %vm459 = vmand %vm331, %vm395
    %vm460 = vmand %vm332, %vm396
    %vm461 = vmand %vm333, %vm397
    %vm462 = vmand %vm334, %vm398
    %v463 = vsel %vm399, 1.0, 0.0
    %v464 = vsel %vm400, 1.0, 0.0
    %v465 = vsel %vm401, 1.0, 0.0
    %v466 = vsel %vm402, 1.0, 0.0
    %v467 = vsel %vm403, 1.0, 0.0
    %v468 = vsel %vm404, 1.0, 0.0
    %v469 = vsel %vm405, 1.0, 0.0
    %v470 = vsel %vm406, 1.0, 0.0
    %v471 = vsel %vm407, 1.0, 0.0
    %v472 = vsel %vm408, 1.0, 0.0
    %v473 = vsel %vm409, 1.0, 0.0
    %v474 = vsel %vm410, 1.0, 0.0
    %v475 = vsel %vm411, 1.0, 0.0
    %v476 = vsel %vm412, 1.0, 0.0
    %v477 = vsel %vm413, 1.0, 0.0
    %v478 = vsel %vm414, 1.0, 0.0
    %v479 = vsel %vm415, 1.0, 0.0
    %v480 = vsel %vm416, 1.0, 0.0
    %v481 = vsel %vm417, 1.0, 0.0
    %v482 = vsel %vm418, 1.0, 0.0
    %v483 = vsel %vm419, 1.0, 0.0
    %v484 = vsel %vm420, 1.0, 0.0
    %v485 = vsel %vm421, 1.0, 0.0
    %v486 = vsel %vm422, 1.0, 0.0
    %v487 = vsel %vm423, 1.0, 0.0
    %v488 = vsel %vm424, 1.0, 0.0
    %v489 = vsel %vm425, 1.0, 0.0
    %v490 = vsel %vm426, 1.0, 0.0
    %v491 = vsel %vm427, 1.0, 0.0
    %v492 = vsel %vm428, 1.0, 0.0
    %v493 = vsel %vm429, 1.0, 0.0
    %v494 = vsel %vm430, 1.0, 0.0
    %v495 = vsel %vm431, 1.0, 0.0
    %v496 = vsel %vm432, 1.0, 0.0
    %v497 = vsel %vm433, 1.0, 0.0
    %v498 = vsel %vm434, 1.0, 0.0
    %v499 = vsel %vm435, 1.0, 0.0
    %v500 = vsel %vm436, 1.0, 0.0
    %v501 = vsel %vm437, 1.0, 0.0
    %v502 = vsel %vm438, 1.0, 0.0
    %v503 = vsel %vm439, 1.0, 0.0
    %v504 = vsel %vm440, 1.0, 0.0
    %v505 = vsel %vm441, 1.0, 0.0
    %v506 = vsel %vm442, 1.0, 0.0
    %v507 = vsel %vm443, 1.0, 0.0
    %v508 = vsel %vm444, 1.0, 0.0
    %v509 = vsel %vm445, 1.0, 0.0
    %v510 = vsel %vm446, 1.0, 0.0
    %v511 = vsel %vm447, 1.0, 0.0
    %v512 = vsel %vm448, 1.0, 0.0
    %v513 = vsel %vm449, 1.0, 0.0
    %v514 = vsel %vm450, 1.0, 0.0
    %v515 = vsel %vm451, 1.0, 0.0
    %v516 = vsel %vm452, 1.0, 0.0
    %v517 = vsel %vm453, 1.0, 0.0
    %v518 = vsel %vm454, 1.0, 0.0
    %v519 = vsel %vm455, 1.0, 0.0
    %v520 = vsel %vm456, 1.0, 0.0
    %v521 = vsel %vm457, 1.0, 0.0
    %v522 = vsel %vm458, 1.0, 0.0
    %v523 = vsel %vm459, 1.0, 0.0
    %v524 = vsel %vm460, 1.0, 0.0
    %v525 = vsel %vm461, 1.0, 0.0
    %v526 = vsel %vm462, 1.0, 0.0
    %vm527 = vcmask 261120
    %v529 = vsel %vm527, %v33, 0
    %531 = vmatprep.subr.mxu0 %v131
    %532 = vmatpush1.msra.mxu0 %v130
    %533 = vmatprep.subr.mxu0 %v135
    %534 = vmatpush1.msra.mxu0 %v134
    %535 = vmatprep.subr.mxu0 %v139
    %536 = vmatpush1.msra.mxu0 %v138
    %537 = vmatprep.subr.mxu0 %v143
    %538 = vmatpush1.msra.mxu0 %v142
    %539 = vmatprep.subr.mxu0 0.0
    %540 = vmatpush1.msra.mxu0 0.0
    %541 = vmatprep.subr.mxu0 0.0
    %542 = vmatpush1.msra.mxu0 0.0
    %543 = vmatprep.subr.mxu0 0.0
    %544 = vmatpush1.msra.mxu0 0.0
    %545 = vmatprep.subr.mxu0 0.0
    %546 = vmatpush1.msra.mxu0 0.0
    %547 = vmatprep.subr.mxu0 0.0
    %548 = vmatpush1.msra.mxu0 0.0
    %549 = vmatprep.subr.mxu0 0.0
    %550 = vmatpush1.msra.mxu0 0.0
    %551 = vmatprep.subr.mxu0 0.0
    %552 = vmatpush1.msra.mxu0 0.0
    %553 = vmatprep.subr.mxu0 0.0
    %554 = vmatpush1.msra.mxu0 0.0
    %555 = vmatprep.subr.mxu0 0.0
    %556 = vmatpush1.msra.mxu0 0.0
    %557 = vmatprep.subr.mxu0 0.0
    %558 = vmatpush1.msra.mxu0 0.0
    %559 = vmatprep.subr.mxu0 0.0
    %560 = vmatpush1.msra.mxu0 0.0
    %561 = vmatprep.subr.mxu0 0.0
    %562 = vmatpush1.msra.mxu0 0.0
    %563 = vmatprep.subr.mxu0 0.0
    %564 = vmatpush1.msra.mxu0 0.0
    %565 = vmatprep.subr.mxu0 0.0
    %566 = vmatpush1.msra.mxu0 0.0
    %567 = vmatprep.subr.mxu0 0.0
    %568 = vmatpush1.msra.mxu0 0.0
    %569 = vmatprep.subr.mxu0 0.0
    %570 = vmatpush1.msra.mxu0 0.0
    %571 = vmatprep.subr.mxu0 0.0
    %572 = vmatpush1.msra.mxu0 0.0
    %573 = vmatprep.subr.mxu0 0.0
    %574 = vmatpush1.msra.mxu0 0.0
    %575 = vmatprep.subr.mxu0 0.0
    %576 = vmatpush1.msra.mxu0 0.0
    %577 = vmatprep.subr.mxu0 0.0
    %578 = vmatpush1.msra.mxu0 0.0
    %579 = vmatprep.subr.mxu0 0.0
    %580 = vmatpush1.msra.mxu0 0.0
    %581 = vmatprep.subr.mxu0 0.0
    %582 = vmatpush1.msra.mxu0 0.0
    %583 = vmatprep.subr.mxu0 0.0
    %584 = vmatpush1.msra.mxu0 0.0
    %585 = vmatprep.subr.mxu0 0.0
    %586 = vmatpush1.msra.mxu0 0.0
    %587 = vmatprep.subr.mxu0 0.0
    %588 = vmatpush1.msra.mxu0 0.0
    %589 = vmatprep.subr.mxu0 0.0
    %590 = vmatpush1.msra.mxu0 0.0
    %591 = vmatprep.subr.mxu0 0.0
    %592 = vmatpush1.msra.mxu0 0.0
    %593 = vmatprep.subr.mxu0 0.0
    %594 = vmatpush1.msra.mxu0 0.0
    %595 = vmatprep.mubr.f32.mxu0 0.0
    %596 = vmatmul.mubr.f32.gmra.mrb[0].mxu0 %v529
    %v597 = vpop.f32.mrb[0].mxu0
    %v598 = vadd.f32 0.0, %v597
    %v599 = vpop.f32.mrb[0].mxu0
    %v600 = vadd.f32 0.0, %v599
    %601 = vdwg.mxu0
    %602 = vmatprep.subr.mxu0 %v133
    %603 = vmatpush1.msra.mxu0 %v132
    %604 = vmatprep.subr.mxu0 %v137
    %605 = vmatpush1.msra.mxu0 %v136
    %606 = vmatprep.subr.mxu0 %v141
    %607 = vmatpush1.msra.mxu0 %v140
    %608 = vmatprep.subr.mxu0 %v145
    %609 = vmatpush1.msra.mxu0 %v144
    %610 = vmatprep.subr.mxu0 0.0
    %611 = vmatpush1.msra.mxu0 0.0
    %612 = vmatprep.subr.mxu0 0.0
    %613 = vmatpush1.msra.mxu0 0.0
    %614 = vmatprep.subr.mxu0 0.0
    %615 = vmatpush1.msra.mxu0 0.0
    %616 = vmatprep.subr.mxu0 0.0
    %617 = vmatpush1.msra.mxu0 0.0
    %618 = vmatprep.subr.mxu0 0.0
    %619 = vmatpush1.msra.mxu0 0.0
    %620 = vmatprep.subr.mxu0 0.0
    %621 = vmatpush1.msra.mxu0 0.0
    %622 = vmatprep.subr.mxu0 0.0
    %623 = vmatpush1.msra.mxu0 0.0
    %624 = vmatprep.subr.mxu0 0.0
    %625 = vmatpush1.msra.mxu0 0.0
    %626 = vmatprep.subr.mxu0 0.0
    %627 = vmatpush1.msra.mxu0 0.0
    %628 = vmatprep.subr.mxu0 0.0
    %629 = vmatpush1.msra.mxu0 0.0
    %630 = vmatprep.subr.mxu0 0.0
    %631 = vmatpush1.msra.mxu0 0.0
    %632 = vmatprep.subr.mxu0 0.0
    %633 = vmatpush1.msra.mxu0 0.0
    %634 = vmatprep.subr.mxu0 0.0
    %635 = vmatpush1.msra.mxu0 0.0
    %636 = vmatprep.subr.mxu0 0.0
    %637 = vmatpush1.msra.mxu0 0.0
    %638 = vmatprep.subr.mxu0 0.0
    %639 = vmatpush1.msra.mxu0 0.0
    %640 = vmatprep.subr.mxu0 0.0
    %641 = vmatpush1.msra.mxu0 0.0
    %642 = vmatprep.subr.mxu0 0.0
    %643 = vmatpush1.msra.mxu0 0.0
    %644 = vmatprep.subr.mxu0 0.0
    %645 = vmatpush1.msra.mxu0 0.0
    %646 = vmatprep.subr.mxu0 0.0
    %647 = vmatpush1.msra.mxu0 0.0
    %648 = vmatprep.subr.mxu0 0.0
    %649 = vmatpush1.msra.mxu0 0.0
    %650 = vmatprep.subr.mxu0 0.0
    %651 = vmatpush1.msra.mxu0 0.0
    %652 = vmatprep.subr.mxu0 0.0
    %653 = vmatpush1.msra.mxu0 0.0
    %654 = vmatprep.subr.mxu0 0.0
    %655 = vmatpush1.msra.mxu0 0.0
    %656 = vmatprep.subr.mxu0 0.0
    %657 = vmatpush1.msra.mxu0 0.0
    %658 = vmatprep.subr.mxu0 0.0
    %659 = vmatpush1.msra.mxu0 0.0
    %660 = vmatprep.subr.mxu0 0.0
    %661 = vmatpush1.msra.mxu0 0.0
    %662 = vmatprep.subr.mxu0 0.0
    %663 = vmatpush1.msra.mxu0 0.0
    %664 = vmatprep.subr.mxu0 0.0
    %665 = vmatpush1.msra.mxu0 0.0
    %666 = vmatprep.mubr.f32.mxu0 0.0
    %667 = vmatmul.mubr.f32.gmra.mrb[0].mxu0 %v529
    %v668 = vpop.f32.mrb[0].mxu0
    %v669 = vadd.f32 0.0, %v668
    %v670 = vpop.f32.mrb[0].mxu0
    %v671 = vadd.f32 0.0, %v670
    %672 = vdwg.mxu0
    %673 = vmatprep.subr.mxu0 %v37
    %674 = vmatpush1.msra.mxu0 %v36
    %675 = vmatprep.subr.mxu0 %v41
    %676 = vmatpush1.msra.mxu0 %v40
    %677 = vmatprep.subr.mxu0 %v45
    %678 = vmatpush1.msra.mxu0 %v44
    %679 = vmatprep.subr.mxu0 %v49
    %680 = vmatpush1.msra.mxu0 %v48
    %681 = vmatprep.subr.mxu0 0.0
    %682 = vmatpush1.msra.mxu0 0.0
    %683 = vmatprep.subr.mxu0 0.0
    %684 = vmatpush1.msra.mxu0 0.0
    %685 = vmatprep.subr.mxu0 0.0
    %686 = vmatpush1.msra.mxu0 0.0
    %687 = vmatprep.subr.mxu0 0.0
    %688 = vmatpush1.msra.mxu0 0.0
    %689 = vmatprep.subr.mxu0 0.0
    %690 = vmatpush1.msra.mxu0 0.0
    %691 = vmatprep.subr.mxu0 0.0
    %692 = vmatpush1.msra.mxu0 0.0
    %693 = vmatprep.subr.mxu0 0.0
    %694 = vmatpush1.msra.mxu0 0.0
    %695 = vmatprep.subr.mxu0 0.0
    %696 = vmatpush1.msra.mxu0 0.0
    %697 = vmatprep.subr.mxu0 0.0
    %698 = vmatpush1.msra.mxu0 0.0
    %699 = vmatprep.subr.mxu0 0.0
    %700 = vmatpush1.msra.mxu0 0.0
    %701 = vmatprep.subr.mxu0 0.0
    %702 = vmatpush1.msra.mxu0 0.0
    %703 = vmatprep.subr.mxu0 0.0
    %704 = vmatpush1.msra.mxu0 0.0
    %705 = vmatprep.subr.mxu0 0.0
    %706 = vmatpush1.msra.mxu0 0.0
    %707 = vmatprep.subr.mxu0 0.0
    %708 = vmatpush1.msra.mxu0 0.0
    %709 = vmatprep.subr.mxu0 0.0
    %710 = vmatpush1.msra.mxu0 0.0
    %711 = vmatprep.subr.mxu0 0.0
    %712 = vmatpush1.msra.mxu0 0.0
    %713 = vmatprep.subr.mxu0 0.0
    %714 = vmatpush1.msra.mxu0 0.0
    %715 = vmatprep.subr.mxu0 0.0
    %716 = vmatpush1.msra.mxu0 0.0
    %717 = vmatprep.subr.mxu0 0.0
    %718 = vmatpush1.msra.mxu0 0.0
    %719 = vmatprep.subr.mxu0 0.0
    %720 = vmatpush1.msra.mxu0 0.0
    %721 = vmatprep.subr.mxu0 0.0
    %722 = vmatpush1.msra.mxu0 0.0
    %723 = vmatprep.subr.mxu0 0.0
    %724 = vmatpush1.msra.mxu0 0.0
    %725 = vmatprep.subr.mxu0 0.0
    %726 = vmatpush1.msra.mxu0 0.0
    %727 = vmatprep.subr.mxu0 0.0
    %728 = vmatpush1.msra.mxu0 0.0
    %729 = vmatprep.subr.mxu0 0.0
    %730 = vmatpush1.msra.mxu0 0.0
    %731 = vmatprep.subr.mxu0 0.0
    %732 = vmatpush1.msra.mxu0 0.0
    %733 = vmatprep.subr.mxu0 0.0
    %734 = vmatpush1.msra.mxu0 0.0
    %735 = vmatprep.subr.mxu0 0.0
    %736 = vmatpush1.msra.mxu0 0.0
    %737 = vmatprep.mubr.f32.mxu0 0.0
    %738 = vmatmul.mubr.f32.gmra.mrb[0].mxu0 %v529
    %v739 = vpop.f32.mrb[0].mxu0
    %v740 = vadd.f32 0.0, %v739
    %v741 = vpop.f32.mrb[0].mxu0
    %v742 = vadd.f32 0.0, %v741
    %743 = vdwg.mxu0
    %744 = vmatprep.subr.mxu0 %v39
    %745 = vmatpush1.msra.mxu0 %v38
    %746 = vmatprep.subr.mxu0 %v43
    %747 = vmatpush1.msra.mxu0 %v42
    %748 = vmatprep.subr.mxu0 %v47
    %749 = vmatpush1.msra.mxu0 %v46
    %750 = vmatprep.subr.mxu0 %v51
    %751 = vmatpush1.msra.mxu0 %v50
    %752 = vmatprep.subr.mxu0 0.0
    %753 = vmatpush1.msra.mxu0 0.0
    %754 = vmatprep.subr.mxu0 0.0
    %755 = vmatpush1.msra.mxu0 0.0
    %756 = vmatprep.subr.mxu0 0.0
    %757 = vmatpush1.msra.mxu0 0.0
    %758 = vmatprep.subr.mxu0 0.0
    %759 = vmatpush1.msra.mxu0 0.0
    %760 = vmatprep.subr.mxu0 0.0
    %761 = vmatpush1.msra.mxu0 0.0
    %762 = vmatprep.subr.mxu0 0.0
    %763 = vmatpush1.msra.mxu0 0.0
    %764 = vmatprep.subr.mxu0 0.0
    %765 = vmatpush1.msra.mxu0 0.0
    %766 = vmatprep.subr.mxu0 0.0
    %767 = vmatpush1.msra.mxu0 0.0
    %768 = vmatprep.subr.mxu0 0.0
    %769 = vmatpush1.msra.mxu0 0.0
    %770 = vmatprep.subr.mxu0 0.0
    %771 = vmatpush1.msra.mxu0 0.0
    %772 = vmatprep.subr.mxu0 0.0
    %773 = vmatpush1.msra.mxu0 0.0
    %774 = vmatprep.subr.mxu0 0.0
    %775 = vmatpush1.msra.mxu0 0.0
    %776 = vmatprep.subr.mxu0 0.0
    %777 = vmatpush1.msra.mxu0 0.0
    %778 = vmatprep.subr.mxu0 0.0
    %779 = vmatpush1.msra.mxu0 0.0
    %780 = vmatprep.subr.mxu0 0.0
    %781 = vmatpush1.msra.mxu0 0.0
    %782 = vmatprep.subr.mxu0 0.0
    %783 = vmatpush1.msra.mxu0 0.0
    %784 = vmatprep.subr.mxu0 0.0
    %785 = vmatpush1.msra.mxu0 0.0
    %786 = vmatprep.subr.mxu0 0.0
    %787 = vmatpush1.msra.mxu0 0.0
    %788 = vmatprep.subr.mxu0 0.0
    %789 = vmatpush1.msra.mxu0 0.0
    %790 = vmatprep.subr.mxu0 0.0
    %791 = vmatpush1.msra.mxu0 0.0
    %792 = vmatprep.subr.mxu0 0.0
    %793 = vmatpush1.msra.mxu0 0.0
    %794 = vmatprep.subr.mxu0 0.0
    %795 = vmatpush1.msra.mxu0 0.0
    %796 = vmatprep.subr.mxu0 0.0
    %797 = vmatpush1.msra.mxu0 0.0
    %798 = vmatprep.subr.mxu0 0.0
    %799 = vmatpush1.msra.mxu0 0.0
    %800 = vmatprep.subr.mxu0 0.0
    %801 = vmatpush1.msra.mxu0 0.0
    %802 = vmatprep.subr.mxu0 0.0
    %803 = vmatpush1.msra.mxu0 0.0
    %804 = vmatprep.subr.mxu0 0.0
    %805 = vmatpush1.msra.mxu0 0.0
    %806 = vmatprep.subr.mxu0 0.0
    %807 = vmatpush1.msra.mxu0 0.0
    %808 = vmatprep.mubr.f32.mxu0 0.0
    %809 = vmatmul.mubr.f32.gmra.mrb[0].mxu0 %v529
    %v810 = vpop.f32.mrb[0].mxu0
    %v811 = vadd.f32 0.0, %v810
    %v812 = vpop.f32.mrb[0].mxu0
    %v813 = vadd.f32 0.0, %v812
    %814 = vdwg.mxu0
    %v815 = vsub.f32 %v598, %v740
    %v816 = vsub.f32 %v600, %v742
    %v817 = vsub.f32 %v669, %v811
    %v818 = vsub.f32 %v671, %v813
    %v819 = vmul.f32 %v815, %v815
    %v820 = vmul.f32 %v816, %v816
    %v821 = vmul.f32 %v817, %v817
    %v822 = vmul.f32 %v818, %v818
    %vm823 = vcmask 1042432
    %v824 = vsel %vm823, %v819, 0.0
    %v825 = vrot.slane %v824, 4
    %v826 = vadd.f32 %v824, %v825
    %v827 = vrot.slane %v826, 2
    %v828 = vadd.f32 %v826, %v827
    %v829 = vrot.slane %v828, 1
    %v830 = vadd.f32 %v828, %v829
    %v831 = vsel %vm823, %v820, 0.0
    %v832 = vrot.slane %v831, 4
    %v833 = vadd.f32 %v831, %v832
    %v834 = vrot.slane %v833, 2
    %v835 = vadd.f32 %v833, %v834
    %v836 = vrot.slane %v835, 1
    %v837 = vadd.f32 %v835, %v836
    %v838 = vsel %vm823, %v821, 0.0
    %v839 = vrot.slane %v838, 4
    %v840 = vadd.f32 %v838, %v839
    %v841 = vrot.slane %v840, 2
    %v842 = vadd.f32 %v840, %v841
    %v843 = vrot.slane %v842, 1
    %v844 = vadd.f32 %v842, %v843
    %v845 = vsel %vm823, %v822, 0.0
    %v846 = vrot.slane %v845, 4
    %v847 = vadd.f32 %v845, %v846
    %v848 = vrot.slane %v847, 2
    %v849 = vadd.f32 %v847, %v848
    %v850 = vrot.slane %v849, 1
    %v851 = vadd.f32 %v849, %v850
    %v852 = vmul.f32 %v598, %v740
    %v853 = vmul.f32 %v600, %v742
    %v854 = vmul.f32 %v669, %v811
    %v855 = vmul.f32 %v671, %v813
    %vm856 = vcmp.le.f32.partialorder %v830, 0.0
    %vm857 = vcmp.le.f32.partialorder %v837, 0.0
    %vm858 = vcmp.le.f32.partialorder %v844, 0.0
    %vm859 = vcmp.le.f32.partialorder %v851, 0.0
    %v860 = vsel %vm856, 1.0, 0.0
    %v861 = vsel %vm857, 1.0, 0.0
    %v862 = vsel %vm858, 1.0, 0.0
    %v863 = vsel %vm859, 1.0, 0.0
    %v868 = vcombine.low %v860, %v861
    %v869 = vcombine.low %v862, %v863
    %v871 = vunpack.c.l.s4 1966171168
    %v872 = vunpack.c.0.s8 %v871
    %v873 = vlaneseq
    %v874 = vshrl.u32 %v873, 7
    %v875 = vsub.s32 %v872, %v874
    %v876 = vrot.slane %v868, %v875
    %v878 = vunpack.c.l.s4 1966171168
    %v879 = vunpack.c.0.s8 %v878
    %v880 = vlaneseq
    %v881 = vshrl.u32 %v880, 7
    %v882 = vsub.s32 %v879, %v881
    %v883 = vrot.slane %v869, %v882
    %v884 = vcombine.low %v876, %v883
    %v886 = vunpack.c.l.s4 1966171168
    %v887 = vunpack.c.0.s8 %v886
    %v888 = vlaneseq
    %v889 = vshrl.u32 %v888, 7
    %v890 = vsub.s32 %v887, %v889
    %v891 = vrot.slane %v884, %v890
    %v893 = vmax.f32 %v35, %v891
    %v895 = vlaneseq
    %v896 = vshrl.u32 %v895, 7
    %v897 = vsub.s32 0, %v896
    %v898 = vrot.slane %v893, %v897
    %v899 = vlaneseq
    %v900 = vshrl.u32 %v899, 7
    %v901 = vsub.s32 1, %v900
    %v902 = vrot.slane %v893, %v901
    %v903 = vlaneseq
    %v904 = vshrl.u32 %v903, 7
    %v905 = vsub.s32 2, %v904
    %v906 = vrot.slane %v893, %v905
    %v907 = vlaneseq
    %v908 = vshrl.u32 %v907, 7
    %v909 = vsub.s32 3, %v908
    %v910 = vrot.slane %v893, %v909
    %v915 = vmul.f32 %v852, %v898
    %v916 = vmul.f32 %v853, %v902
    %v917 = vmul.f32 %v854, %v906
    %v918 = vmul.f32 %v855, %v910
    %v919 = vld [vmem:[#allocation2] sm:$0xff]
    %v920 = vld [vmem:[#allocation2 + $0x8] sm:$0xff]
    %v921 = vld [vmem:[#allocation2 + $0x10] sm:$0xff]
    %v922 = vld [vmem:[#allocation2 + $0x18] sm:$0xff]
    %924 = vset.pattern.permute.xlu0 8
    %925 = vperm.xlu0 %924, %v919
    %v926 = vpop.permute.xlu0 %925
    %929 = vset.pattern.permute.xlu0 8
    %930 = vperm.xlu0 %929, %v920
    %v931 = vpop.permute.xlu0 %930
    %934 = vset.pattern.permute.xlu0 8
    %935 = vperm.xlu0 %934, %v921
    %v936 = vpop.permute.xlu0 %935
    %939 = vset.pattern.permute.xlu0 8
    %940 = vperm.xlu0 %939, %v922
    %v941 = vpop.permute.xlu0 %940
    %vm943 = vcmask 64512
    %v944 = vsel %vm943, %v919, 0
    %v946 = vsel %vm943, %v920, 0
    %v948 = vsel %vm943, %v921, 0
    %v950 = vsel %vm943, %v922, 0
    %952 = vmatprep.subr.mxu0 0.0
    %953 = vmatpush1.msra.mxu0 %v32
    %954 = vmatprep.subr.mxu0 0.0
    %955 = vmatpush1.msra.mxu0 0.0
    %956 = vmatprep.subr.mxu0 0.0
    %957 = vmatpush1.msra.mxu0 0.0
    %958 = vmatprep.subr.mxu0 0.0
    %959 = vmatpush1.msra.mxu0 0.0
    %960 = vmatprep.subr.mxu0 0.0
    %961 = vmatpush1.msra.mxu0 0.0
    %962 = vmatprep.subr.mxu0 0.0
    %963 = vmatpush1.msra.mxu0 0.0
    %964 = vmatprep.subr.mxu0 0.0
    %965 = vmatpush1.msra.mxu0 0.0
    %966 = vmatprep.subr.mxu0 0.0
    %967 = vmatpush1.msra.mxu0 0.0
    %968 = vmatprep.subr.mxu0 0.0
    %969 = vmatpush1.msra.mxu0 0.0
    %970 = vmatprep.subr.mxu0 0.0
    %971 = vmatpush1.msra.mxu0 0.0
    %972 = vmatprep.subr.mxu0 0.0
    %973 = vmatpush1.msra.mxu0 0.0
    %974 = vmatprep.subr.mxu0 0.0
    %975 = vmatpush1.msra.mxu0 0.0
    %976 = vmatprep.subr.mxu0 0.0
    %977 = vmatpush1.msra.mxu0 0.0
    %978 = vmatprep.subr.mxu0 0.0
    %979 = vmatpush1.msra.mxu0 0.0
    %980 = vmatprep.subr.mxu0 0.0
    %981 = vmatpush1.msra.mxu0 0.0
    %982 = vmatprep.subr.mxu0 0.0
    %983 = vmatpush1.msra.mxu0 0.0
    %984 = vmatprep.subr.mxu0 0.0
    %985 = vmatpush1.msra.mxu0 0.0
    %986 = vmatprep.subr.mxu0 0.0
    %987 = vmatpush1.msra.mxu0 0.0
    %988 = vmatprep.subr.mxu0 0.0
    %989 = vmatpush1.msra.mxu0 0.0
    %990 = vmatprep.subr.mxu0 0.0
    %991 = vmatpush1.msra.mxu0 0.0
    %992 = vmatprep.subr.mxu0 0.0
    %993 = vmatpush1.msra.mxu0 0.0
    %994 = vmatprep.subr.mxu0 0.0
    %995 = vmatpush1.msra.mxu0 0.0
    %996 = vmatprep.subr.mxu0 0.0
    %997 = vmatpush1.msra.mxu0 0.0
    %998 = vmatprep.subr.mxu0 0.0
    %999 = vmatpush1.msra.mxu0 0.0
    %1000 = vmatprep.subr.mxu0 0.0
    %1001 = vmatpush1.msra.mxu0 0.0
    %1002 = vmatprep.subr.mxu0 0.0
    %1003 = vmatpush1.msra.mxu0 0.0
    %1004 = vmatprep.subr.mxu0 0.0
    %1005 = vmatpush1.msra.mxu0 0.0
    %1006 = vmatprep.subr.mxu0 0.0
    %1007 = vmatpush1.msra.mxu0 0.0
    %1008 = vmatprep.subr.mxu0 0.0
    %1009 = vmatpush1.msra.mxu0 0.0
    %1010 = vmatprep.subr.mxu0 0.0
    %1011 = vmatpush1.msra.mxu0 0.0
    %1012 = vmatprep.subr.mxu0 0.0
    %1013 = vmatpush1.msra.mxu0 0.0
    %1014 = vmatprep.subr.mxu0 0.0
    %1015 = vmatpush1.msra.mxu0 0.0
    %1016 = vmatprep.mubr.f32.mxu0 0.0
    %1017 = vmatmul.mubr.f32.gmra.mrb[0].mxu0 %v944
    %v1018 = vpop.f32.mrb[0].mxu0
    %v1019 = vadd.f32 %v926, %v1018
    %v1020 = vpop.f32.mrb[0].mxu0
    %1021 = vmatprep.mubr.f32.mxu0 0.0
    %1022 = vmatmul.mubr.f32.gmra.mrb[0].mxu0 %v946
    %v1023 = vpop.f32.mrb[0].mxu0
    %v1024 = vadd.f32 %v931, %v1023
    %v1025 = vpop.f32.mrb[0].mxu0
    %1026 = vmatprep.mubr.f32.mxu0 0.0
    %1027 = vmatmul.mubr.f32.gmra.mrb[0].mxu0 %v948
    %v1028 = vpop.f32.mrb[0].mxu0
    %v1029 = vadd.f32 %v936, %v1028
    %v1030 = vpop.f32.mrb[0].mxu0
    %1031 = vmatprep.mubr.f32.mxu0 0.0
    %1032 = vmatmul.mubr.f32.gmra.mrb[0].mxu0 %v950
    %v1033 = vpop.f32.mrb[0].mxu0
    %v1034 = vadd.f32 %v941, %v1033
    %v1035 = vpop.f32.mrb[0].mxu0
    %1036 = vdwg.mxu0
    %v1037 = vld [vmem:[#allocation2 + $0x20] sm:$0xff]
    %v1038 = vld [vmem:[#allocation2 + $0x28] sm:$0xff]
    %v1039 = vld [vmem:[#allocation2 + $0x30] sm:$0xff]
    %v1040 = vld [vmem:[#allocation2 + $0x38] sm:$0xff]
    %v1042 = vsel %vm527, %v1037, 0
    %v1045 = vsel %vm527, %v1038, 0
    %v1048 = vsel %vm527, %v1039, 0
    %v1051 = vsel %vm527, %v1040, 0
    %1053 = vmatprep.subr.mxu0 0.0
    %1054 = vmatpush1.msra.mxu0 %v1019
    %1055 = vmatprep.subr.mxu0 0.0
    %1056 = vmatpush1.msra.mxu0 %v1024
    %1057 = vmatprep.subr.mxu0 0.0
    %1058 = vmatpush1.msra.mxu0 %v1029
    %1059 = vmatprep.subr.mxu0 0.0
    %1060 = vmatpush1.msra.mxu0 %v1034
    %1061 = vmatprep.subr.mxu0 0.0
    %1062 = vmatpush1.msra.mxu0 0.0
    %1063 = vmatprep.subr.mxu0 0.0
    %1064 = vmatpush1.msra.mxu0 0.0
    %1065 = vmatprep.subr.mxu0 0.0
    %1066 = vmatpush1.msra.mxu0 0.0
    %1067 = vmatprep.subr.mxu0 0.0
    %1068 = vmatpush1.msra.mxu0 0.0
    %1069 = vmatprep.subr.mxu0 0.0
    %1070 = vmatpush1.msra.mxu0 0.0
    %1071 = vmatprep.subr.mxu0 0.0
    %1072 = vmatpush1.msra.mxu0 0.0
    %1073 = vmatprep.subr.mxu0 0.0
    %1074 = vmatpush1.msra.mxu0 0.0
    %1075 = vmatprep.subr.mxu0 0.0
    %1076 = vmatpush1.msra.mxu0 0.0
    %1077 = vmatprep.subr.mxu0 0.0
    %1078 = vmatpush1.msra.mxu0 0.0
    %1079 = vmatprep.subr.mxu0 0.0
    %1080 = vmatpush1.msra.mxu0 0.0
    %1081 = vmatprep.subr.mxu0 0.0
    %1082 = vmatpush1.msra.mxu0 0.0
    %1083 = vmatprep.subr.mxu0 0.0
    %1084 = vmatpush1.msra.mxu0 0.0
    %1085 = vmatprep.subr.mxu0 0.0
    %1086 = vmatpush1.msra.mxu0 0.0
    %1087 = vmatprep.subr.mxu0 0.0
    %1088 = vmatpush1.msra.mxu0 0.0
    %1089 = vmatprep.subr.mxu0 0.0
    %1090 = vmatpush1.msra.mxu0 0.0
    %1091 = vmatprep.subr.mxu0 0.0
    %1092 = vmatpush1.msra.mxu0 0.0
    %1093 = vmatprep.subr.mxu0 0.0
    %1094 = vmatpush1.msra.mxu0 0.0
    %1095 = vmatprep.subr.mxu0 0.0
    %1096 = vmatpush1.msra.mxu0 0.0
    %1097 = vmatprep.subr.mxu0 0.0
    %1098 = vmatpush1.msra.mxu0 0.0
    %1099 = vmatprep.subr.mxu0 0.0
    %1100 = vmatpush1.msra.mxu0 0.0
    %1101 = vmatprep.subr.mxu0 0.0
    %1102 = vmatpush1.msra.mxu0 0.0
    %1103 = vmatprep.subr.mxu0 0.0
    %1104 = vmatpush1.msra.mxu0 0.0
    %1105 = vmatprep.subr.mxu0 0.0
    %1106 = vmatpush1.msra.mxu0 0.0
    %1107 = vmatprep.subr.mxu0 0.0
    %1108 = vmatpush1.msra.mxu0 0.0
    %1109 = vmatprep.subr.mxu0 0.0
    %1110 = vmatpush1.msra.mxu0 0.0
    %1111 = vmatprep.subr.mxu0 0.0
    %1112 = vmatpush1.msra.mxu0 0.0
    %1113 = vmatprep.subr.mxu0 0.0
    %1114 = vmatpush1.msra.mxu0 0.0
    %1115 = vmatprep.subr.mxu0 0.0
    %1116 = vmatpush1.msra.mxu0 0.0
    %1117 = vmatprep.mubr.f32.mxu0 0.0
    %1118 = vmatmul.mubr.f32.gmra.mrb[0].mxu0 %v1042
    %v1119 = vpop.f32.mrb[0].mxu0
    %v1120 = vadd.f32 0.0, %v1119
    %v1121 = vpop.f32.mrb[0].mxu0
    %1122 = vmatprep.mubr.f32.mxu0 0.0
    %1123 = vmatmul.mubr.f32.gmra.mrb[0].mxu0 %v1045
    %v1124 = vpop.f32.mrb[0].mxu0
    %v1125 = vadd.f32 0.0, %v1124
    %v1126 = vpop.f32.mrb[0].mxu0
    %1127 = vmatprep.mubr.f32.mxu0 0.0
    %1128 = vmatmul.mubr.f32.gmra.mrb[0].mxu0 %v1048
    %v1129 = vpop.f32.mrb[0].mxu0
    %v1130 = vadd.f32 0.0, %v1129
    %v1131 = vpop.f32.mrb[0].mxu0
    %1132 = vmatprep.mubr.f32.mxu0 0.0
    %1133 = vmatmul.mubr.f32.gmra.mrb[0].mxu0 %v1051
    %v1134 = vpop.f32.mrb[0].mxu0
    %v1135 = vadd.f32 0.0, %v1134
    %v1136 = vpop.f32.mrb[0].mxu0
    %1137 = vdwg.mxu0
    %v1139 = vsel %vm527, %v1130, 0
    %v1142 = vsel %vm527, %v1135, 0
    %1144 = vmatprep.subr.mxu0 %v37
    %1145 = vmatpush1.msra.mxu0 %v36
    %1146 = vmatprep.subr.mxu0 %v41
    %1147 = vmatpush1.msra.mxu0 %v40
    %1148 = vmatprep.subr.mxu0 %v45
    %1149 = vmatpush1.msra.mxu0 %v44
    %1150 = vmatprep.subr.mxu0 %v49
    %1151 = vmatpush1.msra.mxu0 %v48
    %1152 = vmatprep.subr.mxu0 0.0
    %1153 = vmatpush1.msra.mxu0 0.0
    %1154 = vmatprep.subr.mxu0 0.0
    %1155 = vmatpush1.msra.mxu0 0.0
    %1156 = vmatprep.subr.mxu0 0.0
    %1157 = vmatpush1.msra.mxu0 0.0
    %1158 = vmatprep.subr.mxu0 0.0
    %1159 = vmatpush1.msra.mxu0 0.0
    %1160 = vmatprep.subr.mxu0 0.0
    %1161 = vmatpush1.msra.mxu0 0.0
    %1162 = vmatprep.subr.mxu0 0.0
    %1163 = vmatpush1.msra.mxu0 0.0
    %1164 = vmatprep.subr.mxu0 0.0
    %1165 = vmatpush1.msra.mxu0 0.0
    %1166 = vmatprep.subr.mxu0 0.0
    %1167 = vmatpush1.msra.mxu0 0.0
    %1168 = vmatprep.subr.mxu0 0.0
    %1169 = vmatpush1.msra.mxu0 0.0
    %1170 = vmatprep.subr.mxu0 0.0
    %1171 = vmatpush1.msra.mxu0 0.0
    %1172 = vmatprep.subr.mxu0 0.0
    %1173 = vmatpush1.msra.mxu0 0.0
    %1174 = vmatprep.subr.mxu0 0.0
    %1175 = vmatpush1.msra.mxu0 0.0
    %1176 = vmatprep.subr.mxu0 0.0
    %1177 = vmatpush1.msra.mxu0 0.0
    %1178 = vmatprep.subr.mxu0 0.0
    %1179 = vmatpush1.msra.mxu0 0.0
    %1180 = vmatprep.subr.mxu0 0.0
    %1181 = vmatpush1.msra.mxu0 0.0
    %1182 = vmatprep.subr.mxu0 0.0
    %1183 = vmatpush1.msra.mxu0 0.0
    %1184 = vmatprep.subr.mxu0 0.0
    %1185 = vmatpush1.msra.mxu0 0.0
    %1186 = vmatprep.subr.mxu0 0.0
    %1187 = vmatpush1.msra.mxu0 0.0
    %1188 = vmatprep.subr.mxu0 0.0
    %1189 = vmatpush1.msra.mxu0 0.0
    %1190 = vmatprep.subr.mxu0 0.0
    %1191 = vmatpush1.msra.mxu0 0.0
    %1192 = vmatprep.subr.mxu0 0.0
    %1193 = vmatpush1.msra.mxu0 0.0
    %1194 = vmatprep.subr.mxu0 0.0
    %1195 = vmatpush1.msra.mxu0 0.0
    %1196 = vmatprep.subr.mxu0 0.0
    %1197 = vmatpush1.msra.mxu0 0.0
    %1198 = vmatprep.subr.mxu0 0.0
    %1199 = vmatpush1.msra.mxu0 0.0
    %1200 = vmatprep.subr.mxu0 0.0
    %1201 = vmatpush1.msra.mxu0 0.0
    %1202 = vmatprep.subr.mxu0 0.0
    %1203 = vmatpush1.msra.mxu0 0.0
    %1204 = vmatprep.subr.mxu0 0.0
    %1205 = vmatpush1.msra.mxu0 0.0
    %1206 = vmatprep.subr.mxu0 0.0
    %1207 = vmatpush1.msra.mxu0 0.0
    %1208 = vmatprep.mubr.f32.mxu0 0.0
    %1209 = vmatmul.mubr.f32.gmra.mrb[0].mxu0 %v1139
    %v1210 = vpop.f32.mrb[0].mxu0
    %v1211 = vadd.f32 0.0, %v1210
    %v1212 = vpop.f32.mrb[0].mxu0
    %v1213 = vadd.f32 0.0, %v1212
    %1214 = vmatprep.mubr.f32.mxu0 0.0
    %1215 = vmatmul.mubr.f32.gmra.mrb[0].mxu0 %v1142
    %v1216 = vpop.f32.mrb[0].mxu0
    %v1217 = vadd.f32 0.0, %v1216
    %v1218 = vpop.f32.mrb[0].mxu0
    %v1219 = vadd.f32 0.0, %v1218
    %1220 = vdwg.mxu0
    %1221 = vmatprep.subr.mxu0 %v39
    %1222 = vmatpush1.msra.mxu0 %v38
    %1223 = vmatprep.subr.mxu0 %v43
    %1224 = vmatpush1.msra.mxu0 %v42
    %1225 = vmatprep.subr.mxu0 %v47
    %1226 = vmatpush1.msra.mxu0 %v46
    %1227 = vmatprep.subr.mxu0 %v51
    %1228 = vmatpush1.msra.mxu0 %v50
    %1229 = vmatprep.subr.mxu0 0.0
    %1230 = vmatpush1.msra.mxu0 0.0
    %1231 = vmatprep.subr.mxu0 0.0
    %1232 = vmatpush1.msra.mxu0 0.0
    %1233 = vmatprep.subr.mxu0 0.0
    %1234 = vmatpush1.msra.mxu0 0.0
    %1235 = vmatprep.subr.mxu0 0.0
    %1236 = vmatpush1.msra.mxu0 0.0
    %1237 = vmatprep.subr.mxu0 0.0
    %1238 = vmatpush1.msra.mxu0 0.0
    %1239 = vmatprep.subr.mxu0 0.0
    %1240 = vmatpush1.msra.mxu0 0.0
    %1241 = vmatprep.subr.mxu0 0.0
    %1242 = vmatpush1.msra.mxu0 0.0
    %1243 = vmatprep.subr.mxu0 0.0
    %1244 = vmatpush1.msra.mxu0 0.0
    %1245 = vmatprep.subr.mxu0 0.0
    %1246 = vmatpush1.msra.mxu0 0.0
    %1247 = vmatprep.subr.mxu0 0.0
    %1248 = vmatpush1.msra.mxu0 0.0
    %1249 = vmatprep.subr.mxu0 0.0
    %1250 = vmatpush1.msra.mxu0 0.0
    %1251 = vmatprep.subr.mxu0 0.0
    %1252 = vmatpush1.msra.mxu0 0.0
    %1253 = vmatprep.subr.mxu0 0.0
    %1254 = vmatpush1.msra.mxu0 0.0
    %1255 = vmatprep.subr.mxu0 0.0
    %1256 = vmatpush1.msra.mxu0 0.0
    %1257 = vmatprep.subr.mxu0 0.0
    %1258 = vmatpush1.msra.mxu0 0.0
    %1259 = vmatprep.subr.mxu0 0.0
    %1260 = vmatpush1.msra.mxu0 0.0
    %1261 = vmatprep.subr.mxu0 0.0
    %1262 = vmatpush1.msra.mxu0 0.0
    %1263 = vmatprep.subr.mxu0 0.0
    %1264 = vmatpush1.msra.mxu0 0.0
    %1265 = vmatprep.subr.mxu0 0.0
    %1266 = vmatpush1.msra.mxu0 0.0
    %1267 = vmatprep.subr.mxu0 0.0
    %1268 = vmatpush1.msra.mxu0 0.0
    %1269 = vmatprep.subr.mxu0 0.0
    %1270 = vmatpush1.msra.mxu0 0.0
    %1271 = vmatprep.subr.mxu0 0.0
    %1272 = vmatpush1.msra.mxu0 0.0
    %1273 = vmatprep.subr.mxu0 0.0
    %1274 = vmatpush1.msra.mxu0 0.0
    %1275 = vmatprep.subr.mxu0 0.0
    %1276 = vmatpush1.msra.mxu0 0.0
    %1277 = vmatprep.subr.mxu0 0.0
    %1278 = vmatpush1.msra.mxu0 0.0
    %1279 = vmatprep.subr.mxu0 0.0
    %1280 = vmatpush1.msra.mxu0 0.0
    %1281 = vmatprep.subr.mxu0 0.0
    %1282 = vmatpush1.msra.mxu0 0.0
    %1283 = vmatprep.subr.mxu0 0.0
    %1284 = vmatpush1.msra.mxu0 0.0
    %1285 = vmatprep.mubr.f32.mxu0 0.0
    %1286 = vmatmul.mubr.f32.gmra.mrb[0].mxu0 %v1139
    %v1287 = vpop.f32.mrb[0].mxu0
    %v1288 = vadd.f32 0.0, %v1287
    %v1289 = vpop.f32.mrb[0].mxu0
    %v1290 = vadd.f32 0.0, %v1289
    %1291 = vmatprep.mubr.f32.mxu0 0.0
    %1292 = vmatmul.mubr.f32.gmra.mrb[0].mxu0 %v1142
    %v1293 = vpop.f32.mrb[0].mxu0
    %v1294 = vadd.f32 0.0, %v1293
    %v1295 = vpop.f32.mrb[0].mxu0
    %v1296 = vadd.f32 0.0, %v1295
    %1297 = vdwg.mxu0
    %v1299 = vsel %vm527, %v1120, 0
    %v1302 = vsel %vm527, %v1125, 0
    %1304 = vmatprep.subr.mxu0 %v131
    %1305 = vmatpush1.msra.mxu0 %v130
    %1306 = vmatprep.subr.mxu0 %v135
    %1307 = vmatpush1.msra.mxu0 %v134
    %1308 = vmatprep.subr.mxu0 %v139
    %1309 = vmatpush1.msra.mxu0 %v138
    %1310 = vmatprep.subr.mxu0 %v143
    %1311 = vmatpush1.msra.mxu0 %v142
    %1312 = vmatprep.subr.mxu0 0.0
    %1313 = vmatpush1.msra.mxu0 0.0
    %1314 = vmatprep.subr.mxu0 0.0
    %1315 = vmatpush1.msra.mxu0 0.0
    %1316 = vmatprep.subr.mxu0 0.0
    %1317 = vmatpush1.msra.mxu0 0.0
    %1318 = vmatprep.subr.mxu0 0.0
    %1319 = vmatpush1.msra.mxu0 0.0
    %1320 = vmatprep.subr.mxu0 0.0
    %1321 = vmatpush1.msra.mxu0 0.0
    %1322 = vmatprep.subr.mxu0 0.0
    %1323 = vmatpush1.msra.mxu0 0.0
    %1324 = vmatprep.subr.mxu0 0.0
    %1325 = vmatpush1.msra.mxu0 0.0
    %1326 = vmatprep.subr.mxu0 0.0
    %1327 = vmatpush1.msra.mxu0 0.0
    %1328 = vmatprep.subr.mxu0 0.0
    %1329 = vmatpush1.msra.mxu0 0.0
    %1330 = vmatprep.subr.mxu0 0.0
    %1331 = vmatpush1.msra.mxu0 0.0
    %1332 = vmatprep.subr.mxu0 0.0
    %1333 = vmatpush1.msra.mxu0 0.0
    %1334 = vmatprep.subr.mxu0 0.0
    %1335 = vmatpush1.msra.mxu0 0.0
    %1336 = vmatprep.subr.mxu0 0.0
    %1337 = vmatpush1.msra.mxu0 0.0
    %1338 = vmatprep.subr.mxu0 0.0
    %1339 = vmatpush1.msra.mxu0 0.0
    %1340 = vmatprep.subr.mxu0 0.0
    %1341 = vmatpush1.msra.mxu0 0.0
    %1342 = vmatprep.subr.mxu0 0.0
    %1343 = vmatpush1.msra.mxu0 0.0
    %1344 = vmatprep.subr.mxu0 0.0
    %1345 = vmatpush1.msra.mxu0 0.0
    %1346 = vmatprep.subr.mxu0 0.0
    %1347 = vmatpush1.msra.mxu0 0.0
    %1348 = vmatprep.subr.mxu0 0.0
    %1349 = vmatpush1.msra.mxu0 0.0
    %1350 = vmatprep.subr.mxu0 0.0
    %1351 = vmatpush1.msra.mxu0 0.0
    %1352 = vmatprep.subr.mxu0 0.0
    %1353 = vmatpush1.msra.mxu0 0.0
    %1354 = vmatprep.subr.mxu0 0.0
    %1355 = vmatpush1.msra.mxu0 0.0
    %1356 = vmatprep.subr.mxu0 0.0
    %1357 = vmatpush1.msra.mxu0 0.0
    %1358 = vmatprep.subr.mxu0 0.0
    %1359 = vmatpush1.msra.mxu0 0.0
    %1360 = vmatprep.subr.mxu0 0.0
    %1361 = vmatpush1.msra.mxu0 0.0
    %1362 = vmatprep.subr.mxu0 0.0
    %1363 = vmatpush1.msra.mxu0 0.0
    %1364 = vmatprep.subr.mxu0 0.0
    %1365 = vmatpush1.msra.mxu0 0.0
    %1366 = vmatprep.subr.mxu0 0.0
    %1367 = vmatpush1.msra.mxu0 0.0
    %1368 = vmatprep.mubr.f32.mxu0 0.0
    %1369 = vmatmul.mubr.f32.gmra.mrb[0].mxu0 %v1299
    %v1370 = vpop.f32.mrb[0].mxu0
    %v1371 = vadd.f32 %v1211, %v1370
    %v1372 = vpop.f32.mrb[0].mxu0
    %v1373 = vadd.f32 %v1213, %v1372
    %1374 = vmatprep.mubr.f32.mxu0 0.0
    %1375 = vmatmul.mubr.f32.gmra.mrb[0].mxu0 %v1302
    %v1376 = vpop.f32.mrb[0].mxu0
    %v1377 = vadd.f32 %v1217, %v1376
    %v1378 = vpop.f32.mrb[0].mxu0
    %v1379 = vadd.f32 %v1219, %v1378
    %1380 = vdwg.mxu0
    %1381 = vmatprep.subr.mxu0 %v133
    %1382 = vmatpush1.msra.mxu0 %v132
    %1383 = vmatprep.subr.mxu0 %v137
    %1384 = vmatpush1.msra.mxu0 %v136
    %1385 = vmatprep.subr.mxu0 %v141
    %1386 = vmatpush1.msra.mxu0 %v140
    %1387 = vmatprep.subr.mxu0 %v145
    %1388 = vmatpush1.msra.mxu0 %v144
    %1389 = vmatprep.subr.mxu0 0.0
    %1390 = vmatpush1.msra.mxu0 0.0
    %1391 = vmatprep.subr.mxu0 0.0
    %1392 = vmatpush1.msra.mxu0 0.0
    %1393 = vmatprep.subr.mxu0 0.0
    %1394 = vmatpush1.msra.mxu0 0.0
    %1395 = vmatprep.subr.mxu0 0.0
    %1396 = vmatpush1.msra.mxu0 0.0
    %1397 = vmatprep.subr.mxu0 0.0
    %1398 = vmatpush1.msra.mxu0 0.0
    %1399 = vmatprep.subr.mxu0 0.0
    %1400 = vmatpush1.msra.mxu0 0.0
    %1401 = vmatprep.subr.mxu0 0.0
    %1402 = vmatpush1.msra.mxu0 0.0
    %1403 = vmatprep.subr.mxu0 0.0
    %1404 = vmatpush1.msra.mxu0 0.0
    %1405 = vmatprep.subr.mxu0 0.0
    %1406 = vmatpush1.msra.mxu0 0.0
    %1407 = vmatprep.subr.mxu0 0.0
    %1408 = vmatpush1.msra.mxu0 0.0
    %1409 = vmatprep.subr.mxu0 0.0
    %1410 = vmatpush1.msra.mxu0 0.0
    %1411 = vmatprep.subr.mxu0 0.0
    %1412 = vmatpush1.msra.mxu0 0.0
    %1413 = vmatprep.subr.mxu0 0.0
    %1414 = vmatpush1.msra.mxu0 0.0
    %1415 = vmatprep.subr.mxu0 0.0
    %1416 = vmatpush1.msra.mxu0 0.0
    %1417 = vmatprep.subr.mxu0 0.0
    %1418 = vmatpush1.msra.mxu0 0.0
    %1419 = vmatprep.subr.mxu0 0.0
    %1420 = vmatpush1.msra.mxu0 0.0
    %1421 = vmatprep.subr.mxu0 0.0
    %1422 = vmatpush1.msra.mxu0 0.0
    %1423 = vmatprep.subr.mxu0 0.0
    %1424 = vmatpush1.msra.mxu0 0.0
    %1425 = vmatprep.subr.mxu0 0.0
    %1426 = vmatpush1.msra.mxu0 0.0
    %1427 = vmatprep.subr.mxu0 0.0
    %1428 = vmatpush1.msra.mxu0 0.0
    %1429 = vmatprep.subr.mxu0 0.0
    %1430 = vmatpush1.msra.mxu0 0.0
    %1431 = vmatprep.subr.mxu0 0.0
    %1432 = vmatpush1.msra.mxu0 0.0
    %1433 = vmatprep.subr.mxu0 0.0
    %1434 = vmatpush1.msra.mxu0 0.0
    %1435 = vmatprep.subr.mxu0 0.0
    %1436 = vmatpush1.msra.mxu0 0.0
    %1437 = vmatprep.subr.mxu0 0.0
    %1438 = vmatpush1.msra.mxu0 0.0
    %1439 = vmatprep.subr.mxu0 0.0
    %1440 = vmatpush1.msra.mxu0 0.0
    %1441 = vmatprep.subr.mxu0 0.0
    %1442 = vmatpush1.msra.mxu0 0.0
    %1443 = vmatprep.subr.mxu0 0.0
    %1444 = vmatpush1.msra.mxu0 0.0
    %1445 = vmatprep.mubr.f32.mxu0 0.0
    %1446 = vmatmul.mubr.f32.gmra.mrb[0].mxu0 %v1299
    %v1447 = vpop.f32.mrb[0].mxu0
    %v1448 = vadd.f32 %v1288, %v1447
    %v1449 = vpop.f32.mrb[0].mxu0
    %v1450 = vadd.f32 %v1290, %v1449
    %1451 = vmatprep.mubr.f32.mxu0 0.0
    %1452 = vmatmul.mubr.f32.gmra.mrb[0].mxu0 %v1302
    %v1453 = vpop.f32.mrb[0].mxu0
    %v1454 = vadd.f32 %v1294, %v1453
    %v1455 = vpop.f32.mrb[0].mxu0
    %v1456 = vadd.f32 %v1296, %v1455
    %1457 = vdwg.mxu0
    %v1458 = vld [vmem:[#allocation2 + $0x20] sm:$0xff]
    %v1459 = vld [vmem:[#allocation2 + $0x28] sm:$0xff]
    %1461 = vset.pattern.permute.xlu0 32
    %1462 = vperm.xlu0 %1461, %v1458
    %v1463 = vpop.permute.xlu0 %1462
    %1466 = vset.pattern.permute.xlu0 32
    %1467 = vperm.xlu0 %1466, %v1459
    %v1468 = vpop.permute.xlu0 %1467
    %v1470 = vmul.f32 %v1463, %v830
    %v1471 = vmul.f32 %v1463, %v837
    %v1472 = vmul.f32 %v1463, %v844
    %v1473 = vmul.f32 %v1463, %v851
    %v1474 = vmul.f32 %v1468, %v830
    %v1475 = vmul.f32 %v1468, %v837
    %v1476 = vmul.f32 %v1468, %v844
    %v1477 = vmul.f32 %v1468, %v851
    %v1478 = vadd.f32 %v1371, %v1470
    %v1479 = vadd.f32 %v1373, %v1471
    %v1480 = vadd.f32 %v1448, %v1472
    %v1481 = vadd.f32 %v1450, %v1473
    %v1482 = vadd.f32 %v1377, %v1474
    %v1483 = vadd.f32 %v1379, %v1475
    %v1484 = vadd.f32 %v1454, %v1476
    %v1485 = vadd.f32 %v1456, %v1477
    %1486 = vset.pattern.permute.xlu0 33
    %1487 = vperm.xlu0 %1486, %v1458
    %v1488 = vpop.permute.xlu0 %1487
    %1490 = vset.pattern.permute.xlu0 33
    %1491 = vperm.xlu0 %1490, %v1459
    %v1492 = vpop.permute.xlu0 %1491
    %v1494 = vadd.f32 %v1478, %v1488
    %v1495 = vadd.f32 %v1479, %v1488
    %v1496 = vadd.f32 %v1480, %v1488
    %v1497 = vadd.f32 %v1481, %v1488
    %v1498 = vadd.f32 %v1482, %v1492
    %v1499 = vadd.f32 %v1483, %v1492
    %v1500 = vadd.f32 %v1484, %v1492
    %v1501 = vadd.f32 %v1485, %v1492
    %v1502 = vxor.u32 %v1494, 2147483648
    %v1503 = vxor.u32 %v1495, 2147483648
    %v1504 = vxor.u32 %v1496, 2147483648
    %v1505 = vxor.u32 %v1497, 2147483648
    %v1506 = vxor.u32 %v1498, 2147483648
    %v1507 = vxor.u32 %v1499, 2147483648
    %v1508 = vxor.u32 %v1500, 2147483648
    %v1509 = vxor.u32 %v1501, 2147483648
    %v1510 = vmul.f32 %v1502, 1.442695
    %v1511 = vpow.pop %v1510
    %v1512 = vmul.f32 %v1503, 1.442695
    %v1513 = vpow.pop %v1512
    %v1514 = vmul.f32 %v1504, 1.442695
    %v1515 = vpow.pop %v1514
    %v1516 = vmul.f32 %v1505, 1.442695
    %v1517 = vpow.pop %v1516
    %v1518 = vmul.f32 %v1506, 1.442695
    %v1519 = vpow.pop %v1518
    %v1520 = vmul.f32 %v1507, 1.442695
    %v1521 = vpow.pop %v1520
    %v1522 = vmul.f32 %v1508, 1.442695
    %v1523 = vpow.pop %v1522
    %v1524 = vmul.f32 %v1509, 1.442695
    %v1525 = vpow.pop %v1524
    %v1526 = vadd.f32 %v1511, 1.0
    %v1527 = vadd.f32 %v1513, 1.0
    %v1528 = vadd.f32 %v1515, 1.0
    %v1529 = vadd.f32 %v1517, 1.0
    %v1530 = vadd.f32 %v1519, 1.0
    %v1531 = vadd.f32 %v1521, 1.0
    %v1532 = vadd.f32 %v1523, 1.0
    %v1533 = vadd.f32 %v1525, 1.0
    %v1534 = vrcp.pop %v1526
    %v1535 = vmul.f32 1.0, %v1534
    %v1536 = vrcp.pop %v1527
    %v1537 = vmul.f32 1.0, %v1536
    %v1538 = vrcp.pop %v1528
    %v1539 = vmul.f32 1.0, %v1538
    %v1540 = vrcp.pop %v1529
    %v1541 = vmul.f32 1.0, %v1540
    %v1542 = vrcp.pop %v1530
    %v1543 = vmul.f32 1.0, %v1542
    %v1544 = vrcp.pop %v1531
    %v1545 = vmul.f32 1.0, %v1544
    %v1546 = vrcp.pop %v1532
    %v1547 = vmul.f32 1.0, %v1546
    %v1548 = vrcp.pop %v1533
    %v1549 = vmul.f32 1.0, %v1548
    %v1550 = vmul.f32 %v1494, %v1535
    %v1551 = vmul.f32 %v1495, %v1537
    %v1552 = vmul.f32 %v1496, %v1539
    %v1553 = vmul.f32 %v1497, %v1541
    %v1554 = vmul.f32 %v1498, %v1543
    %v1555 = vmul.f32 %v1499, %v1545
    %v1556 = vmul.f32 %v1500, %v1547
    %v1557 = vmul.f32 %v1501, %v1549
    %v1558 = vld [vmem:[#allocation2 + $0x40] sm:$0xff]
    %v1559 = vld [vmem:[#allocation2 + $0x48] sm:$0xff]
    %1561 = vset.pattern.permute.xlu0 16
    %1562 = vperm.xlu0 %1561, %v1558
    %v1563 = vpop.permute.xlu0 %1562
    %1566 = vset.pattern.permute.xlu0 16
    %1567 = vperm.xlu0 %1566, %v1559
    %v1568 = vpop.permute.xlu0 %1567
    %vm1570 = vcmask 130048
    %v1571 = vsel %vm1570, %v1558, 0
    %v1573 = vsel %vm1570, %v1559, 0
    %1575 = vmatprep.subr.mxu0 %v1551
    %1576 = vmatpush1.msra.mxu0 %v1550
    %1577 = vmatprep.subr.mxu0 %v1555
    %1578 = vmatpush1.msra.mxu0 %v1554
    %1579 = vmatprep.subr.mxu0 0.0
    %1580 = vmatpush1.msra.mxu0 0.0
    %1581 = vmatprep.subr.mxu0 0.0
    %1582 = vmatpush1.msra.mxu0 0.0
    %1583 = vmatprep.subr.mxu0 0.0
    %1584 = vmatpush1.msra.mxu0 0.0
    %1585 = vmatprep.subr.mxu0 0.0
    %1586 = vmatpush1.msra.mxu0 0.0
    %1587 = vmatprep.subr.mxu0 0.0
    %1588 = vmatpush1.msra.mxu0 0.0
    %1589 = vmatprep.subr.mxu0 0.0
    %1590 = vmatpush1.msra.mxu0 0.0
    %1591 = vmatprep.subr.mxu0 0.0
    %1592 = vmatpush1.msra.mxu0 0.0
    %1593 = vmatprep.subr.mxu0 0.0
    %1594 = vmatpush1.msra.mxu0 0.0
    %1595 = vmatprep.subr.mxu0 0.0
    %1596 = vmatpush1.msra.mxu0 0.0
    %1597 = vmatprep.subr.mxu0 0.0
    %1598 = vmatpush1.msra.mxu0 0.0
    %1599 = vmatprep.subr.mxu0 0.0
    %1600 = vmatpush1.msra.mxu0 0.0
    %1601 = vmatprep.subr.mxu0 0.0
    %1602 = vmatpush1.msra.mxu0 0.0
    %1603 = vmatprep.subr.mxu0 0.0
    %1604 = vmatpush1.msra.mxu0 0.0
    %1605 = vmatprep.subr.mxu0 0.0
    %1606 = vmatpush1.msra.mxu0 0.0
    %1607 = vmatprep.subr.mxu0 0.0
    %1608 = vmatpush1.msra.mxu0 0.0
    %1609 = vmatprep.subr.mxu0 0.0
    %1610 = vmatpush1.msra.mxu0 0.0
    %1611 = vmatprep.subr.mxu0 0.0
    %1612 = vmatpush1.msra.mxu0 0.0
    %1613 = vmatprep.subr.mxu0 0.0
    %1614 = vmatpush1.msra.mxu0 0.0
    %1615 = vmatprep.subr.mxu0 0.0
    %1616 = vmatpush1.msra.mxu0 0.0
    %1617 = vmatprep.subr.mxu0 0.0
    %1618 = vmatpush1.msra.mxu0 0.0
    %1619 = vmatprep.subr.mxu0 0.0
    %1620 = vmatpush1.msra.mxu0 0.0
    %1621 = vmatprep.subr.mxu0 0.0
    %1622 = vmatpush1.msra.mxu0 0.0
    %1623 = vmatprep.subr.mxu0 0.0
    %1624 = vmatpush1.msra.mxu0 0.0
    %1625 = vmatprep.subr.mxu0 0.0
    %1626 = vmatpush1.msra.mxu0 0.0
    %1627 = vmatprep.subr.mxu0 0.0
    %1628 = vmatpush1.msra.mxu0 0.0
    %1629 = vmatprep.subr.mxu0 0.0
    %1630 = vmatpush1.msra.mxu0 0.0
    %1631 = vmatprep.subr.mxu0 0.0
    %1632 = vmatpush1.msra.mxu0 0.0
    %1633 = vmatprep.subr.mxu0 0.0
    %1634 = vmatpush1.msra.mxu0 0.0
    %1635 = vmatprep.subr.mxu0 0.0
    %1636 = vmatpush1.msra.mxu0 0.0
    %1637 = vmatprep.subr.mxu0 0.0
    %1638 = vmatpush1.msra.mxu0 0.0
    %1639 = vmatprep.mubr.f32.mxu0 0.0
    %1640 = vmatmul.mubr.f32.gmra.mrb[0].mxu0 %v1571
    %v1641 = vpop.f32.mrb[0].mxu0
    %v1642 = vadd.f32 %v1563, %v1641
    %v1643 = vpop.f32.mrb[0].mxu0
    %v1644 = vadd.f32 %v1563, %v1643
    %1645 = vmatprep.mubr.f32.mxu0 0.0
    %1646 = vmatmul.mubr.f32.gmra.mrb[0].mxu0 %v1573
    %v1647 = vpop.f32.mrb[0].mxu0
    %v1648 = vadd.f32 %v1568, %v1647
    %v1649 = vpop.f32.mrb[0].mxu0
    %v1650 = vadd.f32 %v1568, %v1649
    %1651 = vdwg.mxu0
    %1652 = vmatprep.subr.mxu0 %v1553
    %1653 = vmatpush1.msra.mxu0 %v1552
    %1654 = vmatprep.subr.mxu0 %v1557
    %1655 = vmatpush1.msra.mxu0 %v1556
    %1656 = vmatprep.subr.mxu0 0.0
    %1657 = vmatpush1.msra.mxu0 0.0
    %1658 = vmatprep.subr.mxu0 0.0
    %1659 = vmatpush1.msra.mxu0 0.0
    %1660 = vmatprep.subr.mxu0 0.0
    %1661 = vmatpush1.msra.mxu0 0.0
    %1662 = vmatprep.subr.mxu0 0.0
    %1663 = vmatpush1.msra.mxu0 0.0
    %1664 = vmatprep.subr.mxu0 0.0
    %1665 = vmatpush1.msra.mxu0 0.0
    %1666 = vmatprep.subr.mxu0 0.0
    %1667 = vmatpush1.msra.mxu0 0.0
    %1668 = vmatprep.subr.mxu0 0.0
    %1669 = vmatpush1.msra.mxu0 0.0
    %1670 = vmatprep.subr.mxu0 0.0
    %1671 = vmatpush1.msra.mxu0 0.0
    %1672 = vmatprep.subr.mxu0 0.0
    %1673 = vmatpush1.msra.mxu0 0.0
    %1674 = vmatprep.subr.mxu0 0.0
    %1675 = vmatpush1.msra.mxu0 0.0
    %1676 = vmatprep.subr.mxu0 0.0
    %1677 = vmatpush1.msra.mxu0 0.0
    %1678 = vmatprep.subr.mxu0 0.0
    %1679 = vmatpush1.msra.mxu0 0.0
    %1680 = vmatprep.subr.mxu0 0.0
    %1681 = vmatpush1.msra.mxu0 0.0
    %1682 = vmatprep.subr.mxu0 0.0
    %1683 = vmatpush1.msra.mxu0 0.0
    %1684 = vmatprep.subr.mxu0 0.0
    %1685 = vmatpush1.msra.mxu0 0.0
    %1686 = vmatprep.subr.mxu0 0.0
    %1687 = vmatpush1.msra.mxu0 0.0
    %1688 = vmatprep.subr.mxu0 0.0
    %1689 = vmatpush1.msra.mxu0 0.0
    %1690 = vmatprep.subr.mxu0 0.0
    %1691 = vmatpush1.msra.mxu0 0.0
    %1692 = vmatprep.subr.mxu0 0.0
    %1693 = vmatpush1.msra.mxu0 0.0
    %1694 = vmatprep.subr.mxu0 0.0
    %1695 = vmatpush1.msra.mxu0 0.0
    %1696 = vmatprep.subr.mxu0 0.0
    %1697 = vmatpush1.msra.mxu0 0.0
    %1698 = vmatprep.subr.mxu0 0.0
    %1699 = vmatpush1.msra.mxu0 0.0
    %1700 = vmatprep.subr.mxu0 0.0
    %1701 = vmatpush1.msra.mxu0 0.0
    %1702 = vmatprep.subr.mxu0 0.0
    %1703 = vmatpush1.msra.mxu0 0.0
    %1704 = vmatprep.subr.mxu0 0.0
    %1705 = vmatpush1.msra.mxu0 0.0
    %1706 = vmatprep.subr.mxu0 0.0
    %1707 = vmatpush1.msra.mxu0 0.0
    %1708 = vmatprep.subr.mxu0 0.0
    %1709 = vmatpush1.msra.mxu0 0.0
    %1710 = vmatprep.subr.mxu0 0.0
    %1711 = vmatpush1.msra.mxu0 0.0
    %1712 = vmatprep.subr.mxu0 0.0
    %1713 = vmatpush1.msra.mxu0 0.0
    %1714 = vmatprep.subr.mxu0 0.0
    %1715 = vmatpush1.msra.mxu0 0.0
    %1716 = vmatprep.mubr.f32.mxu0 0.0
    %1717 = vmatmul.mubr.f32.gmra.mrb[0].mxu0 %v1571
    %v1718 = vpop.f32.mrb[0].mxu0
    %v1719 = vadd.f32 %v1563, %v1718
    %v1720 = vpop.f32.mrb[0].mxu0
    %v1721 = vadd.f32 %v1563, %v1720
    %1722 = vmatprep.mubr.f32.mxu0 0.0
    %1723 = vmatmul.mubr.f32.gmra.mrb[0].mxu0 %v1573
    %v1724 = vpop.f32.mrb[0].mxu0
    %v1725 = vadd.f32 %v1568, %v1724
    %v1726 = vpop.f32.mrb[0].mxu0
    %v1727 = vadd.f32 %v1568, %v1726
    %1728 = vdwg.mxu0
    %v1729 = vxor.u32 %v1642, 2147483648
    %v1730 = vxor.u32 %v1644, 2147483648
    %v1731 = vxor.u32 %v1719, 2147483648
    %v1732 = vxor.u32 %v1721, 2147483648
    %v1733 = vxor.u32 %v1648, 2147483648
    %v1734 = vxor.u32 %v1650, 2147483648
    %v1735 = vxor.u32 %v1725, 2147483648
    %v1736 = vxor.u32 %v1727, 2147483648
    %v1737 = vmul.f32 %v1729, 1.442695
    %v1738 = vpow.pop %v1737
    %v1739 = vmul.f32 %v1730, 1.442695
    %v1740 = vpow.pop %v1739
    %v1741 = vmul.f32 %v1731, 1.442695
    %v1742 = vpow.pop %v1741
    %v1743 = vmul.f32 %v1732, 1.442695
    %v1744 = vpow.pop %v1743
    %v1745 = vmul.f32 %v1733, 1.442695
    %v1746 = vpow.pop %v1745
    %v1747 = vmul.f32 %v1734, 1.442695
    %v1748 = vpow.pop %v1747
    %v1749 = vmul.f32 %v1735, 1.442695
    %v1750 = vpow.pop %v1749
    %v1751 = vmul.f32 %v1736, 1.442695
    %v1752 = vpow.pop %v1751
    %v1753 = vadd.f32 %v1738, 1.0
    %v1754 = vadd.f32 %v1740, 1.0
    %v1755 = vadd.f32 %v1742, 1.0
    %v1756 = vadd.f32 %v1744, 1.0
    %v1757 = vadd.f32 %v1746, 1.0
    %v1758 = vadd.f32 %v1748, 1.0
    %v1759 = vadd.f32 %v1750, 1.0
    %v1760 = vadd.f32 %v1752, 1.0
    %v1761 = vrcp.pop %v1753
    %v1762 = vmul.f32 1.0, %v1761
    %v1763 = vrcp.pop %v1754
    %v1764 = vmul.f32 1.0, %v1763
    %v1765 = vrcp.pop %v1755
    %v1766 = vmul.f32 1.0, %v1765
    %v1767 = vrcp.pop %v1756
    %v1768 = vmul.f32 1.0, %v1767
    %v1769 = vrcp.pop %v1757
    %v1770 = vmul.f32 1.0, %v1769
    %v1771 = vrcp.pop %v1758
    %v1772 = vmul.f32 1.0, %v1771
    %v1773 = vrcp.pop %v1759
    %v1774 = vmul.f32 1.0, %v1773
    %v1775 = vrcp.pop %v1760
    %v1776 = vmul.f32 1.0, %v1775
    %v1777 = vmul.f32 %v1642, %v1762
    %v1778 = vmul.f32 %v1644, %v1764
    %v1779 = vmul.f32 %v1719, %v1766
    %v1780 = vmul.f32 %v1721, %v1768
    %v1781 = vmul.f32 %v1648, %v1770
    %v1782 = vmul.f32 %v1650, %v1772
    %v1783 = vmul.f32 %v1725, %v1774
    %v1784 = vmul.f32 %v1727, %v1776
    %v1785 = vlaneseq
    %v1786 = vshrl.u32 %v1785, 7
    %v1787 = vsub.s32 3, %v1786
    %v1788 = vrot.slane %v915, %v1787
    %v1789 = vlaneseq
    %v1790 = vshrl.u32 %v1789, 7
    %v1791 = vsub.s32 3, %v1790
    %v1792 = vrot.slane %v916, %v1791
    %v1793 = vlaneseq
    %v1794 = vshrl.u32 %v1793, 7
    %v1795 = vsub.s32 3, %v1794
    %v1796 = vrot.slane %v917, %v1795
    %v1797 = vlaneseq
    %v1798 = vshrl.u32 %v1797, 7
    %v1799 = vsub.s32 3, %v1798
    %v1800 = vrot.slane %v918, %v1799
    %v1801 = vmul.f32 %v1777, %v1788
    %v1802 = vmul.f32 %v1778, %v1792
    %v1803 = vmul.f32 %v1779, %v1796
    %v1804 = vmul.f32 %v1780, %v1800
    %v1805 = vmul.f32 %v1781, %v1788
    %v1806 = vmul.f32 %v1782, %v1792
    %v1807 = vmul.f32 %v1783, %v1796
    %v1808 = vmul.f32 %v1784, %v1800
    %1809 = vmatprep.subr.mxu0 0.0
    %1810 = vmatpush1.msra.mxu0 %v463
    %1811 = vmatprep.subr.mxu0 0.0
    %1812 = vmatpush1.msra.mxu0 %v464
    %1813 = vmatprep.subr.mxu0 0.0
    %1814 = vmatpush1.msra.mxu0 %v465
    %1815 = vmatprep.subr.mxu0 0.0
    %1816 = vmatpush1.msra.mxu0 %v466
    %1817 = vmatprep.subr.mxu0 0.0
    %1818 = vmatpush1.msra.mxu0 %v467
    %1819 = vmatprep.subr.mxu0 0.0
    %1820 = vmatpush1.msra.mxu0 %v468
    %1821 = vmatprep.subr.mxu0 0.0
    %1822 = vmatpush1.msra.mxu0 %v469
    %1823 = vmatprep.subr.mxu0 0.0
    %1824 = vmatpush1.msra.mxu0 %v470
    %1825 = vmatprep.subr.mxu0 0.0
    %1826 = vmatpush1.msra.mxu0 %v471
    %1827 = vmatprep.subr.mxu0 0.0
    %1828 = vmatpush1.msra.mxu0 %v472
    %1829 = vmatprep.subr.mxu0 0.0
    %1830 = vmatpush1.msra.mxu0 %v473
    %1831 = vmatprep.subr.mxu0 0.0
    %1832 = vmatpush1.msra.mxu0 %v474
    %1833 = vmatprep.subr.mxu0 0.0
    %1834 = vmatpush1.msra.mxu0 %v475
    %1835 = vmatprep.subr.mxu0 0.0
    %1836 = vmatpush1.msra.mxu0 %v476
    %1837 = vmatprep.subr.mxu0 0.0
    %1838 = vmatpush1.msra.mxu0 %v477
    %1839 = vmatprep.subr.mxu0 0.0
    %1840 = vmatpush1.msra.mxu0 %v478
    %1841 = vmatprep.subr.mxu0 0.0
    %1842 = vmatpush1.msra.mxu0 %v479
    %1843 = vmatprep.subr.mxu0 0.0
    %1844 = vmatpush1.msra.mxu0 %v480
    %1845 = vmatprep.subr.mxu0 0.0
    %1846 = vmatpush1.msra.mxu0 %v481
    %1847 = vmatprep.subr.mxu0 0.0
    %1848 = vmatpush1.msra.mxu0 %v482
    %1849 = vmatprep.subr.mxu0 0.0
    %1850 = vmatpush1.msra.mxu0 %v483
    %1851 = vmatprep.subr.mxu0 0.0
    %1852 = vmatpush1.msra.mxu0 %v484
    %1853 = vmatprep.subr.mxu0 0.0
    %1854 = vmatpush1.msra.mxu0 %v485
    %1855 = vmatprep.subr.mxu0 0.0
    %1856 = vmatpush1.msra.mxu0 %v486
    %1857 = vmatprep.subr.mxu0 0.0
    %1858 = vmatpush1.msra.mxu0 %v487
    %1859 = vmatprep.subr.mxu0 0.0
    %1860 = vmatpush1.msra.mxu0 %v488
    %1861 = vmatprep.subr.mxu0 0.0
    %1862 = vmatpush1.msra.mxu0 %v489
    %1863 = vmatprep.subr.mxu0 0.0
    %1864 = vmatpush1.msra.mxu0 %v490
    %1865 = vmatprep.subr.mxu0 0.0
    %1866 = vmatpush1.msra.mxu0 %v491
    %1867 = vmatprep.subr.mxu0 0.0
    %1868 = vmatpush1.msra.mxu0 %v492
    %1869 = vmatprep.subr.mxu0 0.0
    %1870 = vmatpush1.msra.mxu0 %v493
    %1871 = vmatprep.subr.mxu0 0.0
    %1872 = vmatpush1.msra.mxu0 %v494
    %1873 = vmatprep.mubr.f32.mxu0 %v1802
    %1874 = vmatmul.mubr.f32.gmra.mrb[0].mxu0 %v1801
    %v1875 = vpop.f32.mrb[0].mxu0
    %v1876 = vadd.f32 0.0, %v1875
    %v1877 = vpop.f32.mrb[0].mxu0
    %1878 = vmatprep.mubr.f32.mxu0 %v1806
    %1879 = vmatmul.mubr.f32.gmra.mrb[0].mxu0 %v1805
    %v1880 = vpop.f32.mrb[0].mxu0
    %v1881 = vadd.f32 0.0, %v1880
    %v1882 = vpop.f32.mrb[0].mxu0
    %1883 = vdwg.mxu0
    %1884 = vmatprep.subr.mxu0 0.0
    %1885 = vmatpush1.msra.mxu0 %v495
    %1886 = vmatprep.subr.mxu0 0.0
    %1887 = vmatpush1.msra.mxu0 %v496
    %1888 = vmatprep.subr.mxu0 0.0
    %1889 = vmatpush1.msra.mxu0 %v497
    %1890 = vmatprep.subr.mxu0 0.0
    %1891 = vmatpush1.msra.mxu0 %v498
    %1892 = vmatprep.subr.mxu0 0.0
    %1893 = vmatpush1.msra.mxu0 %v499
    %1894 = vmatprep.subr.mxu0 0.0
    %1895 = vmatpush1.msra.mxu0 %v500
    %1896 = vmatprep.subr.mxu0 0.0
    %1897 = vmatpush1.msra.mxu0 %v501
    %1898 = vmatprep.subr.mxu0 0.0
    %1899 = vmatpush1.msra.mxu0 %v502
    %1900 = vmatprep.subr.mxu0 0.0
    %1901 = vmatpush1.msra.mxu0 %v503
    %1902 = vmatprep.subr.mxu0 0.0
    %1903 = vmatpush1.msra.mxu0 %v504
    %1904 = vmatprep.subr.mxu0 0.0
    %1905 = vmatpush1.msra.mxu0 %v505
    %1906 = vmatprep.subr.mxu0 0.0
    %1907 = vmatpush1.msra.mxu0 %v506
    %1908 = vmatprep.subr.mxu0 0.0
    %1909 = vmatpush1.msra.mxu0 %v507
    %1910 = vmatprep.subr.mxu0 0.0
    %1911 = vmatpush1.msra.mxu0 %v508
    %1912 = vmatprep.subr.mxu0 0.0
    %1913 = vmatpush1.msra.mxu0 %v509
    %1914 = vmatprep.subr.mxu0 0.0
    %1915 = vmatpush1.msra.mxu0 %v510
    %1916 = vmatprep.subr.mxu0 0.0
    %1917 = vmatpush1.msra.mxu0 %v511
    %1918 = vmatprep.subr.mxu0 0.0
    %1919 = vmatpush1.msra.mxu0 %v512
    %1920 = vmatprep.subr.mxu0 0.0
    %1921 = vmatpush1.msra.mxu0 %v513
    %1922 = vmatprep.subr.mxu0 0.0
    %1923 = vmatpush1.msra.mxu0 %v514
    %1924 = vmatprep.subr.mxu0 0.0
    %1925 = vmatpush1.msra.mxu0 %v515
    %1926 = vmatprep.subr.mxu0 0.0
    %1927 = vmatpush1.msra.mxu0 %v516
    %1928 = vmatprep.subr.mxu0 0.0
    %1929 = vmatpush1.msra.mxu0 %v517
    %1930 = vmatprep.subr.mxu0 0.0
    %1931 = vmatpush1.msra.mxu0 %v518
    %1932 = vmatprep.subr.mxu0 0.0
    %1933 = vmatpush1.msra.mxu0 %v519
    %1934 = vmatprep.subr.mxu0 0.0
    %1935 = vmatpush1.msra.mxu0 %v520
    %1936 = vmatprep.subr.mxu0 0.0
    %1937 = vmatpush1.msra.mxu0 %v521
    %1938 = vmatprep.subr.mxu0 0.0
    %1939 = vmatpush1.msra.mxu0 %v522
    %1940 = vmatprep.subr.mxu0 0.0
    %1941 = vmatpush1.msra.mxu0 %v523
    %1942 = vmatprep.subr.mxu0 0.0
    %1943 = vmatpush1.msra.mxu0 %v524
    %1944 = vmatprep.subr.mxu0 0.0
    %1945 = vmatpush1.msra.mxu0 %v525
    %1946 = vmatprep.subr.mxu0 0.0
    %1947 = vmatpush1.msra.mxu0 %v526
    %1948 = vmatprep.mubr.f32.mxu0 %v1804
    %1949 = vmatmul.mubr.f32.gmra.mrb[0].mxu0 %v1803
    %v1950 = vpop.f32.mrb[0].mxu0
    %v1951 = vadd.f32 %v1876, %v1950
    %v1952 = vpop.f32.mrb[0].mxu0
    %1953 = vmatprep.mubr.f32.mxu0 %v1808
    %1954 = vmatmul.mubr.f32.gmra.mrb[0].mxu0 %v1807
    %v1955 = vpop.f32.mrb[0].mxu0
    %v1956 = vadd.f32 %v1881, %v1955
    %v1957 = vpop.f32.mrb[0].mxu0
    %1958 = vdwg.mxu0
    %v1959 = vld [vmem:[#allocation2 + $0x50] sm:$0xff]
    %v1960 = vld [vmem:[#allocation2 + $0x58] sm:$0xff]
    %v1961 = vld [vmem:[#allocation2 + $0x60] sm:$0xff]
    %v1962 = vld [vmem:[#allocation2 + $0x68] sm:$0xff]
    %v1963 = vld [vmem:[#allocation2 + $0x70] sm:$0xff]
    %v1964 = vld [vmem:[#allocation2 + $0x78] sm:$0xff]
    %v1965 = vld [vmem:[#allocation2 + $0x80] sm:$0xff]
    %v1966 = vld [vmem:[#allocation2 + $0x88] sm:$0xff]
    %v1967 = vld [vmem:[#allocation2 + $0x90] sm:$0xff]
    %v1968 = vld [vmem:[#allocation2 + $0x98] sm:$0xff]
    %v1969 = vld [vmem:[#allocation2 + $0xa0] sm:$0xff]
    %v1970 = vld [vmem:[#allocation2 + $0xa8] sm:$0xff]
    %v1971 = vld [vmem:[#allocation2 + $0xb0] sm:$0xff]
    %v1972 = vld [vmem:[#allocation2 + $0xb8] sm:$0xff]
    %v1973 = vld [vmem:[#allocation2 + $0xc0] sm:$0xff]
    %v1974 = vld [vmem:[#allocation2 + $0xc8] sm:$0xff]
    %v1976 = vsel %vm1570, %v1967, 0
    %v1979 = vsel %vm1570, %v1968, 0
    %v1982 = vsel %vm1570, %v1969, 0
    %v1985 = vsel %vm1570, %v1970, 0
    %v1988 = vsel %vm1570, %v1971, 0
    %v1991 = vsel %vm1570, %v1972, 0
    %v1994 = vsel %vm1570, %v1973, 0
    %v1997 = vsel %vm1570, %v1974, 0
    %1999 = vmatprep.subr.mxu0 0.0
    %2000 = vmatpush1.msra.mxu0 %v1951
    %2001 = vmatprep.subr.mxu0 0.0
    %2002 = vmatpush1.msra.mxu0 %v1956
    %2003 = vmatprep.subr.mxu0 0.0
    %2004 = vmatpush1.msra.mxu0 0.0
    %2005 = vmatprep.subr.mxu0 0.0
    %2006 = vmatpush1.msra.mxu0 0.0
    %2007 = vmatprep.subr.mxu0 0.0
    %2008 = vmatpush1.msra.mxu0 0.0
    %2009 = vmatprep.subr.mxu0 0.0
    %2010 = vmatpush1.msra.mxu0 0.0
    %2011 = vmatprep.subr.mxu0 0.0
    %2012 = vmatpush1.msra.mxu0 0.0
    %2013 = vmatprep.subr.mxu0 0.0
    %2014 = vmatpush1.msra.mxu0 0.0
    %2015 = vmatprep.subr.mxu0 0.0
    %2016 = vmatpush1.msra.mxu0 0.0
    %2017 = vmatprep.subr.mxu0 0.0
    %2018 = vmatpush1.msra.mxu0 0.0
    %2019 = vmatprep.subr.mxu0 0.0
    %2020 = vmatpush1.msra.mxu0 0.0
    %2021 = vmatprep.subr.mxu0 0.0
    %2022 = vmatpush1.msra.mxu0 0.0
    %2023 = vmatprep.subr.mxu0 0.0
    %2024 = vmatpush1.msra.mxu0 0.0
    %2025 = vmatprep.subr.mxu0 0.0
    %2026 = vmatpush1.msra.mxu0 0.0
    %2027 = vmatprep.subr.mxu0 0.0
    %2028 = vmatpush1.msra.mxu0 0.0
    %2029 = vmatprep.subr.mxu0 0.0
    %2030 = vmatpush1.msra.mxu0 0.0
    %2031 = vmatprep.subr.mxu0 0.0
    %2032 = vmatpush1.msra.mxu0 0.0
    %2033 = vmatprep.subr.mxu0 0.0
    %2034 = vmatpush1.msra.mxu0 0.0
    %2035 = vmatprep.subr.mxu0 0.0
    %2036 = vmatpush1.msra.mxu0 0.0
    %2037 = vmatprep.subr.mxu0 0.0
    %2038 = vmatpush1.msra.mxu0 0.0
    %2039 = vmatprep.subr.mxu0 0.0
    %2040 = vmatpush1.msra.mxu0 0.0
    %2041 = vmatprep.subr.mxu0 0.0
    %2042 = vmatpush1.msra.mxu0 0.0
    %2043 = vmatprep.subr.mxu0 0.0
    %2044 = vmatpush1.msra.mxu0 0.0
    %2045 = vmatprep.subr.mxu0 0.0
    %2046 = vmatpush1.msra.mxu0 0.0
    %2047 = vmatprep.subr.mxu0 0.0
    %2048 = vmatpush1.msra.mxu0 0.0
    %2049 = vmatprep.subr.mxu0 0.0
    %2050 = vmatpush1.msra.mxu0 0.0
    %2051 = vmatprep.subr.mxu0 0.0
    %2052 = vmatpush1.msra.mxu0 0.0
    %2053 = vmatprep.subr.mxu0 0.0
    %2054 = vmatpush1.msra.mxu0 0.0
    %2055 = vmatprep.subr.mxu0 0.0
    %2056 = vmatpush1.msra.mxu0 0.0
    %2057 = vmatprep.subr.mxu0 0.0
    %2058 = vmatpush1.msra.mxu0 0.0
    %2059 = vmatprep.subr.mxu0 0.0
    %2060 = vmatpush1.msra.mxu0 0.0
    %2061 = vmatprep.subr.mxu0 0.0
    %2062 = vmatpush1.msra.mxu0 0.0
    %2063 = vmatprep.mubr.f32.mxu0 0.0
    %2064 = vmatmul.mubr.f32.gmra.mrb[0].mxu0 %v1976
    %v2065 = vpop.f32.mrb[0].mxu0
    %v2066 = vadd.f32 0.0, %v2065
    %v2067 = vpop.f32.mrb[0].mxu0
    %2068 = vmatprep.mubr.f32.mxu0 0.0
    %2069 = vmatmul.mubr.f32.gmra.mrb[0].mxu0 %v1979
    %v2070 = vpop.f32.mrb[0].mxu0
    %v2071 = vadd.f32 0.0, %v2070
    %v2072 = vpop.f32.mrb[0].mxu0
    %2073 = vmatprep.mubr.f32.mxu0 0.0
    %2074 = vmatmul.mubr.f32.gmra.mrb[0].mxu0 %v1982
    %v2075 = vpop.f32.mrb[0].mxu0
    %v2076 = vadd.f32 0.0, %v2075
    %v2077 = vpop.f32.mrb[0].mxu0
    %2078 = vmatprep.mubr.f32.mxu0 0.0
    %2079 = vmatmul.mubr.f32.gmra.mrb[0].mxu0 %v1985
    %v2080 = vpop.f32.mrb[0].mxu0
    %v2081 = vadd.f32 0.0, %v2080
    %v2082 = vpop.f32.mrb[0].mxu0
    %2083 = vmatprep.mubr.f32.mxu0 0.0
    %2084 = vmatmul.mubr.f32.gmra.mrb[0].mxu0 %v1988
    %v2085 = vpop.f32.mrb[0].mxu0
    %v2086 = vadd.f32 0.0, %v2085
    %v2087 = vpop.f32.mrb[0].mxu0
    %2088 = vmatprep.mubr.f32.mxu0 0.0
    %2089 = vmatmul.mubr.f32.gmra.mrb[0].mxu0 %v1991
    %v2090 = vpop.f32.mrb[0].mxu0
    %v2091 = vadd.f32 0.0, %v2090
    %v2092 = vpop.f32.mrb[0].mxu0
    %2093 = vmatprep.mubr.f32.mxu0 0.0
    %2094 = vmatmul.mubr.f32.gmra.mrb[0].mxu0 %v1994
    %v2095 = vpop.f32.mrb[0].mxu0
    %v2096 = vadd.f32 0.0, %v2095
    %v2097 = vpop.f32.mrb[0].mxu0
    %2098 = vmatprep.mubr.f32.mxu0 0.0
    %2099 = vmatmul.mubr.f32.gmra.mrb[0].mxu0 %v1997
    %v2100 = vpop.f32.mrb[0].mxu0
    %v2101 = vadd.f32 0.0, %v2100
    %v2102 = vpop.f32.mrb[0].mxu0
    %2103 = vdwg.mxu0
    %v2105 = vsel %vm527, %v1959, 0
    %v2108 = vsel %vm527, %v1960, 0
    %v2111 = vsel %vm527, %v1961, 0
    %v2114 = vsel %vm527, %v1962, 0
    %v2117 = vsel %vm527, %v1963, 0
    %v2120 = vsel %vm527, %v1964, 0
    %v2123 = vsel %vm527, %v1965, 0
    %v2126 = vsel %vm527, %v1966, 0
    %2128 = vmatprep.subr.mxu0 0.0
    %2129 = vmatpush1.msra.mxu0 %v1019
    %2130 = vmatprep.subr.mxu0 0.0
    %2131 = vmatpush1.msra.mxu0 %v1024
    %2132 = vmatprep.subr.mxu0 0.0
    %2133 = vmatpush1.msra.mxu0 %v1029
    %2134 = vmatprep.subr.mxu0 0.0
    %2135 = vmatpush1.msra.mxu0 %v1034
    %2136 = vmatprep.subr.mxu0 0.0
    %2137 = vmatpush1.msra.mxu0 0.0
    %2138 = vmatprep.subr.mxu0 0.0
    %2139 = vmatpush1.msra.mxu0 0.0
    %2140 = vmatprep.subr.mxu0 0.0
    %2141 = vmatpush1.msra.mxu0 0.0
    %2142 = vmatprep.subr.mxu0 0.0
    %2143 = vmatpush1.msra.mxu0 0.0
    %2144 = vmatprep.subr.mxu0 0.0
    %2145 = vmatpush1.msra.mxu0 0.0
    %2146 = vmatprep.subr.mxu0 0.0
    %2147 = vmatpush1.msra.mxu0 0.0
    %2148 = vmatprep.subr.mxu0 0.0
    %2149 = vmatpush1.msra.mxu0 0.0
    %2150 = vmatprep.subr.mxu0 0.0
    %2151 = vmatpush1.msra.mxu0 0.0
    %2152 = vmatprep.subr.mxu0 0.0
    %2153 = vmatpush1.msra.mxu0 0.0
    %2154 = vmatprep.subr.mxu0 0.0
    %2155 = vmatpush1.msra.mxu0 0.0
    %2156 = vmatprep.subr.mxu0 0.0
    %2157 = vmatpush1.msra.mxu0 0.0
    %2158 = vmatprep.subr.mxu0 0.0
    %2159 = vmatpush1.msra.mxu0 0.0
    %2160 = vmatprep.subr.mxu0 0.0
    %2161 = vmatpush1.msra.mxu0 0.0
    %2162 = vmatprep.subr.mxu0 0.0
    %2163 = vmatpush1.msra.mxu0 0.0
    %2164 = vmatprep.subr.mxu0 0.0
    %2165 = vmatpush1.msra.mxu0 0.0
    %2166 = vmatprep.subr.mxu0 0.0
    %2167 = vmatpush1.msra.mxu0 0.0
    %2168 = vmatprep.subr.mxu0 0.0
    %2169 = vmatpush1.msra.mxu0 0.0
    %2170 = vmatprep.subr.mxu0 0.0
    %2171 = vmatpush1.msra.mxu0 0.0
    %2172 = vmatprep.subr.mxu0 0.0
    %2173 = vmatpush1.msra.mxu0 0.0
    %2174 = vmatprep.subr.mxu0 0.0
    %2175 = vmatpush1.msra.mxu0 0.0
    %2176 = vmatprep.subr.mxu0 0.0
    %2177 = vmatpush1.msra.mxu0 0.0
    %2178 = vmatprep.subr.mxu0 0.0
    %2179 = vmatpush1.msra.mxu0 0.0
    %2180 = vmatprep.subr.mxu0 0.0
    %2181 = vmatpush1.msra.mxu0 0.0
    %2182 = vmatprep.subr.mxu0 0.0
    %2183 = vmatpush1.msra.mxu0 0.0
    %2184 = vmatprep.subr.mxu0 0.0
    %2185 = vmatpush1.msra.mxu0 0.0
    %2186 = vmatprep.subr.mxu0 0.0
    %2187 = vmatpush1.msra.mxu0 0.0
    %2188 = vmatprep.subr.mxu0 0.0
    %2189 = vmatpush1.msra.mxu0 0.0
    %2190 = vmatprep.subr.mxu0 0.0
    %2191 = vmatpush1.msra.mxu0 0.0
    %2192 = vmatprep.mubr.f32.mxu0 0.0
    %2193 = vmatmul.mubr.f32.gmra.mrb[0].mxu0 %v2105
    %v2194 = vpop.f32.mrb[0].mxu0
    %v2195 = vadd.f32 %v2066, %v2194
    %v2196 = vpop.f32.mrb[0].mxu0
    %2197 = vmatprep.mubr.f32.mxu0 0.0
    %2198 = vmatmul.mubr.f32.gmra.mrb[0].mxu0 %v2108
    %v2199 = vpop.f32.mrb[0].mxu0
    %v2200 = vadd.f32 %v2071, %v2199
    %v2201 = vpop.f32.mrb[0].mxu0
    %2202 = vmatprep.mubr.f32.mxu0 0.0
    %2203 = vmatmul.mubr.f32.gmra.mrb[0].mxu0 %v2111
    %v2204 = vpop.f32.mrb[0].mxu0
    %v2205 = vadd.f32 %v2076, %v2204
    %v2206 = vpop.f32.mrb[0].mxu0
    %2207 = vmatprep.mubr.f32.mxu0 0.0
    %2208 = vmatmul.mubr.f32.gmra.mrb[0].mxu0 %v2114
    %v2209 = vpop.f32.mrb[0].mxu0
    %v2210 = vadd.f32 %v2081, %v2209
    %v2211 = vpop.f32.mrb[0].mxu0
    %2212 = vmatprep.mubr.f32.mxu0 0.0
    %2213 = vmatmul.mubr.f32.gmra.mrb[0].mxu0 %v2117
    %v2214 = vpop.f32.mrb[0].mxu0
    %v2215 = vadd.f32 %v2086, %v2214
    %v2216 = vpop.f32.mrb[0].mxu0
    %2217 = vmatprep.mubr.f32.mxu0 0.0
    %2218 = vmatmul.mubr.f32.gmra.mrb[0].mxu0 %v2120
    %v2219 = vpop.f32.mrb[0].mxu0
    %v2220 = vadd.f32 %v2091, %v2219
    %v2221 = vpop.f32.mrb[0].mxu0
    %2222 = vmatprep.mubr.f32.mxu0 0.0
    %2223 = vmatmul.mubr.f32.gmra.mrb[0].mxu0 %v2123
    %v2224 = vpop.f32.mrb[0].mxu0
    %v2225 = vadd.f32 %v2096, %v2224
    %v2226 = vpop.f32.mrb[0].mxu0
    %2227 = vmatprep.mubr.f32.mxu0 0.0
    %2228 = vmatmul.mubr.f32.gmra.mrb[0].mxu0 %v2126
    %v2229 = vpop.f32.mrb[0].mxu0
    %v2230 = vadd.f32 %v2101, %v2229
    %v2231 = vpop.f32.mrb[0].mxu0
    %2232 = vdwg.mxu0
    %2233 = vset.pattern.permute.xlu0 32
    %2234 = vperm.xlu0 %2233, %v1959
    %v2235 = vpop.permute.xlu0 %2234
    %2237 = vset.pattern.permute.xlu0 32
    %2238 = vperm.xlu0 %2237, %v1960
    %v2239 = vpop.permute.xlu0 %2238
    %2241 = vset.pattern.permute.xlu0 32
    %2242 = vperm.xlu0 %2241, %v1961
    %v2243 = vpop.permute.xlu0 %2242
    %2245 = vset.pattern.permute.xlu0 32
    %2246 = vperm.xlu0 %2245, %v1962
    %v2247 = vpop.permute.xlu0 %2246
    %2249 = vset.pattern.permute.xlu0 32
    %2250 = vperm.xlu0 %2249, %v1963
    %v2251 = vpop.permute.xlu0 %2250
    %2253 = vset.pattern.permute.xlu0 32
    %2254 = vperm.xlu0 %2253, %v1964
    %v2255 = vpop.permute.xlu0 %2254
    %2257 = vset.pattern.permute.xlu0 32
    %2258 = vperm.xlu0 %2257, %v1965
    %v2259 = vpop.permute.xlu0 %2258
    %2261 = vset.pattern.permute.xlu0 32
    %2262 = vperm.xlu0 %2261, %v1966
    %v2263 = vpop.permute.xlu0 %2262
    %v2265 = vadd.f32 %v2195, %v2235
    %v2266 = vadd.f32 %v2200, %v2239
    %v2267 = vadd.f32 %v2205, %v2243
    %v2268 = vadd.f32 %v2210, %v2247
    %v2269 = vadd.f32 %v2215, %v2251
    %v2270 = vadd.f32 %v2220, %v2255
    %v2271 = vadd.f32 %v2225, %v2259
    %v2272 = vadd.f32 %v2230, %v2263
    %v2273 = vxor.u32 %v2265, 2147483648
    %v2274 = vxor.u32 %v2266, 2147483648
    %v2275 = vxor.u32 %v2267, 2147483648
    %v2276 = vxor.u32 %v2268, 2147483648
    %v2277 = vxor.u32 %v2269, 2147483648
    %v2278 = vxor.u32 %v2270, 2147483648
    %v2279 = vxor.u32 %v2271, 2147483648
    %v2280 = vxor.u32 %v2272, 2147483648
    %v2281 = vmul.f32 %v2273, 1.442695
    %v2282 = vpow.pop %v2281
    %v2283 = vmul.f32 %v2274, 1.442695
    %v2284 = vpow.pop %v2283
    %v2285 = vmul.f32 %v2275, 1.442695
    %v2286 = vpow.pop %v2285
    %v2287 = vmul.f32 %v2276, 1.442695
    %v2288 = vpow.pop %v2287
    %v2289 = vmul.f32 %v2277, 1.442695
    %v2290 = vpow.pop %v2289
    %v2291 = vmul.f32 %v2278, 1.442695
    %v2292 = vpow.pop %v2291
    %v2293 = vmul.f32 %v2279, 1.442695
    %v2294 = vpow.pop %v2293
    %v2295 = vmul.f32 %v2280, 1.442695
    %v2296 = vpow.pop %v2295
    %v2297 = vadd.f32 %v2282, 1.0
    %v2298 = vadd.f32 %v2284, 1.0
    %v2299 = vadd.f32 %v2286, 1.0
    %v2300 = vadd.f32 %v2288, 1.0
    %v2301 = vadd.f32 %v2290, 1.0
    %v2302 = vadd.f32 %v2292, 1.0
    %v2303 = vadd.f32 %v2294, 1.0
    %v2304 = vadd.f32 %v2296, 1.0
    %v2305 = vrcp.pop %v2297
    %v2306 = vmul.f32 1.0, %v2305
    %v2307 = vrcp.pop %v2298
    %v2308 = vmul.f32 1.0, %v2307
    %v2309 = vrcp.pop %v2299
    %v2310 = vmul.f32 1.0, %v2309
    %v2311 = vrcp.pop %v2300
    %v2312 = vmul.f32 1.0, %v2311
    %v2313 = vrcp.pop %v2301
    %v2314 = vmul.f32 1.0, %v2313
    %v2315 = vrcp.pop %v2302
    %v2316 = vmul.f32 1.0, %v2315
    %v2317 = vrcp.pop %v2303
    %v2318 = vmul.f32 1.0, %v2317
    %v2319 = vrcp.pop %v2304
    %v2320 = vmul.f32 1.0, %v2319
    %v2321 = vmul.f32 %v2265, %v2306
    %v2322 = vmul.f32 %v2266, %v2308
    %v2323 = vmul.f32 %v2267, %v2310
    %v2324 = vmul.f32 %v2268, %v2312
    %v2325 = vmul.f32 %v2269, %v2314
    %v2326 = vmul.f32 %v2270, %v2316
    %v2327 = vmul.f32 %v2271, %v2318
    %v2328 = vmul.f32 %v2272, %v2320
    %v2329 = vld [vmem:[#allocation2 + $0xd0] sm:$0xff]
    %v2330 = vld [vmem:[#allocation2 + $0xd8] sm:$0xff]
    %v2331 = vld [vmem:[#allocation2 + $0xe0] sm:$0xff]
    %v2332 = vld [vmem:[#allocation2 + $0xe8] sm:$0xff]
    %2334 = vset.pattern.permute.xlu0 64
    %2335 = vperm.xlu0 %2334, %v2329
    %v2336 = vpop.permute.xlu0 %2335
    %2339 = vset.pattern.permute.xlu0 64
    %2340 = vperm.xlu0 %2339, %v2330
    %v2341 = vpop.permute.xlu0 %2340
    %2344 = vset.pattern.permute.xlu0 64
    %2345 = vperm.xlu0 %2344, %v2331
    %v2346 = vpop.permute.xlu0 %2345
    %2349 = vset.pattern.permute.xlu0 64
    %2350 = vperm.xlu0 %2349, %v2332
    %v2351 = vpop.permute.xlu0 %2350
    %vm2353 = vcmask 523264
    %v2354 = vsel %vm2353, %v2329, 0
    %v2356 = vsel %vm2353, %v2330, 0
    %v2358 = vsel %vm2353, %v2331, 0
    %v2360 = vsel %vm2353, %v2332, 0
    %2362 = vmatprep.subr.mxu0 0.0
    %2363 = vmatpush1.msra.mxu0 %v2321
    %2364 = vmatprep.subr.mxu0 0.0
    %2365 = vmatpush1.msra.mxu0 %v2322
    %2366 = vmatprep.subr.mxu0 0.0
    %2367 = vmatpush1.msra.mxu0 %v2323
    %2368 = vmatprep.subr.mxu0 0.0
    %2369 = vmatpush1.msra.mxu0 %v2324
    %2370 = vmatprep.subr.mxu0 0.0
    %2371 = vmatpush1.msra.mxu0 %v2325
    %2372 = vmatprep.subr.mxu0 0.0
    %2373 = vmatpush1.msra.mxu0 %v2326
    %2374 = vmatprep.subr.mxu0 0.0
    %2375 = vmatpush1.msra.mxu0 %v2327
    %2376 = vmatprep.subr.mxu0 0.0
    %2377 = vmatpush1.msra.mxu0 %v2328
    %2378 = vmatprep.subr.mxu0 0.0
    %2379 = vmatpush1.msra.mxu0 0.0
    %2380 = vmatprep.subr.mxu0 0.0
    %2381 = vmatpush1.msra.mxu0 0.0
    %2382 = vmatprep.subr.mxu0 0.0
    %2383 = vmatpush1.msra.mxu0 0.0
    %2384 = vmatprep.subr.mxu0 0.0
    %2385 = vmatpush1.msra.mxu0 0.0
    %2386 = vmatprep.subr.mxu0 0.0
    %2387 = vmatpush1.msra.mxu0 0.0
    %2388 = vmatprep.subr.mxu0 0.0
    %2389 = vmatpush1.msra.mxu0 0.0
    %2390 = vmatprep.subr.mxu0 0.0
    %2391 = vmatpush1.msra.mxu0 0.0
    %2392 = vmatprep.subr.mxu0 0.0
    %2393 = vmatpush1.msra.mxu0 0.0
    %2394 = vmatprep.subr.mxu0 0.0
    %2395 = vmatpush1.msra.mxu0 0.0
    %2396 = vmatprep.subr.mxu0 0.0
    %2397 = vmatpush1.msra.mxu0 0.0
    %2398 = vmatprep.subr.mxu0 0.0
    %2399 = vmatpush1.msra.mxu0 0.0
    %2400 = vmatprep.subr.mxu0 0.0
    %2401 = vmatpush1.msra.mxu0 0.0
    %2402 = vmatprep.subr.mxu0 0.0
    %2403 = vmatpush1.msra.mxu0 0.0
    %2404 = vmatprep.subr.mxu0 0.0
    %2405 = vmatpush1.msra.mxu0 0.0
    %2406 = vmatprep.subr.mxu0 0.0
    %2407 = vmatpush1.msra.mxu0 0.0
    %2408 = vmatprep.subr.mxu0 0.0
    %2409 = vmatpush1.msra.mxu0 0.0
    %2410 = vmatprep.subr.mxu0 0.0
    %2411 = vmatpush1.msra.mxu0 0.0
    %2412 = vmatprep.subr.mxu0 0.0
    %2413 = vmatpush1.msra.mxu0 0.0
    %2414 = vmatprep.subr.mxu0 0.0
    %2415 = vmatpush1.msra.mxu0 0.0
    %2416 = vmatprep.subr.mxu0 0.0
    %2417 = vmatpush1.msra.mxu0 0.0
    %2418 = vmatprep.subr.mxu0 0.0
    %2419 = vmatpush1.msra.mxu0 0.0
    %2420 = vmatprep.subr.mxu0 0.0
    %2421 = vmatpush1.msra.mxu0 0.0
    %2422 = vmatprep.subr.mxu0 0.0
    %2423 = vmatpush1.msra.mxu0 0.0
    %2424 = vmatprep.subr.mxu0 0.0
    %2425 = vmatpush1.msra.mxu0 0.0
    %2426 = vmatprep.mubr.f32.mxu0 0.0
    %2427 = vmatmul.mubr.f32.gmra.mrb[0].mxu0 %v2354
    %v2428 = vpop.f32.mrb[0].mxu0
    %v2429 = vadd.f32 %v2336, %v2428
    %v2430 = vpop.f32.mrb[0].mxu0
    %2431 = vmatprep.mubr.f32.mxu0 0.0
    %2432 = vmatmul.mubr.f32.gmra.mrb[0].mxu0 %v2356
    %v2433 = vpop.f32.mrb[0].mxu0
    %v2434 = vadd.f32 %v2341, %v2433
    %v2435 = vpop.f32.mrb[0].mxu0
    %2436 = vmatprep.mubr.f32.mxu0 0.0
    %2437 = vmatmul.mubr.f32.gmra.mrb[0].mxu0 %v2358
    %v2438 = vpop.f32.mrb[0].mxu0
    %v2439 = vadd.f32 %v2346, %v2438
    %v2440 = vpop.f32.mrb[0].mxu0
    %2441 = vmatprep.mubr.f32.mxu0 0.0
    %2442 = vmatmul.mubr.f32.gmra.mrb[0].mxu0 %v2360
    %v2443 = vpop.f32.mrb[0].mxu0
    %v2444 = vadd.f32 %v2351, %v2443
    %v2445 = vpop.f32.mrb[0].mxu0
    %2446 = vdwg.mxu0
    %v2447 = vadd.f32 %v2429, %v1019
    %v2448 = vadd.f32 %v2434, %v1024
    %v2449 = vadd.f32 %v2439, %v1029
    %v2450 = vadd.f32 %v2444, %v1034
    %v2451 = vld [vmem:[#allocation2 + $0xf0] sm:$0xff]
    %v2452 = vld [vmem:[#allocation2 + $0xf8] sm:$0xff]
    %v2453 = vld [vmem:[#allocation2 + $0x100] sm:$0xff]
    %v2454 = vld [vmem:[#allocation2 + $0x108] sm:$0xff]
    %v2456 = vsel %vm527, %v2451, 0
    %v2459 = vsel %vm527, %v2452, 0
    %v2462 = vsel %vm527, %v2453, 0
    %v2465 = vsel %vm527, %v2454, 0
    %2467 = vmatprep.subr.mxu0 0.0
    %2468 = vmatpush1.msra.mxu0 %v2447
    %2469 = vmatprep.subr.mxu0 0.0
    %2470 = vmatpush1.msra.mxu0 %v2448
    %2471 = vmatprep.subr.mxu0 0.0
    %2472 = vmatpush1.msra.mxu0 %v2449
    %2473 = vmatprep.subr.mxu0 0.0
    %2474 = vmatpush1.msra.mxu0 %v2450
    %2475 = vmatprep.subr.mxu0 0.0
    %2476 = vmatpush1.msra.mxu0 0.0
    %2477 = vmatprep.subr.mxu0 0.0
    %2478 = vmatpush1.msra.mxu0 0.0
    %2479 = vmatprep.subr.mxu0 0.0
    %2480 = vmatpush1.msra.mxu0 0.0
    %2481 = vmatprep.subr.mxu0 0.0
    %2482 = vmatpush1.msra.mxu0 0.0
    %2483 = vmatprep.subr.mxu0 0.0
    %2484 = vmatpush1.msra.mxu0 0.0
    %2485 = vmatprep.subr.mxu0 0.0
    %2486 = vmatpush1.msra.mxu0 0.0
    %2487 = vmatprep.subr.mxu0 0.0
    %2488 = vmatpush1.msra.mxu0 0.0
    %2489 = vmatprep.subr.mxu0 0.0
    %2490 = vmatpush1.msra.mxu0 0.0
    %2491 = vmatprep.subr.mxu0 0.0
    %2492 = vmatpush1.msra.mxu0 0.0
    %2493 = vmatprep.subr.mxu0 0.0
    %2494 = vmatpush1.msra.mxu0 0.0
    %2495 = vmatprep.subr.mxu0 0.0
    %2496 = vmatpush1.msra.mxu0 0.0
    %2497 = vmatprep.subr.mxu0 0.0
    %2498 = vmatpush1.msra.mxu0 0.0
    %2499 = vmatprep.subr.mxu0 0.0
    %2500 = vmatpush1.msra.mxu0 0.0
    %2501 = vmatprep.subr.mxu0 0.0
    %2502 = vmatpush1.msra.mxu0 0.0
    %2503 = vmatprep.subr.mxu0 0.0
    %2504 = vmatpush1.msra.mxu0 0.0
    %2505 = vmatprep.subr.mxu0 0.0
    %2506 = vmatpush1.msra.mxu0 0.0
    %2507 = vmatprep.subr.mxu0 0.0
    %2508 = vmatpush1.msra.mxu0 0.0
    %2509 = vmatprep.subr.mxu0 0.0
    %2510 = vmatpush1.msra.mxu0 0.0
    %2511 = vmatprep.subr.mxu0 0.0
    %2512 = vmatpush1.msra.mxu0 0.0
    %2513 = vmatprep.subr.mxu0 0.0
    %2514 = vmatpush1.msra.mxu0 0.0
    %2515 = vmatprep.subr.mxu0 0.0
    %2516 = vmatpush1.msra.mxu0 0.0
    %2517 = vmatprep.subr.mxu0 0.0
    %2518 = vmatpush1.msra.mxu0 0.0
    %2519 = vmatprep.subr.mxu0 0.0
    %2520 = vmatpush1.msra.mxu0 0.0
    %2521 = vmatprep.subr.mxu0 0.0
    %2522 = vmatpush1.msra.mxu0 0.0
    %2523 = vmatprep.subr.mxu0 0.0
    %2524 = vmatpush1.msra.mxu0 0.0
    %2525 = vmatprep.subr.mxu0 0.0
    %2526 = vmatpush1.msra.mxu0 0.0
    %2527 = vmatprep.subr.mxu0 0.0
    %2528 = vmatpush1.msra.mxu0 0.0
    %2529 = vmatprep.subr.mxu0 0.0
    %2530 = vmatpush1.msra.mxu0 0.0
    %2531 = vmatprep.mubr.f32.mxu0 0.0
    %2532 = vmatmul.mubr.f32.gmra.mrb[0].mxu0 %v2456
    %v2533 = vpop.f32.mrb[0].mxu0
    %v2534 = vadd.f32 0.0, %v2533
    %v2535 = vpop.f32.mrb[0].mxu0
    %2536 = vmatprep.mubr.f32.mxu0 0.0
    %2537 = vmatmul.mubr.f32.gmra.mrb[0].mxu0 %v2459
    %v2538 = vpop.f32.mrb[0].mxu0
    %v2539 = vadd.f32 0.0, %v2538
    %v2540 = vpop.f32.mrb[0].mxu0
    %2541 = vmatprep.mubr.f32.mxu0 0.0
    %2542 = vmatmul.mubr.f32.gmra.mrb[0].mxu0 %v2462
    %v2543 = vpop.f32.mrb[0].mxu0
    %v2544 = vadd.f32 0.0, %v2543
    %v2545 = vpop.f32.mrb[0].mxu0
    %2546 = vmatprep.mubr.f32.mxu0 0.0
    %2547 = vmatmul.mubr.f32.gmra.mrb[0].mxu0 %v2465
    %v2548 = vpop.f32.mrb[0].mxu0
    %v2549 = vadd.f32 0.0, %v2548
    %v2550 = vpop.f32.mrb[0].mxu0
    %2551 = vdwg.mxu0
    %v2553 = vsel %vm527, %v2544, 0
    %v2556 = vsel %vm527, %v2549, 0
    %2558 = vmatprep.subr.mxu0 %v37
    %2559 = vmatpush1.msra.mxu0 %v36
    %2560 = vmatprep.subr.mxu0 %v41
    %2561 = vmatpush1.msra.mxu0 %v40
    %2562 = vmatprep.subr.mxu0 %v45
    %2563 = vmatpush1.msra.mxu0 %v44
    %2564 = vmatprep.subr.mxu0 %v49
    %2565 = vmatpush1.msra.mxu0 %v48
    %2566 = vmatprep.subr.mxu0 0.0
    %2567 = vmatpush1.msra.mxu0 0.0
    %2568 = vmatprep.subr.mxu0 0.0
    %2569 = vmatpush1.msra.mxu0 0.0
    %2570 = vmatprep.subr.mxu0 0.0
    %2571 = vmatpush1.msra.mxu0 0.0
    %2572 = vmatprep.subr.mxu0 0.0
    %2573 = vmatpush1.msra.mxu0 0.0
    %2574 = vmatprep.subr.mxu0 0.0
    %2575 = vmatpush1.msra.mxu0 0.0
    %2576 = vmatprep.subr.mxu0 0.0
    %2577 = vmatpush1.msra.mxu0 0.0
    %2578 = vmatprep.subr.mxu0 0.0
    %2579 = vmatpush1.msra.mxu0 0.0
    %2580 = vmatprep.subr.mxu0 0.0
    %2581 = vmatpush1.msra.mxu0 0.0
    %2582 = vmatprep.subr.mxu0 0.0
    %2583 = vmatpush1.msra.mxu0 0.0
    %2584 = vmatprep.subr.mxu0 0.0
    %2585 = vmatpush1.msra.mxu0 0.0
    %2586 = vmatprep.subr.mxu0 0.0
    %2587 = vmatpush1.msra.mxu0 0.0
    %2588 = vmatprep.subr.mxu0 0.0
    %2589 = vmatpush1.msra.mxu0 0.0
    %2590 = vmatprep.subr.mxu0 0.0
    %2591 = vmatpush1.msra.mxu0 0.0
    %2592 = vmatprep.subr.mxu0 0.0
    %2593 = vmatpush1.msra.mxu0 0.0
    %2594 = vmatprep.subr.mxu0 0.0
    %2595 = vmatpush1.msra.mxu0 0.0
    %2596 = vmatprep.subr.mxu0 0.0
    %2597 = vmatpush1.msra.mxu0 0.0
    %2598 = vmatprep.subr.mxu0 0.0
    %2599 = vmatpush1.msra.mxu0 0.0
    %2600 = vmatprep.subr.mxu0 0.0
    %2601 = vmatpush1.msra.mxu0 0.0
    %2602 = vmatprep.subr.mxu0 0.0
    %2603 = vmatpush1.msra.mxu0 0.0
    %2604 = vmatprep.subr.mxu0 0.0
    %2605 = vmatpush1.msra.mxu0 0.0
    %2606 = vmatprep.subr.mxu0 0.0
    %2607 = vmatpush1.msra.mxu0 0.0
    %2608 = vmatprep.subr.mxu0 0.0
    %2609 = vmatpush1.msra.mxu0 0.0
    %2610 = vmatprep.subr.mxu0 0.0
    %2611 = vmatpush1.msra.mxu0 0.0
    %2612 = vmatprep.subr.mxu0 0.0
    %2613 = vmatpush1.msra.mxu0 0.0
    %2614 = vmatprep.subr.mxu0 0.0
    %2615 = vmatpush1.msra.mxu0 0.0
    %2616 = vmatprep.subr.mxu0 0.0
    %2617 = vmatpush1.msra.mxu0 0.0
    %2618 = vmatprep.subr.mxu0 0.0
    %2619 = vmatpush1.msra.mxu0 0.0
    %2620 = vmatprep.subr.mxu0 0.0
    %2621 = vmatpush1.msra.mxu0 0.0
    %2622 = vmatprep.mubr.f32.mxu0 0.0
    %2623 = vmatmul.mubr.f32.gmra.mrb[0].mxu0 %v2553
    %v2624 = vpop.f32.mrb[0].mxu0
    %v2625 = vadd.f32 0.0, %v2624
    %v2626 = vpop.f32.mrb[0].mxu0
    %v2627 = vadd.f32 0.0, %v2626
    %2628 = vmatprep.mubr.f32.mxu0 0.0
    %2629 = vmatmul.mubr.f32.gmra.mrb[0].mxu0 %v2556
    %v2630 = vpop.f32.mrb[0].mxu0
    %v2631 = vadd.f32 0.0, %v2630
    %v2632 = vpop.f32.mrb[0].mxu0
    %v2633 = vadd.f32 0.0, %v2632
    %2634 = vdwg.mxu0
    %2635 = vmatprep.subr.mxu0 %v39
    %2636 = vmatpush1.msra.mxu0 %v38
    %2637 = vmatprep.subr.mxu0 %v43
    %2638 = vmatpush1.msra.mxu0 %v42
    %2639 = vmatprep.subr.mxu0 %v47
    %2640 = vmatpush1.msra.mxu0 %v46
    %2641 = vmatprep.subr.mxu0 %v51
    %2642 = vmatpush1.msra.mxu0 %v50
    %2643 = vmatprep.subr.mxu0 0.0
    %2644 = vmatpush1.msra.mxu0 0.0
    %2645 = vmatprep.subr.mxu0 0.0
    %2646 = vmatpush1.msra.mxu0 0.0
    %2647 = vmatprep.subr.mxu0 0.0
    %2648 = vmatpush1.msra.mxu0 0.0
    %2649 = vmatprep.subr.mxu0 0.0
    %2650 = vmatpush1.msra.mxu0 0.0
    %2651 = vmatprep.subr.mxu0 0.0
    %2652 = vmatpush1.msra.mxu0 0.0
    %2653 = vmatprep.subr.mxu0 0.0
    %2654 = vmatpush1.msra.mxu0 0.0
    %2655 = vmatprep.subr.mxu0 0.0
    %2656 = vmatpush1.msra.mxu0 0.0
    %2657 = vmatprep.subr.mxu0 0.0
    %2658 = vmatpush1.msra.mxu0 0.0
    %2659 = vmatprep.subr.mxu0 0.0
    %2660 = vmatpush1.msra.mxu0 0.0
    %2661 = vmatprep.subr.mxu0 0.0
    %2662 = vmatpush1.msra.mxu0 0.0
    %2663 = vmatprep.subr.mxu0 0.0
    %2664 = vmatpush1.msra.mxu0 0.0
    %2665 = vmatprep.subr.mxu0 0.0
    %2666 = vmatpush1.msra.mxu0 0.0
    %2667 = vmatprep.subr.mxu0 0.0
    %2668 = vmatpush1.msra.mxu0 0.0
    %2669 = vmatprep.subr.mxu0 0.0
    %2670 = vmatpush1.msra.mxu0 0.0
    %2671 = vmatprep.subr.mxu0 0.0
    %2672 = vmatpush1.msra.mxu0 0.0
    %2673 = vmatprep.subr.mxu0 0.0
    %2674 = vmatpush1.msra.mxu0 0.0
    %2675 = vmatprep.subr.mxu0 0.0
    %2676 = vmatpush1.msra.mxu0 0.0
    %2677 = vmatprep.subr.mxu0 0.0
    %2678 = vmatpush1.msra.mxu0 0.0
    %2679 = vmatprep.subr.mxu0 0.0
    %2680 = vmatpush1.msra.mxu0 0.0
    %2681 = vmatprep.subr.mxu0 0.0
    %2682 = vmatpush1.msra.mxu0 0.0
    %2683 = vmatprep.subr.mxu0 0.0
    %2684 = vmatpush1.msra.mxu0 0.0
    %2685 = vmatprep.subr.mxu0 0.0
    %2686 = vmatpush1.msra.mxu0 0.0
    %2687 = vmatprep.subr.mxu0 0.0
    %2688 = vmatpush1.msra.mxu0 0.0
    %2689 = vmatprep.subr.mxu0 0.0
    %2690 = vmatpush1.msra.mxu0 0.0
    %2691 = vmatprep.subr.mxu0 0.0
    %2692 = vmatpush1.msra.mxu0 0.0
    %2693 = vmatprep.subr.mxu0 0.0
    %2694 = vmatpush1.msra.mxu0 0.0
    %2695 = vmatprep.subr.mxu0 0.0
    %2696 = vmatpush1.msra.mxu0 0.0
    %2697 = vmatprep.subr.mxu0 0.0
    %2698 = vmatpush1.msra.mxu0 0.0
    %2699 = vmatprep.mubr.f32.mxu0 0.0
    %2700 = vmatmul.mubr.f32.gmra.mrb[0].mxu0 %v2553
    %v2701 = vpop.f32.mrb[0].mxu0
    %v2702 = vadd.f32 0.0, %v2701
    %v2703 = vpop.f32.mrb[0].mxu0
    %v2704 = vadd.f32 0.0, %v2703
    %2705 = vmatprep.mubr.f32.mxu0 0.0
    %2706 = vmatmul.mubr.f32.gmra.mrb[0].mxu0 %v2556
    %v2707 = vpop.f32.mrb[0].mxu0
    %v2708 = vadd.f32 0.0, %v2707
    %v2709 = vpop.f32.mrb[0].mxu0
    %v2710 = vadd.f32 0.0, %v2709
    %2711 = vdwg.mxu0
    %v2713 = vsel %vm527, %v2534, 0
    %v2716 = vsel %vm527, %v2539, 0
    %2718 = vmatprep.subr.mxu0 %v131
    %2719 = vmatpush1.msra.mxu0 %v130
    %2720 = vmatprep.subr.mxu0 %v135
    %2721 = vmatpush1.msra.mxu0 %v134
    %2722 = vmatprep.subr.mxu0 %v139
    %2723 = vmatpush1.msra.mxu0 %v138
    %2724 = vmatprep.subr.mxu0 %v143
    %2725 = vmatpush1.msra.mxu0 %v142
    %2726 = vmatprep.subr.mxu0 0.0
    %2727 = vmatpush1.msra.mxu0 0.0
    %2728 = vmatprep.subr.mxu0 0.0
    %2729 = vmatpush1.msra.mxu0 0.0
    %2730 = vmatprep.subr.mxu0 0.0
    %2731 = vmatpush1.msra.mxu0 0.0
    %2732 = vmatprep.subr.mxu0 0.0
    %2733 = vmatpush1.msra.mxu0 0.0
    %2734 = vmatprep.subr.mxu0 0.0
    %2735 = vmatpush1.msra.mxu0 0.0
    %2736 = vmatprep.subr.mxu0 0.0
    %2737 = vmatpush1.msra.mxu0 0.0
    %2738 = vmatprep.subr.mxu0 0.0
    %2739 = vmatpush1.msra.mxu0 0.0
    %2740 = vmatprep.subr.mxu0 0.0
    %2741 = vmatpush1.msra.mxu0 0.0
    %2742 = vmatprep.subr.mxu0 0.0
    %2743 = vmatpush1.msra.mxu0 0.0
    %2744 = vmatprep.subr.mxu0 0.0
    %2745 = vmatpush1.msra.mxu0 0.0
    %2746 = vmatprep.subr.mxu0 0.0
    %2747 = vmatpush1.msra.mxu0 0.0
    %2748 = vmatprep.subr.mxu0 0.0
    %2749 = vmatpush1.msra.mxu0 0.0
    %2750 = vmatprep.subr.mxu0 0.0
    %2751 = vmatpush1.msra.mxu0 0.0
    %2752 = vmatprep.subr.mxu0 0.0
    %2753 = vmatpush1.msra.mxu0 0.0
    %2754 = vmatprep.subr.mxu0 0.0
    %2755 = vmatpush1.msra.mxu0 0.0
    %2756 = vmatprep.subr.mxu0 0.0
    %2757 = vmatpush1.msra.mxu0 0.0
    %2758 = vmatprep.subr.mxu0 0.0
    %2759 = vmatpush1.msra.mxu0 0.0
    %2760 = vmatprep.subr.mxu0 0.0
    %2761 = vmatpush1.msra.mxu0 0.0
    %2762 = vmatprep.subr.mxu0 0.0
    %2763 = vmatpush1.msra.mxu0 0.0
    %2764 = vmatprep.subr.mxu0 0.0
    %2765 = vmatpush1.msra.mxu0 0.0
    %2766 = vmatprep.subr.mxu0 0.0
    %2767 = vmatpush1.msra.mxu0 0.0
    %2768 = vmatprep.subr.mxu0 0.0
    %2769 = vmatpush1.msra.mxu0 0.0
    %2770 = vmatprep.subr.mxu0 0.0
    %2771 = vmatpush1.msra.mxu0 0.0
    %2772 = vmatprep.subr.mxu0 0.0
    %2773 = vmatpush1.msra.mxu0 0.0
    %2774 = vmatprep.subr.mxu0 0.0
    %2775 = vmatpush1.msra.mxu0 0.0
    %2776 = vmatprep.subr.mxu0 0.0
    %2777 = vmatpush1.msra.mxu0 0.0
    %2778 = vmatprep.subr.mxu0 0.0
    %2779 = vmatpush1.msra.mxu0 0.0
    %2780 = vmatprep.subr.mxu0 0.0
    %2781 = vmatpush1.msra.mxu0 0.0
    %2782 = vmatprep.mubr.f32.mxu0 0.0
    %2783 = vmatmul.mubr.f32.gmra.mrb[0].mxu0 %v2713
    %v2784 = vpop.f32.mrb[0].mxu0
    %v2785 = vadd.f32 %v2625, %v2784
    %v2786 = vpop.f32.mrb[0].mxu0
    %v2787 = vadd.f32 %v2627, %v2786
    %2788 = vmatprep.mubr.f32.mxu0 0.0
    %2789 = vmatmul.mubr.f32.gmra.mrb[0].mxu0 %v2716
    %v2790 = vpop.f32.mrb[0].mxu0
    %v2791 = vadd.f32 %v2631, %v2790
    %v2792 = vpop.f32.mrb[0].mxu0
    %v2793 = vadd.f32 %v2633, %v2792
    %2794 = vdwg.mxu0
    %2795 = vmatprep.subr.mxu0 %v133
    %2796 = vmatpush1.msra.mxu0 %v132
    %2797 = vmatprep.subr.mxu0 %v137
    %2798 = vmatpush1.msra.mxu0 %v136
    %2799 = vmatprep.subr.mxu0 %v141
    %2800 = vmatpush1.msra.mxu0 %v140
    %2801 = vmatprep.subr.mxu0 %v145
    %2802 = vmatpush1.msra.mxu0 %v144
    %2803 = vmatprep.subr.mxu0 0.0
    %2804 = vmatpush1.msra.mxu0 0.0
    %2805 = vmatprep.subr.mxu0 0.0
    %2806 = vmatpush1.msra.mxu0 0.0
    %2807 = vmatprep.subr.mxu0 0.0
    %2808 = vmatpush1.msra.mxu0 0.0
    %2809 = vmatprep.subr.mxu0 0.0
    %2810 = vmatpush1.msra.mxu0 0.0
    %2811 = vmatprep.subr.mxu0 0.0
    %2812 = vmatpush1.msra.mxu0 0.0
    %2813 = vmatprep.subr.mxu0 0.0
    %2814 = vmatpush1.msra.mxu0 0.0
    %2815 = vmatprep.subr.mxu0 0.0
    %2816 = vmatpush1.msra.mxu0 0.0
    %2817 = vmatprep.subr.mxu0 0.0
    %2818 = vmatpush1.msra.mxu0 0.0
    %2819 = vmatprep.subr.mxu0 0.0
    %2820 = vmatpush1.msra.mxu0 0.0
    %2821 = vmatprep.subr.mxu0 0.0
    %2822 = vmatpush1.msra.mxu0 0.0
    %2823 = vmatprep.subr.mxu0 0.0
    %2824 = vmatpush1.msra.mxu0 0.0
    %2825 = vmatprep.subr.mxu0 0.0
    %2826 = vmatpush1.msra.mxu0 0.0
    %2827 = vmatprep.subr.mxu0 0.0
    %2828 = vmatpush1.msra.mxu0 0.0
    %2829 = vmatprep.subr.mxu0 0.0
    %2830 = vmatpush1.msra.mxu0 0.0
    %2831 = vmatprep.subr.mxu0 0.0
    %2832 = vmatpush1.msra.mxu0 0.0
    %2833 = vmatprep.subr.mxu0 0.0
    %2834 = vmatpush1.msra.mxu0 0.0
    %2835 = vmatprep.subr.mxu0 0.0
    %2836 = vmatpush1.msra.mxu0 0.0
    %2837 = vmatprep.subr.mxu0 0.0
    %2838 = vmatpush1.msra.mxu0 0.0
    %2839 = vmatprep.subr.mxu0 0.0
    %2840 = vmatpush1.msra.mxu0 0.0
    %2841 = vmatprep.subr.mxu0 0.0
    %2842 = vmatpush1.msra.mxu0 0.0
    %2843 = vmatprep.subr.mxu0 0.0
    %2844 = vmatpush1.msra.mxu0 0.0
    %2845 = vmatprep.subr.mxu0 0.0
    %2846 = vmatpush1.msra.mxu0 0.0
    %2847 = vmatprep.subr.mxu0 0.0
    %2848 = vmatpush1.msra.mxu0 0.0
    %2849 = vmatprep.subr.mxu0 0.0
    %2850 = vmatpush1.msra.mxu0 0.0
    %2851 = vmatprep.subr.mxu0 0.0
    %2852 = vmatpush1.msra.mxu0 0.0
    %2853 = vmatprep.subr.mxu0 0.0
    %2854 = vmatpush1.msra.mxu0 0.0
    %2855 = vmatprep.subr.mxu0 0.0
    %2856 = vmatpush1.msra.mxu0 0.0
    %2857 = vmatprep.subr.mxu0 0.0
    %2858 = vmatpush1.msra.mxu0 0.0
    %2859 = vmatprep.mubr.f32.mxu0 0.0
    %2860 = vmatmul.mubr.f32.gmra.mrb[0].mxu0 %v2713
    %v2861 = vpop.f32.mrb[0].mxu0
    %v2862 = vadd.f32 %v2702, %v2861
    %v2863 = vpop.f32.mrb[0].mxu0
    %v2864 = vadd.f32 %v2704, %v2863
    %2865 = vmatprep.mubr.f32.mxu0 0.0
    %2866 = vmatmul.mubr.f32.gmra.mrb[0].mxu0 %v2716
    %v2867 = vpop.f32.mrb[0].mxu0
    %v2868 = vadd.f32 %v2708, %v2867
    %v2869 = vpop.f32.mrb[0].mxu0
    %v2870 = vadd.f32 %v2710, %v2869
    %2871 = vdwg.mxu0
    %v2872 = vld [vmem:[#allocation2 + $0xf0] sm:$0xff]
    %v2873 = vld [vmem:[#allocation2 + $0xf8] sm:$0xff]
    %2875 = vset.pattern.permute.xlu0 32
    %2876 = vperm.xlu0 %2875, %v2872
    %v2877 = vpop.permute.xlu0 %2876
    %2880 = vset.pattern.permute.xlu0 32
    %2881 = vperm.xlu0 %2880, %v2873
    %v2882 = vpop.permute.xlu0 %2881
    %v2884 = vmul.f32 %v2877, %v830
    %v2885 = vmul.f32 %v2877, %v837
    %v2886 = vmul.f32 %v2877, %v844
    %v2887 = vmul.f32 %v2877, %v851
    %v2888 = vmul.f32 %v2882, %v830
    %v2889 = vmul.f32 %v2882, %v837
    %v2890 = vmul.f32 %v2882, %v844
    %v2891 = vmul.f32 %v2882, %v851
    %v2892 = vadd.f32 %v2785, %v2884
    %v2893 = vadd.f32 %v2787, %v2885
    %v2894 = vadd.f32 %v2862, %v2886
    %v2895 = vadd.f32 %v2864, %v2887
    %v2896 = vadd.f32 %v2791, %v2888
    %v2897 = vadd.f32 %v2793, %v2889
    %v2898 = vadd.f32 %v2868, %v2890
    %v2899 = vadd.f32 %v2870, %v2891
    %2900 = vset.pattern.permute.xlu0 33
    %2901 = vperm.xlu0 %2900, %v2872
    %v2902 = vpop.permute.xlu0 %2901
    %2904 = vset.pattern.permute.xlu0 33
    %2905 = vperm.xlu0 %2904, %v2873
    %v2906 = vpop.permute.xlu0 %2905
    %v2908 = vadd.f32 %v2892, %v2902
    %v2909 = vadd.f32 %v2893, %v2902
    %v2910 = vadd.f32 %v2894, %v2902
    %v2911 = vadd.f32 %v2895, %v2902
    %v2912 = vadd.f32 %v2896, %v2906
    %v2913 = vadd.f32 %v2897, %v2906
    %v2914 = vadd.f32 %v2898, %v2906
    %v2915 = vadd.f32 %v2899, %v2906
    %v2916 = vxor.u32 %v2908, 2147483648
    %v2917 = vxor.u32 %v2909, 2147483648
    %v2918 = vxor.u32 %v2910, 2147483648
    %v2919 = vxor.u32 %v2911, 2147483648
    %v2920 = vxor.u32 %v2912, 2147483648
    %v2921 = vxor.u32 %v2913, 2147483648
    %v2922 = vxor.u32 %v2914, 2147483648
    %v2923 = vxor.u32 %v2915, 2147483648
    %v2924 = vmul.f32 %v2916, 1.442695
    %v2925 = vpow.pop %v2924
    %v2926 = vmul.f32 %v2917, 1.442695
    %v2927 = vpow.pop %v2926
    %v2928 = vmul.f32 %v2918, 1.442695
    %v2929 = vpow.pop %v2928
    %v2930 = vmul.f32 %v2919, 1.442695
    %v2931 = vpow.pop %v2930
    %v2932 = vmul.f32 %v2920, 1.442695
    %v2933 = vpow.pop %v2932
    %v2934 = vmul.f32 %v2921, 1.442695
    %v2935 = vpow.pop %v2934
    %v2936 = vmul.f32 %v2922, 1.442695
    %v2937 = vpow.pop %v2936
    %v2938 = vmul.f32 %v2923, 1.442695
    %v2939 = vpow.pop %v2938
    %v2940 = vadd.f32 %v2925, 1.0
    %v2941 = vadd.f32 %v2927, 1.0
    %v2942 = vadd.f32 %v2929, 1.0
    %v2943 = vadd.f32 %v2931, 1.0
    %v2944 = vadd.f32 %v2933, 1.0
    %v2945 = vadd.f32 %v2935, 1.0
    %v2946 = vadd.f32 %v2937, 1.0
    %v2947 = vadd.f32 %v2939, 1.0
    %v2948 = vrcp.pop %v2940
    %v2949 = vmul.f32 1.0, %v2948
    %v2950 = vrcp.pop %v2941
    %v2951 = vmul.f32 1.0, %v2950
    %v2952 = vrcp.pop %v2942
    %v2953 = vmul.f32 1.0, %v2952
    %v2954 = vrcp.pop %v2943
    %v2955 = vmul.f32 1.0, %v2954
    %v2956 = vrcp.pop %v2944
    %v2957 = vmul.f32 1.0, %v2956
    %v2958 = vrcp.pop %v2945
    %v2959 = vmul.f32 1.0, %v2958
    %v2960 = vrcp.pop %v2946
    %v2961 = vmul.f32 1.0, %v2960
    %v2962 = vrcp.pop %v2947
    %v2963 = vmul.f32 1.0, %v2962
    %v2964 = vmul.f32 %v2908, %v2949
    %v2965 = vmul.f32 %v2909, %v2951
    %v2966 = vmul.f32 %v2910, %v2953
    %v2967 = vmul.f32 %v2911, %v2955
    %v2968 = vmul.f32 %v2912, %v2957
    %v2969 = vmul.f32 %v2913, %v2959
    %v2970 = vmul.f32 %v2914, %v2961
    %v2971 = vmul.f32 %v2915, %v2963
    %v2972 = vld [vmem:[#allocation2 + $0x110] sm:$0xff]
    %v2973 = vld [vmem:[#allocation2 + $0x118] sm:$0xff]
    %2975 = vset.pattern.permute.xlu0 16
    %2976 = vperm.xlu0 %2975, %v2972
    %v2977 = vpop.permute.xlu0 %2976
    %2980 = vset.pattern.permute.xlu0 16
    %2981 = vperm.xlu0 %2980, %v2973
    %v2982 = vpop.permute.xlu0 %2981
    %v2984 = vsel %vm1570, %v2972, 0
    %v2986 = vsel %vm1570, %v2973, 0
    %2988 = vmatprep.subr.mxu0 %v2965
    %2989 = vmatpush1.msra.mxu0 %v2964
    %2990 = vmatprep.subr.mxu0 %v2969
    %2991 = vmatpush1.msra.mxu0 %v2968
    %2992 = vmatprep.subr.mxu0 0.0
    %2993 = vmatpush1.msra.mxu0 0.0
    %2994 = vmatprep.subr.mxu0 0.0
    %2995 = vmatpush1.msra.mxu0 0.0
    %2996 = vmatprep.subr.mxu0 0.0
    %2997 = vmatpush1.msra.mxu0 0.0
    %2998 = vmatprep.subr.mxu0 0.0
    %2999 = vmatpush1.msra.mxu0 0.0
    %3000 = vmatprep.subr.mxu0 0.0
    %3001 = vmatpush1.msra.mxu0 0.0
    %3002 = vmatprep.subr.mxu0 0.0
    %3003 = vmatpush1.msra.mxu0 0.0
    %3004 = vmatprep.subr.mxu0 0.0
    %3005 = vmatpush1.msra.mxu0 0.0
    %3006 = vmatprep.subr.mxu0 0.0
    %3007 = vmatpush1.msra.mxu0 0.0
    %3008 = vmatprep.subr.mxu0 0.0
    %3009 = vmatpush1.msra.mxu0 0.0
    %3010 = vmatprep.subr.mxu0 0.0
    %3011 = vmatpush1.msra.mxu0 0.0
    %3012 = vmatprep.subr.mxu0 0.0
    %3013 = vmatpush1.msra.mxu0 0.0
    %3014 = vmatprep.subr.mxu0 0.0
    %3015 = vmatpush1.msra.mxu0 0.0
    %3016 = vmatprep.subr.mxu0 0.0
    %3017 = vmatpush1.msra.mxu0 0.0
    %3018 = vmatprep.subr.mxu0 0.0
    %3019 = vmatpush1.msra.mxu0 0.0
    %3020 = vmatprep.subr.mxu0 0.0
    %3021 = vmatpush1.msra.mxu0 0.0
    %3022 = vmatprep.subr.mxu0 0.0
    %3023 = vmatpush1.msra.mxu0 0.0
    %3024 = vmatprep.subr.mxu0 0.0
    %3025 = vmatpush1.msra.mxu0 0.0
    %3026 = vmatprep.subr.mxu0 0.0
    %3027 = vmatpush1.msra.mxu0 0.0
    %3028 = vmatprep.subr.mxu0 0.0
    %3029 = vmatpush1.msra.mxu0 0.0
    %3030 = vmatprep.subr.mxu0 0.0
    %3031 = vmatpush1.msra.mxu0 0.0
    %3032 = vmatprep.subr.mxu0 0.0
    %3033 = vmatpush1.msra.mxu0 0.0
    %3034 = vmatprep.subr.mxu0 0.0
    %3035 = vmatpush1.msra.mxu0 0.0
    %3036 = vmatprep.subr.mxu0 0.0
    %3037 = vmatpush1.msra.mxu0 0.0
    %3038 = vmatprep.subr.mxu0 0.0
    %3039 = vmatpush1.msra.mxu0 0.0
    %3040 = vmatprep.subr.mxu0 0.0
    %3041 = vmatpush1.msra.mxu0 0.0
    %3042 = vmatprep.subr.mxu0 0.0
    %3043 = vmatpush1.msra.mxu0 0.0
    %3044 = vmatprep.subr.mxu0 0.0
    %3045 = vmatpush1.msra.mxu0 0.0
    %3046 = vmatprep.subr.mxu0 0.0
    %3047 = vmatpush1.msra.mxu0 0.0
    %3048 = vmatprep.subr.mxu0 0.0
    %3049 = vmatpush1.msra.mxu0 0.0
    %3050 = vmatprep.subr.mxu0 0.0
    %3051 = vmatpush1.msra.mxu0 0.0
    %3052 = vmatprep.mubr.f32.mxu0 0.0
    %3053 = vmatmul.mubr.f32.gmra.mrb[0].mxu0 %v2984
    %v3054 = vpop.f32.mrb[0].mxu0
    %v3055 = vadd.f32 %v2977, %v3054
    %v3056 = vpop.f32.mrb[0].mxu0
    %v3057 = vadd.f32 %v2977, %v3056
    %3058 = vmatprep.mubr.f32.mxu0 0.0
    %3059 = vmatmul.mubr.f32.gmra.mrb[0].mxu0 %v2986
    %v3060 = vpop.f32.mrb[0].mxu0
    %v3061 = vadd.f32 %v2982, %v3060
    %v3062 = vpop.f32.mrb[0].mxu0
    %v3063 = vadd.f32 %v2982, %v3062
    %3064 = vdwg.mxu0
    %3065 = vmatprep.subr.mxu0 %v2967
    %3066 = vmatpush1.msra.mxu0 %v2966
    %3067 = vmatprep.subr.mxu0 %v2971
    %3068 = vmatpush1.msra.mxu0 %v2970
    %3069 = vmatprep.subr.mxu0 0.0
    %3070 = vmatpush1.msra.mxu0 0.0
    %3071 = vmatprep.subr.mxu0 0.0
    %3072 = vmatpush1.msra.mxu0 0.0
    %3073 = vmatprep.subr.mxu0 0.0
    %3074 = vmatpush1.msra.mxu0 0.0
    %3075 = vmatprep.subr.mxu0 0.0
    %3076 = vmatpush1.msra.mxu0 0.0
    %3077 = vmatprep.subr.mxu0 0.0
    %3078 = vmatpush1.msra.mxu0 0.0
    %3079 = vmatprep.subr.mxu0 0.0
    %3080 = vmatpush1.msra.mxu0 0.0
    %3081 = vmatprep.subr.mxu0 0.0
    %3082 = vmatpush1.msra.mxu0 0.0
    %3083 = vmatprep.subr.mxu0 0.0
    %3084 = vmatpush1.msra.mxu0 0.0
    %3085 = vmatprep.subr.mxu0 0.0
    %3086 = vmatpush1.msra.mxu0 0.0
    %3087 = vmatprep.subr.mxu0 0.0
    %3088 = vmatpush1.msra.mxu0 0.0
    %3089 = vmatprep.subr.mxu0 0.0
    %3090 = vmatpush1.msra.mxu0 0.0
    %3091 = vmatprep.subr.mxu0 0.0
    %3092 = vmatpush1.msra.mxu0 0.0
    %3093 = vmatprep.subr.mxu0 0.0
    %3094 = vmatpush1.msra.mxu0 0.0
    %3095 = vmatprep.subr.mxu0 0.0
    %3096 = vmatpush1.msra.mxu0 0.0
    %3097 = vmatprep.subr.mxu0 0.0
    %3098 = vmatpush1.msra.mxu0 0.0
    %3099 = vmatprep.subr.mxu0 0.0
    %3100 = vmatpush1.msra.mxu0 0.0
    %3101 = vmatprep.subr.mxu0 0.0
    %3102 = vmatpush1.msra.mxu0 0.0
    %3103 = vmatprep.subr.mxu0 0.0
    %3104 = vmatpush1.msra.mxu0 0.0
    %3105 = vmatprep.subr.mxu0 0.0
    %3106 = vmatpush1.msra.mxu0 0.0
    %3107 = vmatprep.subr.mxu0 0.0
    %3108 = vmatpush1.msra.mxu0 0.0
    %3109 = vmatprep.subr.mxu0 0.0
    %3110 = vmatpush1.msra.mxu0 0.0
    %3111 = vmatprep.subr.mxu0 0.0
    %3112 = vmatpush1.msra.mxu0 0.0
    %3113 = vmatprep.subr.mxu0 0.0
    %3114 = vmatpush1.msra.mxu0 0.0
    %3115 = vmatprep.subr.mxu0 0.0
    %3116 = vmatpush1.msra.mxu0 0.0
    %3117 = vmatprep.subr.mxu0 0.0
    %3118 = vmatpush1.msra.mxu0 0.0
    %3119 = vmatprep.subr.mxu0 0.0
    %3120 = vmatpush1.msra.mxu0 0.0
    %3121 = vmatprep.subr.mxu0 0.0
    %3122 = vmatpush1.msra.mxu0 0.0
    %3123 = vmatprep.subr.mxu0 0.0
    %3124 = vmatpush1.msra.mxu0 0.0
    %3125 = vmatprep.subr.mxu0 0.0
    %3126 = vmatpush1.msra.mxu0 0.0
    %3127 = vmatprep.subr.mxu0 0.0
    %3128 = vmatpush1.msra.mxu0 0.0
    %3129 = vmatprep.mubr.f32.mxu0 0.0
    %3130 = vmatmul.mubr.f32.gmra.mrb[0].mxu0 %v2984
    %v3131 = vpop.f32.mrb[0].mxu0
    %v3132 = vadd.f32 %v2977, %v3131
    %v3133 = vpop.f32.mrb[0].mxu0
    %v3134 = vadd.f32 %v2977, %v3133
    %3135 = vmatprep.mubr.f32.mxu0 0.0
    %3136 = vmatmul.mubr.f32.gmra.mrb[0].mxu0 %v2986
    %v3137 = vpop.f32.mrb[0].mxu0
    %v3138 = vadd.f32 %v2982, %v3137
    %v3139 = vpop.f32.mrb[0].mxu0
    %v3140 = vadd.f32 %v2982, %v3139
    %3141 = vdwg.mxu0
    %v3142 = vxor.u32 %v3055, 2147483648
    %v3143 = vxor.u32 %v3057, 2147483648
    %v3144 = vxor.u32 %v3132, 2147483648
    %v3145 = vxor.u32 %v3134, 2147483648
    %v3146 = vxor.u32 %v3061, 2147483648
    %v3147 = vxor.u32 %v3063, 2147483648
    %v3148 = vxor.u32 %v3138, 2147483648
    %v3149 = vxor.u32 %v3140, 2147483648
    %v3150 = vmul.f32 %v3142, 1.442695
    %v3151 = vpow.pop %v3150
    %v3152 = vmul.f32 %v3143, 1.442695
    %v3153 = vpow.pop %v3152
    %v3154 = vmul.f32 %v3144, 1.442695
    %v3155 = vpow.pop %v3154
    %v3156 = vmul.f32 %v3145, 1.442695
    %v3157 = vpow.pop %v3156
    %v3158 = vmul.f32 %v3146, 1.442695
    %v3159 = vpow.pop %v3158
    %v3160 = vmul.f32 %v3147, 1.442695
    %v3161 = vpow.pop %v3160
    %v3162 = vmul.f32 %v3148, 1.442695
    %v3163 = vpow.pop %v3162
    %v3164 = vmul.f32 %v3149, 1.442695
    %v3165 = vpow.pop %v3164
    %v3166 = vadd.f32 %v3151, 1.0
    %v3167 = vadd.f32 %v3153, 1.0
    %v3168 = vadd.f32 %v3155, 1.0
    %v3169 = vadd.f32 %v3157, 1.0
    %v3170 = vadd.f32 %v3159, 1.0
    %v3171 = vadd.f32 %v3161, 1.0
    %v3172 = vadd.f32 %v3163, 1.0
    %v3173 = vadd.f32 %v3165, 1.0
    %v3174 = vrcp.pop %v3166
    %v3175 = vmul.f32 1.0, %v3174
    %v3176 = vrcp.pop %v3167
    %v3177 = vmul.f32 1.0, %v3176
    %v3178 = vrcp.pop %v3168
    %v3179 = vmul.f32 1.0, %v3178
    %v3180 = vrcp.pop %v3169
    %v3181 = vmul.f32 1.0, %v3180
    %v3182 = vrcp.pop %v3170
    %v3183 = vmul.f32 1.0, %v3182
    %v3184 = vrcp.pop %v3171
    %v3185 = vmul.f32 1.0, %v3184
    %v3186 = vrcp.pop %v3172
    %v3187 = vmul.f32 1.0, %v3186
    %v3188 = vrcp.pop %v3173
    %v3189 = vmul.f32 1.0, %v3188
    %v3190 = vmul.f32 %v3055, %v3175
    %v3191 = vmul.f32 %v3057, %v3177
    %v3192 = vmul.f32 %v3132, %v3179
    %v3193 = vmul.f32 %v3134, %v3181
    %v3194 = vmul.f32 %v3061, %v3183
    %v3195 = vmul.f32 %v3063, %v3185
    %v3196 = vmul.f32 %v3138, %v3187
    %v3197 = vmul.f32 %v3140, %v3189
    %v3198 = vmul.f32 %v3190, %v1788
    %v3199 = vmul.f32 %v3191, %v1792
    %v3200 = vmul.f32 %v3192, %v1796
    %v3201 = vmul.f32 %v3193, %v1800
    %v3202 = vmul.f32 %v3194, %v1788
    %v3203 = vmul.f32 %v3195, %v1792
    %v3204 = vmul.f32 %v3196, %v1796
    %v3205 = vmul.f32 %v3197, %v1800
    %3206 = vmatprep.subr.mxu0 0.0
    %3207 = vmatpush1.msra.mxu0 %v463
    %3208 = vmatprep.subr.mxu0 0.0
    %3209 = vmatpush1.msra.mxu0 %v464
    %3210 = vmatprep.subr.mxu0 0.0
    %3211 = vmatpush1.msra.mxu0 %v465
    %3212 = vmatprep.subr.mxu0 0.0
    %3213 = vmatpush1.msra.mxu0 %v466
    %3214 = vmatprep.subr.mxu0 0.0
    %3215 = vmatpush1.msra.mxu0 %v467
    %3216 = vmatprep.subr.mxu0 0.0
    %3217 = vmatpush1.msra.mxu0 %v468
    %3218 = vmatprep.subr.mxu0 0.0
    %3219 = vmatpush1.msra.mxu0 %v469
    %3220 = vmatprep.subr.mxu0 0.0
    %3221 = vmatpush1.msra.mxu0 %v470
    %3222 = vmatprep.subr.mxu0 0.0
    %3223 = vmatpush1.msra.mxu0 %v471
    %3224 = vmatprep.subr.mxu0 0.0
    %3225 = vmatpush1.msra.mxu0 %v472
    %3226 = vmatprep.subr.mxu0 0.0
    %3227 = vmatpush1.msra.mxu0 %v473
    %3228 = vmatprep.subr.mxu0 0.0
    %3229 = vmatpush1.msra.mxu0 %v474
    %3230 = vmatprep.subr.mxu0 0.0
    %3231 = vmatpush1.msra.mxu0 %v475
    %3232 = vmatprep.subr.mxu0 0.0
    %3233 = vmatpush1.msra.mxu0 %v476
    %3234 = vmatprep.subr.mxu0 0.0
    %3235 = vmatpush1.msra.mxu0 %v477
    %3236 = vmatprep.subr.mxu0 0.0
    %3237 = vmatpush1.msra.mxu0 %v478
    %3238 = vmatprep.subr.mxu0 0.0
    %3239 = vmatpush1.msra.mxu0 %v479
    %3240 = vmatprep.subr.mxu0 0.0
    %3241 = vmatpush1.msra.mxu0 %v480
    %3242 = vmatprep.subr.mxu0 0.0
    %3243 = vmatpush1.msra.mxu0 %v481
    %3244 = vmatprep.subr.mxu0 0.0
    %3245 = vmatpush1.msra.mxu0 %v482
    %3246 = vmatprep.subr.mxu0 0.0
    %3247 = vmatpush1.msra.mxu0 %v483
    %3248 = vmatprep.subr.mxu0 0.0
    %3249 = vmatpush1.msra.mxu0 %v484
    %3250 = vmatprep.subr.mxu0 0.0
    %3251 = vmatpush1.msra.mxu0 %v485
    %3252 = vmatprep.subr.mxu0 0.0
    %3253 = vmatpush1.msra.mxu0 %v486
    %3254 = vmatprep.subr.mxu0 0.0
    %3255 = vmatpush1.msra.mxu0 %v487
    %3256 = vmatprep.subr.mxu0 0.0
    %3257 = vmatpush1.msra.mxu0 %v488
    %3258 = vmatprep.subr.mxu0 0.0
    %3259 = vmatpush1.msra.mxu0 %v489
    %3260 = vmatprep.subr.mxu0 0.0
    %3261 = vmatpush1.msra.mxu0 %v490
    %3262 = vmatprep.subr.mxu0 0.0
    %3263 = vmatpush1.msra.mxu0 %v491
    %3264 = vmatprep.subr.mxu0 0.0
    %3265 = vmatpush1.msra.mxu0 %v492
    %3266 = vmatprep.subr.mxu0 0.0
    %3267 = vmatpush1.msra.mxu0 %v493
    %3268 = vmatprep.subr.mxu0 0.0
    %3269 = vmatpush1.msra.mxu0 %v494
    %3270 = vmatprep.mubr.f32.mxu0 %v3199
    %3271 = vmatmul.mubr.f32.gmra.mrb[0].mxu0 %v3198
    %v3272 = vpop.f32.mrb[0].mxu0
    %v3273 = vadd.f32 0.0, %v3272
    %v3274 = vpop.f32.mrb[0].mxu0
    %3275 = vmatprep.mubr.f32.mxu0 %v3203
    %3276 = vmatmul.mubr.f32.gmra.mrb[0].mxu0 %v3202
    %v3277 = vpop.f32.mrb[0].mxu0
    %v3278 = vadd.f32 0.0, %v3277
    %v3279 = vpop.f32.mrb[0].mxu0
    %3280 = vdwg.mxu0
    %3281 = vmatprep.subr.mxu0 0.0
    %3282 = vmatpush1.msra.mxu0 %v495
    %3283 = vmatprep.subr.mxu0 0.0
    %3284 = vmatpush1.msra.mxu0 %v496
    %3285 = vmatprep.subr.mxu0 0.0
    %3286 = vmatpush1.msra.mxu0 %v497
    %3287 = vmatprep.subr.mxu0 0.0
    %3288 = vmatpush1.msra.mxu0 %v498
    %3289 = vmatprep.subr.mxu0 0.0
    %3290 = vmatpush1.msra.mxu0 %v499
    %3291 = vmatprep.subr.mxu0 0.0
    %3292 = vmatpush1.msra.mxu0 %v500
    %3293 = vmatprep.subr.mxu0 0.0
    %3294 = vmatpush1.msra.mxu0 %v501
    %3295 = vmatprep.subr.mxu0 0.0
    %3296 = vmatpush1.msra.mxu0 %v502
    %3297 = vmatprep.subr.mxu0 0.0
    %3298 = vmatpush1.msra.mxu0 %v503
    %3299 = vmatprep.subr.mxu0 0.0
    %3300 = vmatpush1.msra.mxu0 %v504
    %3301 = vmatprep.subr.mxu0 0.0
    %3302 = vmatpush1.msra.mxu0 %v505
    %3303 = vmatprep.subr.mxu0 0.0
    %3304 = vmatpush1.msra.mxu0 %v506
    %3305 = vmatprep.subr.mxu0 0.0
    %3306 = vmatpush1.msra.mxu0 %v507
    %3307 = vmatprep.subr.mxu0 0.0
    %3308 = vmatpush1.msra.mxu0 %v508
    %3309 = vmatprep.subr.mxu0 0.0
    %3310 = vmatpush1.msra.mxu0 %v509
    %3311 = vmatprep.subr.mxu0 0.0
    %3312 = vmatpush1.msra.mxu0 %v510
    %3313 = vmatprep.subr.mxu0 0.0
    %3314 = vmatpush1.msra.mxu0 %v511
    %3315 = vmatprep.subr.mxu0 0.0
    %3316 = vmatpush1.msra.mxu0 %v512
    %3317 = vmatprep.subr.mxu0 0.0
    %3318 = vmatpush1.msra.mxu0 %v513
    %3319 = vmatprep.subr.mxu0 0.0
    %3320 = vmatpush1.msra.mxu0 %v514
    %3321 = vmatprep.subr.mxu0 0.0
    %3322 = vmatpush1.msra.mxu0 %v515
    %3323 = vmatprep.subr.mxu0 0.0
    %3324 = vmatpush1.msra.mxu0 %v516
    %3325 = vmatprep.subr.mxu0 0.0
    %3326 = vmatpush1.msra.mxu0 %v517
    %3327 = vmatprep.subr.mxu0 0.0
    %3328 = vmatpush1.msra.mxu0 %v518
    %3329 = vmatprep.subr.mxu0 0.0
    %3330 = vmatpush1.msra.mxu0 %v519
    %3331 = vmatprep.subr.mxu0 0.0
    %3332 = vmatpush1.msra.mxu0 %v520
    %3333 = vmatprep.subr.mxu0 0.0
    %3334 = vmatpush1.msra.mxu0 %v521
    %3335 = vmatprep.subr.mxu0 0.0
    %3336 = vmatpush1.msra.mxu0 %v522
    %3337 = vmatprep.subr.mxu0 0.0
    %3338 = vmatpush1.msra.mxu0 %v523
    %3339 = vmatprep.subr.mxu0 0.0
    %3340 = vmatpush1.msra.mxu0 %v524
    %3341 = vmatprep.subr.mxu0 0.0
    %3342 = vmatpush1.msra.mxu0 %v525
    %3343 = vmatprep.subr.mxu0 0.0
    %3344 = vmatpush1.msra.mxu0 %v526
    %3345 = vmatprep.mubr.f32.mxu0 %v3201
    %3346 = vmatmul.mubr.f32.gmra.mrb[0].mxu0 %v3200
    %v3347 = vpop.f32.mrb[0].mxu0
    %v3348 = vadd.f32 %v3273, %v3347
    %v3349 = vpop.f32.mrb[0].mxu0
    %3350 = vmatprep.mubr.f32.mxu0 %v3205
    %3351 = vmatmul.mubr.f32.gmra.mrb[0].mxu0 %v3204
    %v3352 = vpop.f32.mrb[0].mxu0
    %v3353 = vadd.f32 %v3278, %v3352
    %v3354 = vpop.f32.mrb[0].mxu0
    %3355 = vdwg.mxu0
    %v3356 = vld [vmem:[#allocation2 + $0x120] sm:$0xff]
    %v3357 = vld [vmem:[#allocation2 + $0x128] sm:$0xff]
    %v3358 = vld [vmem:[#allocation2 + $0x130] sm:$0xff]
    %v3359 = vld [vmem:[#allocation2 + $0x138] sm:$0xff]
    %v3360 = vld [vmem:[#allocation2 + $0x140] sm:$0xff]
    %v3361 = vld [vmem:[#allocation2 + $0x148] sm:$0xff]
    %v3362 = vld [vmem:[#allocation2 + $0x150] sm:$0xff]
    %v3363 = vld [vmem:[#allocation2 + $0x158] sm:$0xff]
    %v3364 = vld [vmem:[#allocation2 + $0x160] sm:$0xff]
    %v3365 = vld [vmem:[#allocation2 + $0x168] sm:$0xff]
    %v3366 = vld [vmem:[#allocation2 + $0x170] sm:$0xff]
    %v3367 = vld [vmem:[#allocation2 + $0x178] sm:$0xff]
    %v3368 = vld [vmem:[#allocation2 + $0x180] sm:$0xff]
    %v3369 = vld [vmem:[#allocation2 + $0x188] sm:$0xff]
    %v3370 = vld [vmem:[#allocation2 + $0x190] sm:$0xff]
    %v3371 = vld [vmem:[#allocation2 + $0x198] sm:$0xff]
    %v3373 = vsel %vm1570, %v3364, 0
    %v3376 = vsel %vm1570, %v3365, 0
    %v3379 = vsel %vm1570, %v3366, 0
    %v3382 = vsel %vm1570, %v3367, 0
    %v3385 = vsel %vm1570, %v3368, 0
    %v3388 = vsel %vm1570, %v3369, 0
    %v3391 = vsel %vm1570, %v3370, 0
    %v3394 = vsel %vm1570, %v3371, 0
    %3396 = vmatprep.subr.mxu0 0.0
    %3397 = vmatpush1.msra.mxu0 %v3348
    %3398 = vmatprep.subr.mxu0 0.0
    %3399 = vmatpush1.msra.mxu0 %v3353
    %3400 = vmatprep.subr.mxu0 0.0
    %3401 = vmatpush1.msra.mxu0 0.0
    %3402 = vmatprep.subr.mxu0 0.0
    %3403 = vmatpush1.msra.mxu0 0.0
    %3404 = vmatprep.subr.mxu0 0.0
    %3405 = vmatpush1.msra.mxu0 0.0
    %3406 = vmatprep.subr.mxu0 0.0
    %3407 = vmatpush1.msra.mxu0 0.0
    %3408 = vmatprep.subr.mxu0 0.0
    %3409 = vmatpush1.msra.mxu0 0.0
    %3410 = vmatprep.subr.mxu0 0.0
    %3411 = vmatpush1.msra.mxu0 0.0
    %3412 = vmatprep.subr.mxu0 0.0
    %3413 = vmatpush1.msra.mxu0 0.0
    %3414 = vmatprep.subr.mxu0 0.0
    %3415 = vmatpush1.msra.mxu0 0.0
    %3416 = vmatprep.subr.mxu0 0.0
    %3417 = vmatpush1.msra.mxu0 0.0
    %3418 = vmatprep.subr.mxu0 0.0
    %3419 = vmatpush1.msra.mxu0 0.0
    %3420 = vmatprep.subr.mxu0 0.0
    %3421 = vmatpush1.msra.mxu0 0.0
    %3422 = vmatprep.subr.mxu0 0.0
    %3423 = vmatpush1.msra.mxu0 0.0
    %3424 = vmatprep.subr.mxu0 0.0
    %3425 = vmatpush1.msra.mxu0 0.0
    %3426 = vmatprep.subr.mxu0 0.0
    %3427 = vmatpush1.msra.mxu0 0.0
    %3428 = vmatprep.subr.mxu0 0.0
    %3429 = vmatpush1.msra.mxu0 0.0
    %3430 = vmatprep.subr.mxu0 0.0
    %3431 = vmatpush1.msra.mxu0 0.0
    %3432 = vmatprep.subr.mxu0 0.0
    %3433 = vmatpush1.msra.mxu0 0.0
    %3434 = vmatprep.subr.mxu0 0.0
    %3435 = vmatpush1.msra.mxu0 0.0
    %3436 = vmatprep.subr.mxu0 0.0
    %3437 = vmatpush1.msra.mxu0 0.0
    %3438 = vmatprep.subr.mxu0 0.0
    %3439 = vmatpush1.msra.mxu0 0.0
    %3440 = vmatprep.subr.mxu0 0.0
    %3441 = vmatpush1.msra.mxu0 0.0
    %3442 = vmatprep.subr.mxu0 0.0
    %3443 = vmatpush1.msra.mxu0 0.0
    %3444 = vmatprep.subr.mxu0 0.0
    %3445 = vmatpush1.msra.mxu0 0.0
    %3446 = vmatprep.subr.mxu0 0.0
    %3447 = vmatpush1.msra.mxu0 0.0
    %3448 = vmatprep.subr.mxu0 0.0
    %3449 = vmatpush1.msra.mxu0 0.0
    %3450 = vmatprep.subr.mxu0 0.0
    %3451 = vmatpush1.msra.mxu0 0.0
    %3452 = vmatprep.subr.mxu0 0.0
    %3453 = vmatpush1.msra.mxu0 0.0
    %3454 = vmatprep.subr.mxu0 0.0
    %3455 = vmatpush1.msra.mxu0 0.0
    %3456 = vmatprep.subr.mxu0 0.0
    %3457 = vmatpush1.msra.mxu0 0.0
    %3458 = vmatprep.subr.mxu0 0.0
    %3459 = vmatpush1.msra.mxu0 0.0
    %3460 = vmatprep.mubr.f32.mxu0 0.0
    %3461 = vmatmul.mubr.f32.gmra.mrb[0].mxu0 %v3373
    %v3462 = vpop.f32.mrb[0].mxu0
    %v3463 = vadd.f32 0.0, %v3462
    %v3464 = vpop.f32.mrb[0].mxu0
    %3465 = vmatprep.mubr.f32.mxu0 0.0
    %3466 = vmatmul.mubr.f32.gmra.mrb[0].mxu0 %v3376
    %v3467 = vpop.f32.mrb[0].mxu0
    %v3468 = vadd.f32 0.0, %v3467
    %v3469 = vpop.f32.mrb[0].mxu0
    %3470 = vmatprep.mubr.f32.mxu0 0.0
    %3471 = vmatmul.mubr.f32.gmra.mrb[0].mxu0 %v3379
    %v3472 = vpop.f32.mrb[0].mxu0
    %v3473 = vadd.f32 0.0, %v3472
    %v3474 = vpop.f32.mrb[0].mxu0
    %3475 = vmatprep.mubr.f32.mxu0 0.0
    %3476 = vmatmul.mubr.f32.gmra.mrb[0].mxu0 %v3382
    %v3477 = vpop.f32.mrb[0].mxu0
    %v3478 = vadd.f32 0.0, %v3477
    %v3479 = vpop.f32.mrb[0].mxu0
    %3480 = vmatprep.mubr.f32.mxu0 0.0
    %3481 = vmatmul.mubr.f32.gmra.mrb[0].mxu0 %v3385
    %v3482 = vpop.f32.mrb[0].mxu0
    %v3483 = vadd.f32 0.0, %v3482
    %v3484 = vpop.f32.mrb[0].mxu0
    %3485 = vmatprep.mubr.f32.mxu0 0.0
    %3486 = vmatmul.mubr.f32.gmra.mrb[0].mxu0 %v3388
    %v3487 = vpop.f32.mrb[0].mxu0
    %v3488 = vadd.f32 0.0, %v3487
    %v3489 = vpop.f32.mrb[0].mxu0
    %3490 = vmatprep.mubr.f32.mxu0 0.0
    %3491 = vmatmul.mubr.f32.gmra.mrb[0].mxu0 %v3391
    %v3492 = vpop.f32.mrb[0].mxu0
    %v3493 = vadd.f32 0.0, %v3492
    %v3494 = vpop.f32.mrb[0].mxu0
    %3495 = vmatprep.mubr.f32.mxu0 0.0
    %3496 = vmatmul.mubr.f32.gmra.mrb[0].mxu0 %v3394
    %v3497 = vpop.f32.mrb[0].mxu0
    %v3498 = vadd.f32 0.0, %v3497
    %v3499 = vpop.f32.mrb[0].mxu0
    %3500 = vdwg.mxu0
    %v3502 = vsel %vm527, %v3356, 0
    %v3505 = vsel %vm527, %v3357, 0
    %v3508 = vsel %vm527, %v3358, 0
    %v3511 = vsel %vm527, %v3359, 0
    %v3514 = vsel %vm527, %v3360, 0
    %v3517 = vsel %vm527, %v3361, 0
    %v3520 = vsel %vm527, %v3362, 0
    %v3523 = vsel %vm527, %v3363, 0
    %3525 = vmatprep.subr.mxu0 0.0
    %3526 = vmatpush1.msra.mxu0 %v2447
    %3527 = vmatprep.subr.mxu0 0.0
    %3528 = vmatpush1.msra.mxu0 %v2448
    %3529 = vmatprep.subr.mxu0 0.0
    %3530 = vmatpush1.msra.mxu0 %v2449
    %3531 = vmatprep.subr.mxu0 0.0
    %3532 = vmatpush1.msra.mxu0 %v2450
    %3533 = vmatprep.subr.mxu0 0.0
    %3534 = vmatpush1.msra.mxu0 0.0
    %3535 = vmatprep.subr.mxu0 0.0
    %3536 = vmatpush1.msra.mxu0 0.0
    %3537 = vmatprep.subr.mxu0 0.0
    %3538 = vmatpush1.msra.mxu0 0.0
    %3539 = vmatprep.subr.mxu0 0.0
    %3540 = vmatpush1.msra.mxu0 0.0
    %3541 = vmatprep.subr.mxu0 0.0
    %3542 = vmatpush1.msra.mxu0 0.0
    %3543 = vmatprep.subr.mxu0 0.0
    %3544 = vmatpush1.msra.mxu0 0.0
    %3545 = vmatprep.subr.mxu0 0.0
    %3546 = vmatpush1.msra.mxu0 0.0
    %3547 = vmatprep.subr.mxu0 0.0
    %3548 = vmatpush1.msra.mxu0 0.0
    %3549 = vmatprep.subr.mxu0 0.0
    %3550 = vmatpush1.msra.mxu0 0.0
    %3551 = vmatprep.subr.mxu0 0.0
    %3552 = vmatpush1.msra.mxu0 0.0
    %3553 = vmatprep.subr.mxu0 0.0
    %3554 = vmatpush1.msra.mxu0 0.0
    %3555 = vmatprep.subr.mxu0 0.0
    %3556 = vmatpush1.msra.mxu0 0.0
    %3557 = vmatprep.subr.mxu0 0.0
    %3558 = vmatpush1.msra.mxu0 0.0
    %3559 = vmatprep.subr.mxu0 0.0
    %3560 = vmatpush1.msra.mxu0 0.0
    %3561 = vmatprep.subr.mxu0 0.0
    %3562 = vmatpush1.msra.mxu0 0.0
    %3563 = vmatprep.subr.mxu0 0.0
    %3564 = vmatpush1.msra.mxu0 0.0
    %3565 = vmatprep.subr.mxu0 0.0
    %3566 = vmatpush1.msra.mxu0 0.0
    %3567 = vmatprep.subr.mxu0 0.0
    %3568 = vmatpush1.msra.mxu0 0.0
    %3569 = vmatprep.subr.mxu0 0.0
    %3570 = vmatpush1.msra.mxu0 0.0
    %3571 = vmatprep.subr.mxu0 0.0
    %3572 = vmatpush1.msra.mxu0 0.0
    %3573 = vmatprep.subr.mxu0 0.0
    %3574 = vmatpush1.msra.mxu0 0.0
    %3575 = vmatprep.subr.mxu0 0.0
    %3576 = vmatpush1.msra.mxu0 0.0
    %3577 = vmatprep.subr.mxu0 0.0
    %3578 = vmatpush1.msra.mxu0 0.0
    %3579 = vmatprep.subr.mxu0 0.0
    %3580 = vmatpush1.msra.mxu0 0.0
    %3581 = vmatprep.subr.mxu0 0.0
    %3582 = vmatpush1.msra.mxu0 0.0
    %3583 = vmatprep.subr.mxu0 0.0
    %3584 = vmatpush1.msra.mxu0 0.0
    %3585 = vmatprep.subr.mxu0 0.0
    %3586 = vmatpush1.msra.mxu0 0.0
    %3587 = vmatprep.subr.mxu0 0.0
    %3588 = vmatpush1.msra.mxu0 0.0
    %3589 = vmatprep.mubr.f32.mxu0 0.0
    %3590 = vmatmul.mubr.f32.gmra.mrb[0].mxu0 %v3502
    %v3591 = vpop.f32.mrb[0].mxu0
    %v3592 = vadd.f32 %v3463, %v3591
    %v3593 = vpop.f32.mrb[0].mxu0
    %3594 = vmatprep.mubr.f32.mxu0 0.0
    %3595 = vmatmul.mubr.f32.gmra.mrb[0].mxu0 %v3505
    %v3596 = vpop.f32.mrb[0].mxu0
    %v3597 = vadd.f32 %v3468, %v3596
    %v3598 = vpop.f32.mrb[0].mxu0
    %3599 = vmatprep.mubr.f32.mxu0 0.0
    %3600 = vmatmul.mubr.f32.gmra.mrb[0].mxu0 %v3508
    %v3601 = vpop.f32.mrb[0].mxu0
    %v3602 = vadd.f32 %v3473, %v3601
    %v3603 = vpop.f32.mrb[0].mxu0
    %3604 = vmatprep.mubr.f32.mxu0 0.0
    %3605 = vmatmul.mubr.f32.gmra.mrb[0].mxu0 %v3511
    %v3606 = vpop.f32.mrb[0].mxu0
    %v3607 = vadd.f32 %v3478, %v3606
    %v3608 = vpop.f32.mrb[0].mxu0
    %3609 = vmatprep.mubr.f32.mxu0 0.0
    %3610 = vmatmul.mubr.f32.gmra.mrb[0].mxu0 %v3514
    %v3611 = vpop.f32.mrb[0].mxu0
    %v3612 = vadd.f32 %v3483, %v3611
    %v3613 = vpop.f32.mrb[0].mxu0
    %3614 = vmatprep.mubr.f32.mxu0 0.0
    %3615 = vmatmul.mubr.f32.gmra.mrb[0].mxu0 %v3517
    %v3616 = vpop.f32.mrb[0].mxu0
    %v3617 = vadd.f32 %v3488, %v3616
    %v3618 = vpop.f32.mrb[0].mxu0
    %3619 = vmatprep.mubr.f32.mxu0 0.0
    %3620 = vmatmul.mubr.f32.gmra.mrb[0].mxu0 %v3520
    %v3621 = vpop.f32.mrb[0].mxu0
    %v3622 = vadd.f32 %v3493, %v3621
    %v3623 = vpop.f32.mrb[0].mxu0
    %3624 = vmatprep.mubr.f32.mxu0 0.0
    %3625 = vmatmul.mubr.f32.gmra.mrb[0].mxu0 %v3523
    %v3626 = vpop.f32.mrb[0].mxu0
    %v3627 = vadd.f32 %v3498, %v3626
    %v3628 = vpop.f32.mrb[0].mxu0
    %3629 = vdwg.mxu0
    %3630 = vset.pattern.permute.xlu0 32
    %3631 = vperm.xlu0 %3630, %v3356
    %v3632 = vpop.permute.xlu0 %3631
    %3634 = vset.pattern.permute.xlu0 32
    %3635 = vperm.xlu0 %3634, %v3357
    %v3636 = vpop.permute.xlu0 %3635
    %3638 = vset.pattern.permute.xlu0 32
    %3639 = vperm.xlu0 %3638, %v3358
    %v3640 = vpop.permute.xlu0 %3639
    %3642 = vset.pattern.permute.xlu0 32
    %3643 = vperm.xlu0 %3642, %v3359
    %v3644 = vpop.permute.xlu0 %3643
    %3646 = vset.pattern.permute.xlu0 32
    %3647 = vperm.xlu0 %3646, %v3360
    %v3648 = vpop.permute.xlu0 %3647
    %3650 = vset.pattern.permute.xlu0 32
    %3651 = vperm.xlu0 %3650, %v3361
    %v3652 = vpop.permute.xlu0 %3651
    %3654 = vset.pattern.permute.xlu0 32
    %3655 = vperm.xlu0 %3654, %v3362
    %v3656 = vpop.permute.xlu0 %3655
    %3658 = vset.pattern.permute.xlu0 32
    %3659 = vperm.xlu0 %3658, %v3363
    %v3660 = vpop.permute.xlu0 %3659
    %v3662 = vadd.f32 %v3592, %v3632
    %v3663 = vadd.f32 %v3597, %v3636
    %v3664 = vadd.f32 %v3602, %v3640
    %v3665 = vadd.f32 %v3607, %v3644
    %v3666 = vadd.f32 %v3612, %v3648
    %v3667 = vadd.f32 %v3617, %v3652
    %v3668 = vadd.f32 %v3622, %v3656
    %v3669 = vadd.f32 %v3627, %v3660
    %v3670 = vxor.u32 %v3662, 2147483648
    %v3671 = vxor.u32 %v3663, 2147483648
    %v3672 = vxor.u32 %v3664, 2147483648
    %v3673 = vxor.u32 %v3665, 2147483648
    %v3674 = vxor.u32 %v3666, 2147483648
    %v3675 = vxor.u32 %v3667, 2147483648
    %v3676 = vxor.u32 %v3668, 2147483648
    %v3677 = vxor.u32 %v3669, 2147483648
    %v3678 = vmul.f32 %v3670, 1.442695
    %v3679 = vpow.pop %v3678
    %v3680 = vmul.f32 %v3671, 1.442695
    %v3681 = vpow.pop %v3680
    %v3682 = vmul.f32 %v3672, 1.442695
    %v3683 = vpow.pop %v3682
    %v3684 = vmul.f32 %v3673, 1.442695
    %v3685 = vpow.pop %v3684
    %v3686 = vmul.f32 %v3674, 1.442695
    %v3687 = vpow.pop %v3686
    %v3688 = vmul.f32 %v3675, 1.442695
    %v3689 = vpow.pop %v3688
    %v3690 = vmul.f32 %v3676, 1.442695
    %v3691 = vpow.pop %v3690
    %v3692 = vmul.f32 %v3677, 1.442695
    %v3693 = vpow.pop %v3692
    %v3694 = vadd.f32 %v3679, 1.0
    %v3695 = vadd.f32 %v3681, 1.0
    %v3696 = vadd.f32 %v3683, 1.0
    %v3697 = vadd.f32 %v3685, 1.0
    %v3698 = vadd.f32 %v3687, 1.0
    %v3699 = vadd.f32 %v3689, 1.0
    %v3700 = vadd.f32 %v3691, 1.0
    %v3701 = vadd.f32 %v3693, 1.0
    %v3702 = vrcp.pop %v3694
    %v3703 = vmul.f32 1.0, %v3702
    %v3704 = vrcp.pop %v3695
    %v3705 = vmul.f32 1.0, %v3704
    %v3706 = vrcp.pop %v3696
    %v3707 = vmul.f32 1.0, %v3706
    %v3708 = vrcp.pop %v3697
    %v3709 = vmul.f32 1.0, %v3708
    %v3710 = vrcp.pop %v3698
    %v3711 = vmul.f32 1.0, %v3710
    %v3712 = vrcp.pop %v3699
    %v3713 = vmul.f32 1.0, %v3712
    %v3714 = vrcp.pop %v3700
    %v3715 = vmul.f32 1.0, %v3714
    %v3716 = vrcp.pop %v3701
    %v3717 = vmul.f32 1.0, %v3716
    %v3718 = vmul.f32 %v3662, %v3703
    %v3719 = vmul.f32 %v3663, %v3705
    %v3720 = vmul.f32 %v3664, %v3707
    %v3721 = vmul.f32 %v3665, %v3709
    %v3722 = vmul.f32 %v3666, %v3711
    %v3723 = vmul.f32 %v3667, %v3713
    %v3724 = vmul.f32 %v3668, %v3715
    %v3725 = vmul.f32 %v3669, %v3717
    %v3726 = vld [vmem:[#allocation2 + $0x1a0] sm:$0xff]
    %v3727 = vld [vmem:[#allocation2 + $0x1a8] sm:$0xff]
    %v3728 = vld [vmem:[#allocation2 + $0x1b0] sm:$0xff]
    %v3729 = vld [vmem:[#allocation2 + $0x1b8] sm:$0xff]
    %3731 = vset.pattern.permute.xlu0 64
    %3732 = vperm.xlu0 %3731, %v3726
    %v3733 = vpop.permute.xlu0 %3732
    %3736 = vset.pattern.permute.xlu0 64
    %3737 = vperm.xlu0 %3736, %v3727
    %v3738 = vpop.permute.xlu0 %3737
    %3741 = vset.pattern.permute.xlu0 64
    %3742 = vperm.xlu0 %3741, %v3728
    %v3743 = vpop.permute.xlu0 %3742
    %3746 = vset.pattern.permute.xlu0 64
    %3747 = vperm.xlu0 %3746, %v3729
    %v3748 = vpop.permute.xlu0 %3747
    %v3750 = vsel %vm2353, %v3726, 0
    %v3752 = vsel %vm2353, %v3727, 0
    %v3754 = vsel %vm2353, %v3728, 0
    %v3756 = vsel %vm2353, %v3729, 0
    %3758 = vmatprep.subr.mxu0 0.0
    %3759 = vmatpush1.msra.mxu0 %v3718
    %3760 = vmatprep.subr.mxu0 0.0
    %3761 = vmatpush1.msra.mxu0 %v3719
    %3762 = vmatprep.subr.mxu0 0.0
    %3763 = vmatpush1.msra.mxu0 %v3720
    %3764 = vmatprep.subr.mxu0 0.0
    %3765 = vmatpush1.msra.mxu0 %v3721
    %3766 = vmatprep.subr.mxu0 0.0
    %3767 = vmatpush1.msra.mxu0 %v3722
    %3768 = vmatprep.subr.mxu0 0.0
    %3769 = vmatpush1.msra.mxu0 %v3723
    %3770 = vmatprep.subr.mxu0 0.0
    %3771 = vmatpush1.msra.mxu0 %v3724
    %3772 = vmatprep.subr.mxu0 0.0
    %3773 = vmatpush1.msra.mxu0 %v3725
    %3774 = vmatprep.subr.mxu0 0.0
    %3775 = vmatpush1.msra.mxu0 0.0
    %3776 = vmatprep.subr.mxu0 0.0
    %3777 = vmatpush1.msra.mxu0 0.0
    %3778 = vmatprep.subr.mxu0 0.0
    %3779 = vmatpush1.msra.mxu0 0.0
    %3780 = vmatprep.subr.mxu0 0.0
    %3781 = vmatpush1.msra.mxu0 0.0
    %3782 = vmatprep.subr.mxu0 0.0
    %3783 = vmatpush1.msra.mxu0 0.0
    %3784 = vmatprep.subr.mxu0 0.0
    %3785 = vmatpush1.msra.mxu0 0.0
    %3786 = vmatprep.subr.mxu0 0.0
    %3787 = vmatpush1.msra.mxu0 0.0
    %3788 = vmatprep.subr.mxu0 0.0
    %3789 = vmatpush1.msra.mxu0 0.0
    %3790 = vmatprep.subr.mxu0 0.0
    %3791 = vmatpush1.msra.mxu0 0.0
    %3792 = vmatprep.subr.mxu0 0.0
    %3793 = vmatpush1.msra.mxu0 0.0
    %3794 = vmatprep.subr.mxu0 0.0
    %3795 = vmatpush1.msra.mxu0 0.0
    %3796 = vmatprep.subr.mxu0 0.0
    %3797 = vmatpush1.msra.mxu0 0.0
    %3798 = vmatprep.subr.mxu0 0.0
    %3799 = vmatpush1.msra.mxu0 0.0
    %3800 = vmatprep.subr.mxu0 0.0
    %3801 = vmatpush1.msra.mxu0 0.0
    %3802 = vmatprep.subr.mxu0 0.0
    %3803 = vmatpush1.msra.mxu0 0.0
    %3804 = vmatprep.subr.mxu0 0.0
    %3805 = vmatpush1.msra.mxu0 0.0
    %3806 = vmatprep.subr.mxu0 0.0
    %3807 = vmatpush1.msra.mxu0 0.0
    %3808 = vmatprep.subr.mxu0 0.0
    %3809 = vmatpush1.msra.mxu0 0.0
    %3810 = vmatprep.subr.mxu0 0.0
    %3811 = vmatpush1.msra.mxu0 0.0
    %3812 = vmatprep.subr.mxu0 0.0
    %3813 = vmatpush1.msra.mxu0 0.0
    %3814 = vmatprep.subr.mxu0 0.0
    %3815 = vmatpush1.msra.mxu0 0.0
    %3816 = vmatprep.subr.mxu0 0.0
    %3817 = vmatpush1.msra.mxu0 0.0
    %3818 = vmatprep.subr.mxu0 0.0
    %3819 = vmatpush1.msra.mxu0 0.0
    %3820 = vmatprep.subr.mxu0 0.0
    %3821 = vmatpush1.msra.mxu0 0.0
    %3822 = vmatprep.mubr.f32.mxu0 0.0
    %3823 = vmatmul.mubr.f32.gmra.mrb[0].mxu0 %v3750
    %v3824 = vpop.f32.mrb[0].mxu0
    %v3825 = vadd.f32 %v3733, %v3824
    %v3826 = vpop.f32.mrb[0].mxu0
    %3827 = vmatprep.mubr.f32.mxu0 0.0
    %3828 = vmatmul.mubr.f32.gmra.mrb[0].mxu0 %v3752
    %v3829 = vpop.f32.mrb[0].mxu0
    %v3830 = vadd.f32 %v3738, %v3829
    %v3831 = vpop.f32.mrb[0].mxu0
    %3832 = vmatprep.mubr.f32.mxu0 0.0
    %3833 = vmatmul.mubr.f32.gmra.mrb[0].mxu0 %v3754
    %v3834 = vpop.f32.mrb[0].mxu0
    %v3835 = vadd.f32 %v3743, %v3834
    %v3836 = vpop.f32.mrb[0].mxu0
    %3837 = vmatprep.mubr.f32.mxu0 0.0
    %3838 = vmatmul.mubr.f32.gmra.mrb[0].mxu0 %v3756
    %v3839 = vpop.f32.mrb[0].mxu0
    %v3840 = vadd.f32 %v3748, %v3839
    %v3841 = vpop.f32.mrb[0].mxu0
    %3842 = vdwg.mxu0
    %v3843 = vadd.f32 %v3825, %v2447
    %v3844 = vadd.f32 %v3830, %v2448
    %v3845 = vadd.f32 %v3835, %v2449
    %v3846 = vadd.f32 %v3840, %v2450
    %3847 = vxpose.xlu0.b32.start [1/16] %v3843, 128
    %3848 = vxpose.xlu0.b32.cont [2/16] %v3844, 128
    %3849 = vxpose.xlu0.b32.cont [3/16] %v3845, 128
    %3850 = vxpose.xlu0.b32.cont [4/16] %v3846, 128
    %3851 = vxpose.xlu0.b32.cont [5/16] 0.0, 128
    %3852 = vxpose.xlu0.b32.cont [6/16] 0.0, 128
    %3853 = vxpose.xlu0.b32.cont [7/16] 0.0, 128
    %3854 = vxpose.xlu0.b32.cont [8/16] 0.0, 128
    %3855 = vxpose.xlu0.b32.cont [9/16] 0.0, 128
    %3856 = vxpose.xlu0.b32.cont [10/16] 0.0, 128
    %3857 = vxpose.xlu0.b32.cont [11/16] 0.0, 128
    %3858 = vxpose.xlu0.b32.cont [12/16] 0.0, 128
    %3859 = vxpose.xlu0.b32.cont [13/16] 0.0, 128
    %3860 = vxpose.xlu0.b32.cont [14/16] 0.0, 128
    %3861 = vxpose.xlu0.b32.cont [15/16] 0.0, 128
    %3862 = vxpose.xlu0.b32.end [16/16] 0.0, 128
    %v3863 = vpop.trf.xlu0
    %v3864 = vpop.trf.xlu0
    %v3865 = vpop.trf.xlu0
    %v3866 = vpop.trf.xlu0
    %v3867 = vpop.trf.xlu0
    %v3868 = vpop.trf.xlu0
    %v3869 = vpop.trf.xlu0
    %v3870 = vpop.trf.xlu0
    %v3871 = vpop.trf.xlu0
    %v3872 = vpop.trf.xlu0
    %v3873 = vpop.trf.xlu0
    %v3874 = vpop.trf.xlu0
    %v3875 = vpop.trf.xlu0
    %v3876 = vpop.trf.xlu0
    %v3877 = vpop.trf.xlu0
    %v3878 = vpop.trf.xlu0
    %v3879 = vld [vmem:[#allocation2 + $0x1c0] sm:$0xff]
    %v3880 = vld [vmem:[#allocation2 + $0x1c8] sm:$0xff]
    %v3881 = vld [vmem:[#allocation2 + $0x1d0] sm:$0xff]
    %v3882 = vld [vmem:[#allocation2 + $0x1d8] sm:$0xff]
    %v3883 = vld [vmem:[#allocation2 + $0x1e0] sm:$0x1]
    %v3884 = vlaneseq
    %v3885 = vshrl.u32 %v3884, 7
    %v3886 = vsub.s32 0, %v3885
    %v3887 = vrot.slane %v3883, %v3886
    %v3889 = vsel %vm527, %v3863, 0
    %v3892 = vsel %vm527, %v3864, 0
    %v3895 = vsel %vm527, %v3865, 0
    %v3898 = vsel %vm527, %v3866, 0
    %3900 = vmatprep.subr.mxu0 0.0
    %3901 = vmatpush1.msra.mxu0 %v3879
    %3902 = vmatprep.subr.mxu0 0.0
    %3903 = vmatpush1.msra.mxu0 %v3880
    %3904 = vmatprep.subr.mxu0 0.0
    %3905 = vmatpush1.msra.mxu0 %v3881
    %3906 = vmatprep.subr.mxu0 0.0
    %3907 = vmatpush1.msra.mxu0 %v3882
    %3908 = vmatprep.subr.mxu0 0.0
    %3909 = vmatpush1.msra.mxu0 0.0
    %3910 = vmatprep.subr.mxu0 0.0
    %3911 = vmatpush1.msra.mxu0 0.0
    %3912 = vmatprep.subr.mxu0 0.0
    %3913 = vmatpush1.msra.mxu0 0.0
    %3914 = vmatprep.subr.mxu0 0.0
    %3915 = vmatpush1.msra.mxu0 0.0
    %3916 = vmatprep.subr.mxu0 0.0
    %3917 = vmatpush1.msra.mxu0 0.0
    %3918 = vmatprep.subr.mxu0 0.0
    %3919 = vmatpush1.msra.mxu0 0.0
    %3920 = vmatprep.subr.mxu0 0.0
    %3921 = vmatpush1.msra.mxu0 0.0
    %3922 = vmatprep.subr.mxu0 0.0
    %3923 = vmatpush1.msra.mxu0 0.0
    %3924 = vmatprep.subr.mxu0 0.0
    %3925 = vmatpush1.msra.mxu0 0.0
    %3926 = vmatprep.subr.mxu0 0.0
    %3927 = vmatpush1.msra.mxu0 0.0
    %3928 = vmatprep.subr.mxu0 0.0
    %3929 = vmatpush1.msra.mxu0 0.0
    %3930 = vmatprep.subr.mxu0 0.0
    %3931 = vmatpush1.msra.mxu0 0.0
    %3932 = vmatprep.subr.mxu0 0.0
    %3933 = vmatpush1.msra.mxu0 0.0
    %3934 = vmatprep.subr.mxu0 0.0
    %3935 = vmatpush1.msra.mxu0 0.0
    %3936 = vmatprep.subr.mxu0 0.0
    %3937 = vmatpush1.msra.mxu0 0.0
    %3938 = vmatprep.subr.mxu0 0.0
    %3939 = vmatpush1.msra.mxu0 0.0
    %3940 = vmatprep.subr.mxu0 0.0
    %3941 = vmatpush1.msra.mxu0 0.0
    %3942 = vmatprep.subr.mxu0 0.0
    %3943 = vmatpush1.msra.mxu0 0.0
    %3944 = vmatprep.subr.mxu0 0.0
    %3945 = vmatpush1.msra.mxu0 0.0
    %3946 = vmatprep.subr.mxu0 0.0
    %3947 = vmatpush1.msra.mxu0 0.0
    %3948 = vmatprep.subr.mxu0 0.0
    %3949 = vmatpush1.msra.mxu0 0.0
    %3950 = vmatprep.subr.mxu0 0.0
    %3951 = vmatpush1.msra.mxu0 0.0
    %3952 = vmatprep.subr.mxu0 0.0
    %3953 = vmatpush1.msra.mxu0 0.0
    %3954 = vmatprep.subr.mxu0 0.0
    %3955 = vmatpush1.msra.mxu0 0.0
    %3956 = vmatprep.subr.mxu0 0.0
    %3957 = vmatpush1.msra.mxu0 0.0
    %3958 = vmatprep.subr.mxu0 0.0
    %3959 = vmatpush1.msra.mxu0 0.0
    %3960 = vmatprep.subr.mxu0 0.0
    %3961 = vmatpush1.msra.mxu0 0.0
    %3962 = vmatprep.subr.mxu0 0.0
    %3963 = vmatpush1.msra.mxu0 0.0
    %3964 = vmatprep.mubr.f32.mxu0 0.0
    %3965 = vmatmul.mubr.f32.gmra.mrb[0].mxu0 %v3889
    %v3966 = vpop.f32.mrb[0].mxu0
    %v3967 = vadd.f32 %v3887, %v3966
    %v3968 = vpop.f32.mrb[0].mxu0
    %3969 = vmatprep.mubr.f32.mxu0 0.0
    %3970 = vmatmul.mubr.f32.gmra.mrb[0].mxu0 %v3892
    %v3971 = vpop.f32.mrb[0].mxu0
    %v3972 = vadd.f32 %v3887, %v3971
    %v3973 = vpop.f32.mrb[0].mxu0
    %3974 = vmatprep.mubr.f32.mxu0 0.0
    %3975 = vmatmul.mubr.f32.gmra.mrb[0].mxu0 %v3895
    %v3976 = vpop.f32.mrb[0].mxu0
    %v3977 = vadd.f32 %v3887, %v3976
    %v3978 = vpop.f32.mrb[0].mxu0
    %3979 = vmatprep.mubr.f32.mxu0 0.0
    %3980 = vmatmul.mubr.f32.gmra.mrb[0].mxu0 %v3898
    %v3981 = vpop.f32.mrb[0].mxu0
    %v3982 = vadd.f32 %v3887, %v3981
    %v3983 = vpop.f32.mrb[0].mxu0
    %3984 = vdwg.mxu0
    %v3985 = vxor.u32 %v3967, 2147483648
    %v3986 = vxor.u32 %v3972, 2147483648
    %v3987 = vxor.u32 %v3977, 2147483648
    %v3988 = vxor.u32 %v3982, 2147483648
    %v3989 = vmul.f32 %v3985, 1.442695
    %v3990 = vpow.pop %v3989
    %v3991 = vmul.f32 %v3986, 1.442695
    %v3992 = vpow.pop %v3991
    %v3993 = vmul.f32 %v3987, 1.442695
    %v3994 = vpow.pop %v3993
    %v3995 = vmul.f32 %v3988, 1.442695
    %v3996 = vpow.pop %v3995
    %v3997 = vadd.f32 %v3990, 1.0
    %v3998 = vadd.f32 %v3992, 1.0
    %v3999 = vadd.f32 %v3994, 1.0
    %v4000 = vadd.f32 %v3996, 1.0
    %v4001 = vrcp.pop %v3997
    %v4002 = vmul.f32 1.0, %v4001
    %v4003 = vrcp.pop %v3998
    %v4004 = vmul.f32 1.0, %v4003
    %v4005 = vrcp.pop %v3999
    %v4006 = vmul.f32 1.0, %v4005
    %v4007 = vrcp.pop %v4000
    %v4008 = vmul.f32 1.0, %v4007
    %v4009 = vmul.f32 %v3967, %v4002
    %v4010 = vmul.f32 %v3972, %v4004
    %v4011 = vmul.f32 %v3977, %v4006
    %v4012 = vmul.f32 %v3982, %v4008
    %v4013 = vld [vmem:[#allocation2 + $0x1e8] sm:$0xff]
    %v4014 = vld [vmem:[#allocation2 + $0x1f0] sm:$0xff]
    %v4015 = vld [vmem:[#allocation2 + $0x1f8] sm:$0xff]
    %v4016 = vld [vmem:[#allocation2 + $0x200] sm:$0xff]
    %v4017 = vld [vmem:[#allocation2 + $0x208] sm:$0x1]
    %v4018 = vlaneseq
    %v4019 = vshrl.u32 %v4018, 7
    %v4020 = vsub.s32 0, %v4019
    %v4021 = vrot.slane %v4017, %v4020
    %v4023 = vsel %vm527, %v4009, 0
    %v4026 = vsel %vm527, %v4010, 0
    %v4029 = vsel %vm527, %v4011, 0
    %v4032 = vsel %vm527, %v4012, 0
    %4034 = vmatprep.subr.mxu0 0.0
    %4035 = vmatpush1.msra.mxu0 %v4013
    %4036 = vmatprep.subr.mxu0 0.0
    %4037 = vmatpush1.msra.mxu0 %v4014
    %4038 = vmatprep.subr.mxu0 0.0
    %4039 = vmatpush1.msra.mxu0 %v4015
    %4040 = vmatprep.subr.mxu0 0.0
    %4041 = vmatpush1.msra.mxu0 %v4016
    %4042 = vmatprep.subr.mxu0 0.0
    %4043 = vmatpush1.msra.mxu0 0.0
    %4044 = vmatprep.subr.mxu0 0.0
    %4045 = vmatpush1.msra.mxu0 0.0
    %4046 = vmatprep.subr.mxu0 0.0
    %4047 = vmatpush1.msra.mxu0 0.0
    %4048 = vmatprep.subr.mxu0 0.0
    %4049 = vmatpush1.msra.mxu0 0.0
    %4050 = vmatprep.subr.mxu0 0.0
    %4051 = vmatpush1.msra.mxu0 0.0
    %4052 = vmatprep.subr.mxu0 0.0
    %4053 = vmatpush1.msra.mxu0 0.0
    %4054 = vmatprep.subr.mxu0 0.0
    %4055 = vmatpush1.msra.mxu0 0.0
    %4056 = vmatprep.subr.mxu0 0.0
    %4057 = vmatpush1.msra.mxu0 0.0
    %4058 = vmatprep.subr.mxu0 0.0
    %4059 = vmatpush1.msra.mxu0 0.0
    %4060 = vmatprep.subr.mxu0 0.0
    %4061 = vmatpush1.msra.mxu0 0.0
    %4062 = vmatprep.subr.mxu0 0.0
    %4063 = vmatpush1.msra.mxu0 0.0
    %4064 = vmatprep.subr.mxu0 0.0
    %4065 = vmatpush1.msra.mxu0 0.0
    %4066 = vmatprep.subr.mxu0 0.0
    %4067 = vmatpush1.msra.mxu0 0.0
    %4068 = vmatprep.subr.mxu0 0.0
    %4069 = vmatpush1.msra.mxu0 0.0
    %4070 = vmatprep.subr.mxu0 0.0
    %4071 = vmatpush1.msra.mxu0 0.0
    %4072 = vmatprep.subr.mxu0 0.0
    %4073 = vmatpush1.msra.mxu0 0.0
    %4074 = vmatprep.subr.mxu0 0.0
    %4075 = vmatpush1.msra.mxu0 0.0
    %4076 = vmatprep.subr.mxu0 0.0
    %4077 = vmatpush1.msra.mxu0 0.0
    %4078 = vmatprep.subr.mxu0 0.0
    %4079 = vmatpush1.msra.mxu0 0.0
    %4080 = vmatprep.subr.mxu0 0.0
    %4081 = vmatpush1.msra.mxu0 0.0
    %4082 = vmatprep.subr.mxu0 0.0
    %4083 = vmatpush1.msra.mxu0 0.0
    %4084 = vmatprep.subr.mxu0 0.0
    %4085 = vmatpush1.msra.mxu0 0.0
    %4086 = vmatprep.subr.mxu0 0.0
    %4087 = vmatpush1.msra.mxu0 0.0
    %4088 = vmatprep.subr.mxu0 0.0
    %4089 = vmatpush1.msra.mxu0 0.0
    %4090 = vmatprep.subr.mxu0 0.0
    %4091 = vmatpush1.msra.mxu0 0.0
    %4092 = vmatprep.subr.mxu0 0.0
    %4093 = vmatpush1.msra.mxu0 0.0
    %4094 = vmatprep.subr.mxu0 0.0
    %4095 = vmatpush1.msra.mxu0 0.0
    %4096 = vmatprep.subr.mxu0 0.0
    %4097 = vmatpush1.msra.mxu0 0.0
    %4098 = vmatprep.mubr.f32.mxu0 0.0
    %4099 = vmatmul.mubr.f32.gmra.mrb[0].mxu0 %v4023
    %v4100 = vpop.f32.mrb[0].mxu0
    %v4101 = vadd.f32 %v4021, %v4100
    %v4102 = vpop.f32.mrb[0].mxu0
    %4103 = vmatprep.mubr.f32.mxu0 0.0
    %4104 = vmatmul.mubr.f32.gmra.mrb[0].mxu0 %v4026
    %v4105 = vpop.f32.mrb[0].mxu0
    %v4106 = vadd.f32 %v4021, %v4105
    %v4107 = vpop.f32.mrb[0].mxu0
    %4108 = vmatprep.mubr.f32.mxu0 0.0
    %4109 = vmatmul.mubr.f32.gmra.mrb[0].mxu0 %v4029
    %v4110 = vpop.f32.mrb[0].mxu0
    %v4111 = vadd.f32 %v4021, %v4110
    %v4112 = vpop.f32.mrb[0].mxu0
    %4113 = vmatprep.mubr.f32.mxu0 0.0
    %4114 = vmatmul.mubr.f32.gmra.mrb[0].mxu0 %v4032
    %v4115 = vpop.f32.mrb[0].mxu0
    %v4116 = vadd.f32 %v4021, %v4115
    %v4117 = vpop.f32.mrb[0].mxu0
    %4118 = vdwg.mxu0
    %v4120 = vsel %vm527, %v34, 0
    %4122 = vmatprep.subr.mxu0 0.0
    %4123 = vmatpush1.msra.mxu0 %v4101
    %4124 = vmatprep.subr.mxu0 0.0
    %4125 = vmatpush1.msra.mxu0 %v4106
    %4126 = vmatprep.subr.mxu0 0.0
    %4127 = vmatpush1.msra.mxu0 %v4111
    %4128 = vmatprep.subr.mxu0 0.0
    %4129 = vmatpush1.msra.mxu0 %v4116
    %4130 = vmatprep.subr.mxu0 0.0
    %4131 = vmatpush1.msra.mxu0 0.0
    %4132 = vmatprep.subr.mxu0 0.0
    %4133 = vmatpush1.msra.mxu0 0.0
    %4134 = vmatprep.subr.mxu0 0.0
    %4135 = vmatpush1.msra.mxu0 0.0
    %4136 = vmatprep.subr.mxu0 0.0
    %4137 = vmatpush1.msra.mxu0 0.0
    %4138 = vmatprep.subr.mxu0 0.0
    %4139 = vmatpush1.msra.mxu0 0.0
    %4140 = vmatprep.subr.mxu0 0.0
    %4141 = vmatpush1.msra.mxu0 0.0
    %4142 = vmatprep.subr.mxu0 0.0
    %4143 = vmatpush1.msra.mxu0 0.0
    %4144 = vmatprep.subr.mxu0 0.0
    %4145 = vmatpush1.msra.mxu0 0.0
    %4146 = vmatprep.subr.mxu0 0.0
    %4147 = vmatpush1.msra.mxu0 0.0
    %4148 = vmatprep.subr.mxu0 0.0
    %4149 = vmatpush1.msra.mxu0 0.0
    %4150 = vmatprep.subr.mxu0 0.0
    %4151 = vmatpush1.msra.mxu0 0.0
    %4152 = vmatprep.subr.mxu0 0.0
    %4153 = vmatpush1.msra.mxu0 0.0
    %4154 = vmatprep.subr.mxu0 0.0
    %4155 = vmatpush1.msra.mxu0 0.0
    %4156 = vmatprep.subr.mxu0 0.0
    %4157 = vmatpush1.msra.mxu0 0.0
    %4158 = vmatprep.subr.mxu0 0.0
    %4159 = vmatpush1.msra.mxu0 0.0
    %4160 = vmatprep.subr.mxu0 0.0
    %4161 = vmatpush1.msra.mxu0 0.0
    %4162 = vmatprep.subr.mxu0 0.0
    %4163 = vmatpush1.msra.mxu0 0.0
    %4164 = vmatprep.subr.mxu0 0.0
    %4165 = vmatpush1.msra.mxu0 0.0
    %4166 = vmatprep.subr.mxu0 0.0
    %4167 = vmatpush1.msra.mxu0 0.0
    %4168 = vmatprep.subr.mxu0 0.0
    %4169 = vmatpush1.msra.mxu0 0.0
    %4170 = vmatprep.subr.mxu0 0.0
    %4171 = vmatpush1.msra.mxu0 0.0
    %4172 = vmatprep.subr.mxu0 0.0
    %4173 = vmatpush1.msra.mxu0 0.0
    %4174 = vmatprep.subr.mxu0 0.0
    %4175 = vmatpush1.msra.mxu0 0.0
    %4176 = vmatprep.subr.mxu0 0.0
    %4177 = vmatpush1.msra.mxu0 0.0
    %4178 = vmatprep.subr.mxu0 0.0
    %4179 = vmatpush1.msra.mxu0 0.0
    %4180 = vmatprep.subr.mxu0 0.0
    %4181 = vmatpush1.msra.mxu0 0.0
    %4182 = vmatprep.subr.mxu0 0.0
    %4183 = vmatpush1.msra.mxu0 0.0
    %4184 = vmatprep.subr.mxu0 0.0
    %4185 = vmatpush1.msra.mxu0 0.0
    %4186 = vmatprep.mubr.f32.mxu0 0.0
    %4187 = vmatmul.mubr.f32.gmra.mrb[0].mxu0 %v4120
    %v4188 = vpop.f32.mrb[0].mxu0
    %v4189 = vadd.f32 0.0, %v4188
    %v4190 = vpop.f32.mrb[0].mxu0
    %4191 = vdwg.mxu0
    %v4192 = vsel %vm527, %v34, 0.0
    %4193 = vadd.xlane.f32.xlu0 %v4192
    %v4194 = vpop.xlane.xlu0 %4193
    %v4195 = vmax.f32 %v4194, 1.0
    %v4196 = vrcp.pop %v4195
    %v4197 = vmul.f32 %v4189, %v4196
    %v4198 = vld [vmem:[#allocation2 + $0x210] sm:$0xff]
    %v4199 = vld [vmem:[#allocation2 + $0x218] sm:$0xff]
    %v4200 = vld [vmem:[#allocation2 + $0x220] sm:$0xff]
    %v4201 = vld [vmem:[#allocation2 + $0x228] sm:$0xff]
    %v4202 = vld [vmem:[#allocation2 + $0x230] sm:$0x1]
    %v4203 = vlaneseq
    %v4204 = vshrl.u32 %v4203, 7
    %v4205 = vsub.s32 0, %v4204
    %v4206 = vrot.slane %v4202, %v4205
    %v4208 = vsel %vm527, %v4197, 0
    %4210 = vmatprep.subr.mxu0 0.0
    %4211 = vmatpush1.msra.mxu0 %v4198
    %4212 = vmatprep.subr.mxu0 0.0
    %4213 = vmatpush1.msra.mxu0 %v4199
    %4214 = vmatprep.subr.mxu0 0.0
    %4215 = vmatpush1.msra.mxu0 %v4200
    %4216 = vmatprep.subr.mxu0 0.0
    %4217 = vmatpush1.msra.mxu0 %v4201
    %4218 = vmatprep.subr.mxu0 0.0
    %4219 = vmatpush1.msra.mxu0 0.0
    %4220 = vmatprep.subr.mxu0 0.0
    %4221 = vmatpush1.msra.mxu0 0.0
    %4222 = vmatprep.subr.mxu0 0.0
    %4223 = vmatpush1.msra.mxu0 0.0
    %4224 = vmatprep.subr.mxu0 0.0
    %4225 = vmatpush1.msra.mxu0 0.0
    %4226 = vmatprep.subr.mxu0 0.0
    %4227 = vmatpush1.msra.mxu0 0.0
    %4228 = vmatprep.subr.mxu0 0.0
    %4229 = vmatpush1.msra.mxu0 0.0
    %4230 = vmatprep.subr.mxu0 0.0
    %4231 = vmatpush1.msra.mxu0 0.0
    %4232 = vmatprep.subr.mxu0 0.0
    %4233 = vmatpush1.msra.mxu0 0.0
    %4234 = vmatprep.subr.mxu0 0.0
    %4235 = vmatpush1.msra.mxu0 0.0
    %4236 = vmatprep.subr.mxu0 0.0
    %4237 = vmatpush1.msra.mxu0 0.0
    %4238 = vmatprep.subr.mxu0 0.0
    %4239 = vmatpush1.msra.mxu0 0.0
    %4240 = vmatprep.subr.mxu0 0.0
    %4241 = vmatpush1.msra.mxu0 0.0
    %4242 = vmatprep.subr.mxu0 0.0
    %4243 = vmatpush1.msra.mxu0 0.0
    %4244 = vmatprep.subr.mxu0 0.0
    %4245 = vmatpush1.msra.mxu0 0.0
    %4246 = vmatprep.subr.mxu0 0.0
    %4247 = vmatpush1.msra.mxu0 0.0
    %4248 = vmatprep.subr.mxu0 0.0
    %4249 = vmatpush1.msra.mxu0 0.0
    %4250 = vmatprep.subr.mxu0 0.0
    %4251 = vmatpush1.msra.mxu0 0.0
    %4252 = vmatprep.subr.mxu0 0.0
    %4253 = vmatpush1.msra.mxu0 0.0
    %4254 = vmatprep.subr.mxu0 0.0
    %4255 = vmatpush1.msra.mxu0 0.0
    %4256 = vmatprep.subr.mxu0 0.0
    %4257 = vmatpush1.msra.mxu0 0.0
    %4258 = vmatprep.subr.mxu0 0.0
    %4259 = vmatpush1.msra.mxu0 0.0
    %4260 = vmatprep.subr.mxu0 0.0
    %4261 = vmatpush1.msra.mxu0 0.0
    %4262 = vmatprep.subr.mxu0 0.0
    %4263 = vmatpush1.msra.mxu0 0.0
    %4264 = vmatprep.subr.mxu0 0.0
    %4265 = vmatpush1.msra.mxu0 0.0
    %4266 = vmatprep.subr.mxu0 0.0
    %4267 = vmatpush1.msra.mxu0 0.0
    %4268 = vmatprep.subr.mxu0 0.0
    %4269 = vmatpush1.msra.mxu0 0.0
    %4270 = vmatprep.subr.mxu0 0.0
    %4271 = vmatpush1.msra.mxu0 0.0
    %4272 = vmatprep.subr.mxu0 0.0
    %4273 = vmatpush1.msra.mxu0 0.0
    %4274 = vmatprep.mubr.f32.mxu0 0.0
    %4275 = vmatmul.mubr.f32.gmra.mrb[0].mxu0 %v4208
    %v4276 = vpop.f32.mrb[0].mxu0
    %v4277 = vadd.f32 %v4206, %v4276
    %v4278 = vpop.f32.mrb[0].mxu0
    %4279 = vdwg.mxu0
    %v4280 = vxor.u32 %v4277, 2147483648
    %v4281 = vmul.f32 %v4280, 1.442695
    %v4282 = vpow.pop %v4281
    %v4283 = vadd.f32 %v4282, 1.0
    %v4284 = vrcp.pop %v4283
    %v4285 = vmul.f32 1.0, %v4284
    %v4286 = vmul.f32 %v4277, %v4285
    %v4287 = vld [vmem:[#allocation2 + $0x238] sm:$0xff]
    %v4288 = vld [vmem:[#allocation2 + $0x240] sm:$0xff]
    %v4289 = vld [vmem:[#allocation2 + $0x248] sm:$0xff]
    %v4290 = vld [vmem:[#allocation2 + $0x250] sm:$0xff]
    %v4291 = vld [vmem:[#allocation2 + $0x258] sm:$0x1]
    %v4292 = vlaneseq
    %v4293 = vshrl.u32 %v4292, 7
    %v4294 = vsub.s32 0, %v4293
    %v4295 = vrot.slane %v4291, %v4294
    %v4297 = vsel %vm527, %v4286, 0
    %4299 = vmatprep.subr.mxu0 0.0
    %4300 = vmatpush1.msra.mxu0 %v4287
    %4301 = vmatprep.subr.mxu0 0.0
    %4302 = vmatpush1.msra.mxu0 %v4288
    %4303 = vmatprep.subr.mxu0 0.0
    %4304 = vmatpush1.msra.mxu0 %v4289
    %4305 = vmatprep.subr.mxu0 0.0
    %4306 = vmatpush1.msra.mxu0 %v4290
    %4307 = vmatprep.subr.mxu0 0.0
    %4308 = vmatpush1.msra.mxu0 0.0
    %4309 = vmatprep.subr.mxu0 0.0
    %4310 = vmatpush1.msra.mxu0 0.0
    %4311 = vmatprep.subr.mxu0 0.0
    %4312 = vmatpush1.msra.mxu0 0.0
    %4313 = vmatprep.subr.mxu0 0.0
    %4314 = vmatpush1.msra.mxu0 0.0
    %4315 = vmatprep.subr.mxu0 0.0
    %4316 = vmatpush1.msra.mxu0 0.0
    %4317 = vmatprep.subr.mxu0 0.0
    %4318 = vmatpush1.msra.mxu0 0.0
    %4319 = vmatprep.subr.mxu0 0.0
    %4320 = vmatpush1.msra.mxu0 0.0
    %4321 = vmatprep.subr.mxu0 0.0
    %4322 = vmatpush1.msra.mxu0 0.0
    %4323 = vmatprep.subr.mxu0 0.0
    %4324 = vmatpush1.msra.mxu0 0.0
    %4325 = vmatprep.subr.mxu0 0.0
    %4326 = vmatpush1.msra.mxu0 0.0
    %4327 = vmatprep.subr.mxu0 0.0
    %4328 = vmatpush1.msra.mxu0 0.0
    %4329 = vmatprep.subr.mxu0 0.0
    %4330 = vmatpush1.msra.mxu0 0.0
    %4331 = vmatprep.subr.mxu0 0.0
    %4332 = vmatpush1.msra.mxu0 0.0
    %4333 = vmatprep.subr.mxu0 0.0
    %4334 = vmatpush1.msra.mxu0 0.0
    %4335 = vmatprep.subr.mxu0 0.0
    %4336 = vmatpush1.msra.mxu0 0.0
    %4337 = vmatprep.subr.mxu0 0.0
    %4338 = vmatpush1.msra.mxu0 0.0
    %4339 = vmatprep.subr.mxu0 0.0
    %4340 = vmatpush1.msra.mxu0 0.0
    %4341 = vmatprep.subr.mxu0 0.0
    %4342 = vmatpush1.msra.mxu0 0.0
    %4343 = vmatprep.subr.mxu0 0.0
    %4344 = vmatpush1.msra.mxu0 0.0
    %4345 = vmatprep.subr.mxu0 0.0
    %4346 = vmatpush1.msra.mxu0 0.0
    %4347 = vmatprep.subr.mxu0 0.0
    %4348 = vmatpush1.msra.mxu0 0.0
    %4349 = vmatprep.subr.mxu0 0.0
    %4350 = vmatpush1.msra.mxu0 0.0
    %4351 = vmatprep.subr.mxu0 0.0
    %4352 = vmatpush1.msra.mxu0 0.0
    %4353 = vmatprep.subr.mxu0 0.0
    %4354 = vmatpush1.msra.mxu0 0.0
    %4355 = vmatprep.subr.mxu0 0.0
    %4356 = vmatpush1.msra.mxu0 0.0
    %4357 = vmatprep.subr.mxu0 0.0
    %4358 = vmatpush1.msra.mxu0 0.0
    %4359 = vmatprep.subr.mxu0 0.0
    %4360 = vmatpush1.msra.mxu0 0.0
    %4361 = vmatprep.subr.mxu0 0.0
    %4362 = vmatpush1.msra.mxu0 0.0
    %4363 = vmatprep.mubr.f32.mxu0 0.0
    %4364 = vmatmul.mubr.f32.gmra.mrb[0].mxu0 %v4297
    %v4365 = vpop.f32.mrb[0].mxu0
    %v4366 = vadd.f32 %v4295, %v4365
    %v4367 = vpop.f32.mrb[0].mxu0
    %4368 = vdwg.mxu0
    %v4369 = vmul.f32 %v4366, %v4366
    %v4370 = vsel %vm527, %v4369, 0.0
    %4371 = vadd.xlane.f32.xlu0 %v4370
    %v4372 = vpop.xlane.xlu0 %4371
    %v4373 = vrsqrt.pop %v4372
    %v4374 = vmul.f32 %v4372, %v4373
    %vm4375 = vcmp.eq.f32.partialorder %v4372, inf
    %v4376 = vsel %vm4375, %v4372, %v4374
    %vm4377 = vcmp.eq.f32.partialorder %v4372, 0.0
    %v4378 = vand.u32 %v4372, 2147483648
    %v4379 = vsel %vm4377, %v4378, %v4376
    %v4380 = vmax.f32 %v4379, 1e-08
    %v4381 = vrcp.pop %v4380
    %v4382 = vmul.f32 %v4366, %v4381
    %vm4383 = vcmask 254976
    %4384 = vst.msk [vmem:[#allocation5] sm:$0x3] %vm4383, %v4382
    // Predicated region
    $region22: #{model0_forward.1} parent=1 // pred_check
      _
    $region23: #{model0_forward.1} parent=1 // pred_check_branch
      %4386 = sbr.rel (0) target = $region25
    $region24: #{model0_forward.1} parent=1 // pred_region
      %s4388 = ssub.s32 32, 32
      %4389 = vsyncadd [#allocation4], %s4388
      %s4391 = sshll.u32 [#allocation5], 4
      %s4392 = int_to_ptr.vmem [resolvable:$true] %s4391
      %4394 = dma.vmem_to_hbm [thread:$0]  %s4392, 32, %s4, [#allocation4]
    $region25: #{model0_forward.1} parent=1 // pred_fallthru
      _
    // Predicated region
    $region26: #{model0_forward.1} parent=1 // pred_check
      _
    $region27: #{model0_forward.1} parent=1 // pred_check_branch
      %4396 = sbr.rel (0) target = $region29
    $region28: #{model0_forward.1} parent=1 // pred_region
      %4397 = dma.done [#allocation4], 32
    $region29: #{model0_forward.1} parent=1 // pred_fallthru
      _
    %4398 = vsyncpa [#allocation3], 1
    %4399 = vsyncpa [#allocation4], 1

</llo_original>
